<compile_context>
chip_gen: v5e
topology: v5e:2x2
jax: 0.10.0
libtpu: 0.0.40
codegen_flags: <defaults>
</compile_context>

<pallas_src>
import functools

import jax
import jax.numpy as jnp
from jax.experimental import pallas as pl
from jax.experimental.pallas import tpu as pltpu


# ----------------------------- Pallas kernels ------------------------------

def _conv_tanh_pool_kernel(p_ref, w_ref, b_ref, o_ref):
    # p: (4, Rblk, Kpad) bf16  -- 4 = position inside the 2x2 pool window
    # w: (Kpad, Cpad) bf16, b: (1, Cpad) f32, o: (Rblk, Cpad) f32
    bias = b_ref[...]
    acc = jnp.zeros(o_ref.shape, jnp.float32)
    for q in range(4):  # static unroll; each q is one MXU matmul on the same rows
        y = jnp.dot(p_ref[q], w_ref[...], preferred_element_type=jnp.float32)
        acc = acc + jnp.tanh(y + bias)
    o_ref[...] = acc * jnp.float32(0.25)  # avg-pool over the 2x2 window


def _tail_kernel(x_ref, w2_ref, b2_ref, w3_ref, b3_ref, w4_ref, b4_ref, o_ref,
                 *, n_valid):
    # conv2 (1x1 spatial output) == FC on the flattened (ki,kj,cin) input.
    h = jnp.dot(x_ref[...], w2_ref[...], preferred_element_type=jnp.float32)
    h = jnp.tanh(h + b2_ref[...])                                   # (N, 128), valid 120
    h = jnp.dot(h.astype(w3_ref.dtype), w3_ref[...],
                preferred_element_type=jnp.float32)
    h = jnp.tanh(h + b3_ref[...])                                   # (N, 128), valid 84
    # TODO(synk): nn.Dropout(p=0.1) is identity in inference mode; omitted.
    logits = jnp.dot(h.astype(w4_ref.dtype), w4_ref[...],
                     preferred_element_type=jnp.float32)
    logits = logits + b4_ref[...]                                   # (N, 128), valid n_valid
    col = jax.lax.broadcasted_iota(jnp.int32, logits.shape, 1)
    logits = jnp.where(col < n_valid, logits, jnp.float32(-jnp.inf))
    # softmax is monotone -> argmax(softmax(logits)) == argmax(logits); softmax dropped.
    m = jnp.max(logits, axis=-1, keepdims=True)
    cand = jnp.where(logits >= m, col, jnp.int32(2 ** 30))
    o_ref[...] = jnp.min(cand, axis=-1, keepdims=True)              # first index of max


# ------------------------------- JAX glue -----------------------------------

def _round_up(x, m):
    return (x + m - 1) // m * m


def _patches_pooled(x, k):
    # x: (N, H, W, C) NHWC. Valid conv (k,k) stride 1 followed by 2x2/2 pool.
    # Returns patches (4, N*PH*PW, k*k*C) (leading axis = pool-window position,
    # column order (ki, kj, C)) and the pooled output geometry.
    n, h, w, c = x.shape
    oh, ow = h - k + 1, w - k + 1
    ph, pw = oh // 2, ow // 2
    cols = [x[:, ki:ki + oh, kj:kj + ow, :] for ki in range(k) for kj in range(k)]
    p = jnp.stack(cols, axis=3)                       # (N, OH, OW, k*k, C)
    p = p.reshape(n, ph, 2, pw, 2, k * k, c)
    p = p.transpose(2, 4, 0, 1, 3, 5, 6)              # (2, 2, N, PH, PW, k*k, C)
    return p.reshape(4, n * ph * pw, k * k * c), (n, ph, pw)


def conv_bn_tanh_pool(x, w, b, bn_scale, bn_shift, *, row_block=256):
    # x: (N, H, W, Cin) NHWC; w: (Cout, Cin, k, k) torch layout.
    cout, cin, k, _ = w.shape
    # Fold BN (inference) into conv weights/bias.
    wf = w * bn_scale[:, None, None, None]
    bf = b * bn_scale + bn_shift
    w2d = wf.transpose(2, 3, 1, 0).reshape(k * k * cin, cout)   # (ki,kj,cin) x cout

    kdim = k * k * cin
    kpad = _round_up(kdim, 128)
    cpad = _round_up(cout, 128)
    w2d = jnp.pad(w2d, ((0, kpad - kdim), (0, cpad - cout))).astype(jnp.bfloat16)
    bias = jnp.pad(bf, (0, cpad - cout)).reshape(1, cpad).astype(jnp.float32)

    patches, (n, ph, pw) = _patches_pooled(x, k)                # (4, R, kdim)
    r = patches.shape[1]
    rb = min(row_block, _round_up(r, 8))
    rpad = _round_up(r, rb)
    patches = jnp.pad(
        patches, ((0, 0), (0, rpad - r), (0, kpad - kdim))).astype(jnp.bfloat16)

    out = pl.pallas_call(
        _conv_tanh_pool_kernel,
        out_shape=jax.ShapeDtypeStruct((rpad, cpad), jnp.float32),
        grid_spec=pltpu.PrefetchScalarGridSpec(
            num_scalar_prefetch=0,
            grid=(rpad // rb,),
            in_specs=[
                pl.BlockSpec((4, rb, kpad), lambda i: (0, i, 0)),
                pl.BlockSpec((kpad, cpad), lambda i: (0, 0)),
                pl.BlockSpec((1, cpad), lambda i: (0, 0)),
            ],
            out_specs=pl.BlockSpec((rb, cpad), lambda i: (i, 0)),
        ),
        compiler_params=pltpu.CompilerParams(
            dimension_semantics=("parallel",)),
    )(patches, w2d, bias)

    out = out[:r, :cout]                     # drop row / lane padding
    return out.reshape(n, ph, pw, cout)      # NHWC


def tail_fc_argmax(x_nhwc, w2, b2, bn2_scale, bn2_shift, w3, b3, w4, b4,
                   n_classes):
    # x_nhwc: (N, 5, 5, 16). conv2 output spatial is 1x1 -> pure FC chain.
    n = x_nhwc.shape[0]
    cout2, cin2, k, _ = w2.shape
    w2f = w2 * bn2_scale[:, None, None, None]
    b2f = b2 * bn2_scale + bn2_shift

    d0 = k * k * cin2                       # 400
    d0p = _round_up(d0, 128)                # 512
    d1p = _round_up(cout2, 128)             # 128 (valid 120)
    d2 = w3.shape[0]                        # 84
    d2p = _round_up(d2, 128)                # 128
    d3p = _round_up(n_classes, 128)         # 128 (valid n_classes)

    x = x_nhwc.reshape(n, d0)                                   # (ki,kj,cin) order
    w2m = w2f.transpose(2, 3, 1, 0).reshape(d0, cout2)

    xp = jnp.pad(x, ((0, 0), (0, d0p - d0))).astype(jnp.bfloat16)
    w2p = jnp.pad(w2m, ((0, d0p - d0), (0, d1p - cout2))).astype(jnp.bfloat16)
    b2p = jnp.pad(b2f, (0, d1p - cout2)).reshape(1, d1p).astype(jnp.float32)
    w3p = jnp.pad(w3.T, ((0, d1p - cout2), (0, d2p - d2))).astype(jnp.bfloat16)
    b3p = jnp.pad(b3, (0, d2p - d2)).reshape(1, d2p).astype(jnp.float32)
    w4p = jnp.pad(w4.T, ((0, d2p - d2), (0, d3p - n_classes))).astype(jnp.bfloat16)
    b4p = jnp.pad(b4, (0, d3p - n_classes)).reshape(1, d3p).astype(jnp.float32)

    vmem = pl.BlockSpec(memory_space=pltpu.MemorySpace.VMEM)
    out = pl.pallas_call(
        functools.partial(_tail_kernel, n_valid=n_classes),
        out_shape=jax.ShapeDtypeStruct((n, 1), jnp.int32),
        in_specs=[vmem] * 7,
        out_specs=vmem,
    )(xp, w2p, b2p, w3p, b3p, w4p, b4p)
    return out[:, 0]


# ------------------------------ Parameters ----------------------------------

def _xavier_uniform(key, shape, fan_in, fan_out):
    a = (6.0 / (fan_in + fan_out)) ** 0.5
    return jax.random.uniform(key, shape, jnp.float32, -a, a)


def _bias_uniform(key, shape, fan_in):
    bound = 1.0 / (fan_in ** 0.5)
    return jax.random.uniform(key, shape, jnp.float32, -bound, bound)


def init_lenet5_params(key, n_classes, in_channel):
    keys = jax.random.split(key, 10)
    params = {}
    params["w0"] = _xavier_uniform(keys[0], (6, in_channel, 5, 5),
                                   in_channel * 25, 6 * 25)
    params["b0"] = _bias_uniform(keys[1], (6,), in_channel * 25)
    params["w1"] = _xavier_uniform(keys[2], (16, 6, 5, 5), 6 * 25, 16 * 25)
    params["b1"] = _bias_uniform(keys[3], (16,), 6 * 25)
    params["w2"] = _xavier_uniform(keys[4], (120, 16, 5, 5), 16 * 25, 120 * 25)
    params["b2"] = _bias_uniform(keys[5], (120,), 16 * 25)
    params["w3"] = _xavier_uniform(keys[6], (84, 120), 120, 84)
    params["b3"] = _bias_uniform(keys[7], (84,), 120)
    params["w4"] = _xavier_uniform(keys[8], (n_classes, 84), 84, n_classes)
    params["b4"] = _bias_uniform(keys[9], (n_classes,), 84)

    # BatchNorm2d inference constants: gamma=1, beta=0, mean=0, var=1.
    eps = 1e-5
    for name, c in (("bn0", 6), ("bn1", 16), ("bn2", 120)):
        gamma = jnp.ones((c,), jnp.float32)
        beta = jnp.zeros((c,), jnp.float32)
        mean = jnp.zeros((c,), jnp.float32)
        var = jnp.ones((c,), jnp.float32)
        scale = gamma / jnp.sqrt(var + eps)
        shift = beta - mean * scale
        params[name + "_scale"] = scale
        params[name + "_shift"] = shift
    return params


# ------------------------------- Forward ------------------------------------

@functools.partial(jax.jit, static_argnums=(2,))
def lenet5_forward(params, x, n_classes):
    # x: (N, Cin, 32, 32) NCHW like torch -> NHWC once at the boundary.
    x = jnp.transpose(x, (0, 2, 3, 1))                              # (N, 32, 32, Cin)
    x = conv_bn_tanh_pool(x, params["w0"], params["b0"],
                          params["bn0_scale"], params["bn0_shift"])  # (N, 14, 14, 6)
    x = conv_bn_tanh_pool(x, params["w1"], params["b1"],
                          params["bn1_scale"], params["bn1_shift"])  # (N, 5, 5, 16)
    idx = tail_fc_argmax(x, params["w2"], params["b2"],
                         params["bn2_scale"], params["bn2_shift"],
                         params["w3"], params["b3"],
                         params["w4"], params["b4"], n_classes)      # (N,) int32
    return idx


# --------------------------------- Main --------------------------------------

if __name__ == "__main__":
    batch = 2
    n_classes = 10
    in_channel = 1
    in_height = in_width = 32  # LeNet-5 geometry requires 32x32 spatial input

    key = jax.random.PRNGKey(0)
    pkey, xkey = jax.random.split(key)
    params = init_lenet5_params(pkey, n_classes, in_channel)
    x = jax.random.normal(xkey, (batch, in_channel, in_height, in_width),
                          jnp.float32)

    out = lenet5_forward(params, x, n_classes)
    out = jax.block_until_ready(out)
    assert out.shape == (batch,)
    assert out.dtype == jnp.int32
    print("KERNEL_OK")
</pallas_src>

<mosaic_0001>
module attributes {stable_mosaic.version = 11 : i64} {
  func.func @_conv_tanh_pool_kernel(%arg0: i32, %arg1: memref<4x256x128xbf16, #tpu.memory_space<vmem>>, %arg2: memref<128x128xbf16, #tpu.memory_space<vmem>>, %arg3: memref<1x128xf32, #tpu.memory_space<vmem>>, %arg4: memref<256x128xf32, #tpu.memory_space<vmem>>) attributes {dimension_semantics = [#tpu.dimension_semantics<parallel>], iteration_bounds = array<i64: 2>, scalar_prefetch = 0 : i64, scratch_operands = 0 : i64, tpu.core_type = #tpu.core_type<tc>, window_params = [{transform_indices = @transform_0, window_bounds = array<i64: 4, 256, 128>}, {pipeline_mode = #tpu.pipeline_mode<synchronous>, transform_indices = @transform_1, window_bounds = array<i64: 128, 128>}, {pipeline_mode = #tpu.pipeline_mode<synchronous>, transform_indices = @transform_2, window_bounds = array<i64: 1, 128>}, {transform_indices = @transform_3, window_bounds = array<i64: 256, 128>}]} {
    %c0 = arith.constant 0 : index
    %c0_0 = arith.constant 0 : index
    %0 = vector.load %arg3[%c0, %c0_0] : memref<1x128xf32, #tpu.memory_space<vmem>>, vector<1x128xf32>
    %cst = arith.constant 0.000000e+00 : f32
    %1 = vector.broadcast %cst : f32 to vector<256x128xf32>
    %c0_1 = arith.constant 0 : index
    %c0_2 = arith.constant 0 : index
    %c0_3 = arith.constant 0 : index
    %2 = vector.load %arg1[%c0_1, %c0_2, %c0_3] : memref<4x256x128xbf16, #tpu.memory_space<vmem>>, vector<1x256x128xbf16>
    %3 = vector.shape_cast %2 : vector<1x256x128xbf16> to vector<256x128xbf16>
    %c0_4 = arith.constant 0 : index
    %c0_5 = arith.constant 0 : index
    %4 = vector.load %arg2[%c0_4, %c0_5] : memref<128x128xbf16, #tpu.memory_space<vmem>>, vector<128x128xbf16>
    %cst_6 = arith.constant dense<0.000000e+00> : vector<256x128xf32>
    %5 = tpu.matmul %3, %4, %cst_6 {dimension_numbers = #tpu.dot_dimension_numbers<[1], [0], [0], [1], [0, 0, 1, 1], [], []>} : vector<256x128xbf16>, vector<128x128xbf16>, vector<256x128xf32> -> vector<256x128xf32>
    %6 = vector.broadcast %0 : vector<1x128xf32> to vector<256x128xf32>
    %7 = arith.addf %5, %6 : vector<256x128xf32>
    %8 = math.tanh %7 : vector<256x128xf32>
    %9 = arith.addf %1, %8 : vector<256x128xf32>
    %c1 = arith.constant 1 : index
    %c0_7 = arith.constant 0 : index
    %c0_8 = arith.constant 0 : index
    %10 = vector.load %arg1[%c1, %c0_7, %c0_8] : memref<4x256x128xbf16, #tpu.memory_space<vmem>>, vector<1x256x128xbf16>
    %11 = vector.shape_cast %10 : vector<1x256x128xbf16> to vector<256x128xbf16>
    %c0_9 = arith.constant 0 : index
    %c0_10 = arith.constant 0 : index
    %12 = vector.load %arg2[%c0_9, %c0_10] : memref<128x128xbf16, #tpu.memory_space<vmem>>, vector<128x128xbf16>
    %cst_11 = arith.constant dense<0.000000e+00> : vector<256x128xf32>
    %13 = tpu.matmul %11, %12, %cst_11 {dimension_numbers = #tpu.dot_dimension_numbers<[1], [0], [0], [1], [0, 0, 1, 1], [], []>} : vector<256x128xbf16>, vector<128x128xbf16>, vector<256x128xf32> -> vector<256x128xf32>
    %14 = vector.broadcast %0 : vector<1x128xf32> to vector<256x128xf32>
    %15 = arith.addf %13, %14 : vector<256x128xf32>
    %16 = math.tanh %15 : vector<256x128xf32>
    %17 = arith.addf %9, %16 : vector<256x128xf32>
    %c2 = arith.constant 2 : index
    %c0_12 = arith.constant 0 : index
    %c0_13 = arith.constant 0 : index
    %18 = vector.load %arg1[%c2, %c0_12, %c0_13] : memref<4x256x128xbf16, #tpu.memory_space<vmem>>, vector<1x256x128xbf16>
    %19 = vector.shape_cast %18 : vector<1x256x128xbf16> to vector<256x128xbf16>
    %c0_14 = arith.constant 0 : index
    %c0_15 = arith.constant 0 : index
    %20 = vector.load %arg2[%c0_14, %c0_15] : memref<128x128xbf16, #tpu.memory_space<vmem>>, vector<128x128xbf16>
    %cst_16 = arith.constant dense<0.000000e+00> : vector<256x128xf32>
    %21 = tpu.matmul %19, %20, %cst_16 {dimension_numbers = #tpu.dot_dimension_numbers<[1], [0], [0], [1], [0, 0, 1, 1], [], []>} : vector<256x128xbf16>, vector<128x128xbf16>, vector<256x128xf32> -> vector<256x128xf32>
    %22 = vector.broadcast %0 : vector<1x128xf32> to vector<256x128xf32>
    %23 = arith.addf %21, %22 : vector<256x128xf32>
    %24 = math.tanh %23 : vector<256x128xf32>
    %25 = arith.addf %17, %24 : vector<256x128xf32>
    %c3 = arith.constant 3 : index
    %c0_17 = arith.constant 0 : index
    %c0_18 = arith.constant 0 : index
    %26 = vector.load %arg1[%c3, %c0_17, %c0_18] : memref<4x256x128xbf16, #tpu.memory_space<vmem>>, vector<1x256x128xbf16>
    %27 = vector.shape_cast %26 : vector<1x256x128xbf16> to vector<256x128xbf16>
    %c0_19 = arith.constant 0 : index
    %c0_20 = arith.constant 0 : index
    %28 = vector.load %arg2[%c0_19, %c0_20] : memref<128x128xbf16, #tpu.memory_space<vmem>>, vector<128x128xbf16>
    %cst_21 = arith.constant dense<0.000000e+00> : vector<256x128xf32>
    %29 = tpu.matmul %27, %28, %cst_21 {dimension_numbers = #tpu.dot_dimension_numbers<[1], [0], [0], [1], [0, 0, 1, 1], [], []>} : vector<256x128xbf16>, vector<128x128xbf16>, vector<256x128xf32> -> vector<256x128xf32>
    %30 = vector.broadcast %0 : vector<1x128xf32> to vector<256x128xf32>
    %31 = arith.addf %29, %30 : vector<256x128xf32>
    %32 = math.tanh %31 : vector<256x128xf32>
    %33 = arith.addf %25, %32 : vector<256x128xf32>
    %cst_22 = arith.constant 2.500000e-01 : f32
    %34 = vector.broadcast %cst_22 : f32 to vector<256x128xf32>
    %35 = arith.mulf %33, %34 : vector<256x128xf32>
    %c0_23 = arith.constant 0 : index
    %c0_24 = arith.constant 0 : index
    %36 = vector.load %arg4[%c0_23, %c0_24] : memref<256x128xf32, #tpu.memory_space<vmem>>, vector<256x128xf32>
    tpu.vector_store %arg4[%c0_23, %c0_24], %35 {strides = array<i32>} : memref<256x128xf32, #tpu.memory_space<vmem>>, vector<256x128xf32>,
    return
  }
  func.func @transform_0(%arg0: i32) -> (i32, i32, i32) {
    %c0_i32 = arith.constant 0 : i32
    %c0_i32_0 = arith.constant 0 : i32
    %c0_i32_1 = arith.constant 0 : i32
    return %c0_i32, %arg0, %c0_i32_0 : i32, i32, i32
  }
  func.func @transform_1(%arg0: i32) -> (i32, i32) {
    %c0_i32 = arith.constant 0 : i32
    %c0_i32_0 = arith.constant 0 : i32
    %c0_i32_1 = arith.constant 0 : i32
    return %c0_i32, %c0_i32_0 : i32, i32
  }
  func.func @transform_2(%arg0: i32) -> (i32, i32) {
    %c0_i32 = arith.constant 0 : i32
    %c0_i32_0 = arith.constant 0 : i32
    %c0_i32_1 = arith.constant 0 : i32
    return %c0_i32, %c0_i32_0 : i32, i32
  }
  func.func @transform_3(%arg0: i32) -> (i32, i32) {
    %c0_i32 = arith.constant 0 : i32
    %c0_i32_0 = arith.constant 0 : i32
    return %arg0, %c0_i32 : i32, i32
  }
}

module attributes {stable_mosaic.version = 11 : i64} {
  func.func @_conv_tanh_pool_kernel(%arg0: i32, %arg1: memref<4x56x256xbf16, #tpu.memory_space<vmem>>, %arg2: memref<256x128xbf16, #tpu.memory_space<vmem>>, %arg3: memref<1x128xf32, #tpu.memory_space<vmem>>, %arg4: memref<56x128xf32, #tpu.memory_space<vmem>>) attributes {dimension_semantics = [#tpu.dimension_semantics<parallel>], iteration_bounds = array<i64: 1>, scalar_prefetch = 0 : i64, scratch_operands = 0 : i64, tpu.core_type = #tpu.core_type<tc>, window_params = [{transform_indices = @transform_0, window_bounds = array<i64: 4, 56, 256>}, {pipeline_mode = #tpu.pipeline_mode<synchronous>, transform_indices = @transform_1, window_bounds = array<i64: 256, 128>}, {pipeline_mode = #tpu.pipeline_mode<synchronous>, transform_indices = @transform_2, window_bounds = array<i64: 1, 128>}, {transform_indices = @transform_3, window_bounds = array<i64: 56, 128>}]} {
    %c0 = arith.constant 0 : index
    %c0_0 = arith.constant 0 : index
    %0 = vector.load %arg3[%c0, %c0_0] : memref<1x128xf32, #tpu.memory_space<vmem>>, vector<1x128xf32>
    %cst = arith.constant 0.000000e+00 : f32
    %1 = vector.broadcast %cst : f32 to vector<56x128xf32>
    %c0_1 = arith.constant 0 : index
    %c0_2 = arith.constant 0 : index
    %c0_3 = arith.constant 0 : index
    %2 = vector.load %arg1[%c0_1, %c0_2, %c0_3] : memref<4x56x256xbf16, #tpu.memory_space<vmem>>, vector<1x56x256xbf16>
    %3 = vector.shape_cast %2 : vector<1x56x256xbf16> to vector<56x256xbf16>
    %c0_4 = arith.constant 0 : index
    %c0_5 = arith.constant 0 : index
    %4 = vector.load %arg2[%c0_4, %c0_5] : memref<256x128xbf16, #tpu.memory_space<vmem>>, vector<256x128xbf16>
    %cst_6 = arith.constant dense<0.000000e+00> : vector<56x128xf32>
    %5 = tpu.matmul %3, %4, %cst_6 {dimension_numbers = #tpu.dot_dimension_numbers<[1], [0], [0], [1], [0, 0, 1, 1], [], []>} : vector<56x256xbf16>, vector<256x128xbf16>, vector<56x128xf32> -> vector<56x128xf32>
    %6 = vector.broadcast %0 : vector<1x128xf32> to vector<56x128xf32>
    %7 = arith.addf %5, %6 : vector<56x128xf32>
    %8 = math.tanh %7 : vector<56x128xf32>
    %9 = arith.addf %1, %8 : vector<56x128xf32>
    %c1 = arith.constant 1 : index
    %c0_7 = arith.constant 0 : index
    %c0_8 = arith.constant 0 : index
    %10 = vector.load %arg1[%c1, %c0_7, %c0_8] : memref<4x56x256xbf16, #tpu.memory_space<vmem>>, vector<1x56x256xbf16>
    %11 = vector.shape_cast %10 : vector<1x56x256xbf16> to vector<56x256xbf16>
    %c0_9 = arith.constant 0 : index
    %c0_10 = arith.constant 0 : index
    %12 = vector.load %arg2[%c0_9, %c0_10] : memref<256x128xbf16, #tpu.memory_space<vmem>>, vector<256x128xbf16>
    %cst_11 = arith.constant dense<0.000000e+00> : vector<56x128xf32>
    %13 = tpu.matmul %11, %12, %cst_11 {dimension_numbers = #tpu.dot_dimension_numbers<[1], [0], [0], [1], [0, 0, 1, 1], [], []>} : vector<56x256xbf16>, vector<256x128xbf16>, vector<56x128xf32> -> vector<56x128xf32>
    %14 = vector.broadcast %0 : vector<1x128xf32> to vector<56x128xf32>
    %15 = arith.addf %13, %14 : vector<56x128xf32>
    %16 = math.tanh %15 : vector<56x128xf32>
    %17 = arith.addf %9, %16 : vector<56x128xf32>
    %c2 = arith.constant 2 : index
    %c0_12 = arith.constant 0 : index
    %c0_13 = arith.constant 0 : index
    %18 = vector.load %arg1[%c2, %c0_12, %c0_13] : memref<4x56x256xbf16, #tpu.memory_space<vmem>>, vector<1x56x256xbf16>
    %19 = vector.shape_cast %18 : vector<1x56x256xbf16> to vector<56x256xbf16>
    %c0_14 = arith.constant 0 : index
    %c0_15 = arith.constant 0 : index
    %20 = vector.load %arg2[%c0_14, %c0_15] : memref<256x128xbf16, #tpu.memory_space<vmem>>, vector<256x128xbf16>
    %cst_16 = arith.constant dense<0.000000e+00> : vector<56x128xf32>
    %21 = tpu.matmul %19, %20, %cst_16 {dimension_numbers = #tpu.dot_dimension_numbers<[1], [0], [0], [1], [0, 0, 1, 1], [], []>} : vector<56x256xbf16>, vector<256x128xbf16>, vector<56x128xf32> -> vector<56x128xf32>
    %22 = vector.broadcast %0 : vector<1x128xf32> to vector<56x128xf32>
    %23 = arith.addf %21, %22 : vector<56x128xf32>
    %24 = math.tanh %23 : vector<56x128xf32>
    %25 = arith.addf %17, %24 : vector<56x128xf32>
    %c3 = arith.constant 3 : index
    %c0_17 = arith.constant 0 : index
    %c0_18 = arith.constant 0 : index
    %26 = vector.load %arg1[%c3, %c0_17, %c0_18] : memref<4x56x256xbf16, #tpu.memory_space<vmem>>, vector<1x56x256xbf16>
    %27 = vector.shape_cast %26 : vector<1x56x256xbf16> to vector<56x256xbf16>
    %c0_19 = arith.constant 0 : index
    %c0_20 = arith.constant 0 : index
    %28 = vector.load %arg2[%c0_19, %c0_20] : memref<256x128xbf16, #tpu.memory_space<vmem>>, vector<256x128xbf16>
    %cst_21 = arith.constant dense<0.000000e+00> : vector<56x128xf32>
    %29 = tpu.matmul %27, %28, %cst_21 {dimension_numbers = #tpu.dot_dimension_numbers<[1], [0], [0], [1], [0, 0, 1, 1], [], []>} : vector<56x256xbf16>, vector<256x128xbf16>, vector<56x128xf32> -> vector<56x128xf32>
    %30 = vector.broadcast %0 : vector<1x128xf32> to vector<56x128xf32>
    %31 = arith.addf %29, %30 : vector<56x128xf32>
    %32 = math.tanh %31 : vector<56x128xf32>
    %33 = arith.addf %25, %32 : vector<56x128xf32>
    %cst_22 = arith.constant 2.500000e-01 : f32
    %34 = vector.broadcast %cst_22 : f32 to vector<56x128xf32>
    %35 = arith.mulf %33, %34 : vector<56x128xf32>
    %c0_23 = arith.constant 0 : index
    %c0_24 = arith.constant 0 : index
    %36 = vector.load %arg4[%c0_23, %c0_24] : memref<56x128xf32, #tpu.memory_space<vmem>>, vector<56x128xf32>
    tpu.vector_store %arg4[%c0_23, %c0_24], %35 {strides = array<i32>} : memref<56x128xf32, #tpu.memory_space<vmem>>, vector<56x128xf32>,
    return
  }
  func.func @transform_0(%arg0: i32) -> (i32, i32, i32) {
    %c0_i32 = arith.constant 0 : i32
    %c0_i32_0 = arith.constant 0 : i32
    %c0_i32_1 = arith.constant 0 : i32
    return %c0_i32, %arg0, %c0_i32_0 : i32, i32, i32
  }
  func.func @transform_1(%arg0: i32) -> (i32, i32) {
    %c0_i32 = arith.constant 0 : i32
    %c0_i32_0 = arith.constant 0 : i32
    %c0_i32_1 = arith.constant 0 : i32
    return %c0_i32, %c0_i32_0 : i32, i32
  }
  func.func @transform_2(%arg0: i32) -> (i32, i32) {
    %c0_i32 = arith.constant 0 : i32
    %c0_i32_0 = arith.constant 0 : i32
    %c0_i32_1 = arith.constant 0 : i32
    return %c0_i32, %c0_i32_0 : i32, i32
  }
  func.func @transform_3(%arg0: i32) -> (i32, i32) {
    %c0_i32 = arith.constant 0 : i32
    %c0_i32_0 = arith.constant 0 : i32
    return %arg0, %c0_i32 : i32, i32
  }
}

module attributes {stable_mosaic.version = 11 : i64} {
  func.func @_tail_kernel(%arg0: memref<2x512xbf16, #tpu.memory_space<vmem>>, %arg1: memref<512x128xbf16, #tpu.memory_space<vmem>>, %arg2: memref<1x128xf32, #tpu.memory_space<vmem>>, %arg3: memref<128x128xbf16, #tpu.memory_space<vmem>>, %arg4: memref<1x128xf32, #tpu.memory_space<vmem>>, %arg5: memref<128x128xbf16, #tpu.memory_space<vmem>>, %arg6: memref<1x128xf32, #tpu.memory_space<vmem>>, %arg7: memref<2x1xi32, #tpu.memory_space<vmem>>) attributes {dimension_semantics = [], scalar_prefetch = 0 : i64, scratch_operands = 0 : i64, tpu.core_type = #tpu.core_type<tc>} {
    %c0 = arith.constant 0 : index
    %c0_0 = arith.constant 0 : index
    %0 = vector.load %arg0[%c0, %c0_0] : memref<2x512xbf16, #tpu.memory_space<vmem>>, vector<2x512xbf16>
    %c0_1 = arith.constant 0 : index
    %c0_2 = arith.constant 0 : index
    %1 = vector.load %arg1[%c0_1, %c0_2] : memref<512x128xbf16, #tpu.memory_space<vmem>>, vector<512x128xbf16>
    %cst = arith.constant dense<0.000000e+00> : vector<2x128xf32>
    %2 = tpu.matmul %0, %1, %cst {dimension_numbers = #tpu.dot_dimension_numbers<[1], [0], [0], [1], [0, 0, 1, 1], [], []>} : vector<2x512xbf16>, vector<512x128xbf16>, vector<2x128xf32> -> vector<2x128xf32>
    %c0_3 = arith.constant 0 : index
    %c0_4 = arith.constant 0 : index
    %3 = vector.load %arg2[%c0_3, %c0_4] : memref<1x128xf32, #tpu.memory_space<vmem>>, vector<1x128xf32>
    %4 = vector.broadcast %3 : vector<1x128xf32> to vector<2x128xf32>
    %5 = arith.addf %2, %4 : vector<2x128xf32>
    %6 = math.tanh %5 : vector<2x128xf32>
    %7 = arith.truncf %6 : vector<2x128xf32> to vector<2x128xbf16>
    %c0_5 = arith.constant 0 : index
    %c0_6 = arith.constant 0 : index
    %8 = vector.load %arg3[%c0_5, %c0_6] : memref<128x128xbf16, #tpu.memory_space<vmem>>, vector<128x128xbf16>
    %cst_7 = arith.constant dense<0.000000e+00> : vector<2x128xf32>
    %9 = tpu.matmul %7, %8, %cst_7 {dimension_numbers = #tpu.dot_dimension_numbers<[1], [0], [0], [1], [0, 0, 1, 1], [], []>} : vector<2x128xbf16>, vector<128x128xbf16>, vector<2x128xf32> -> vector<2x128xf32>
    %c0_8 = arith.constant 0 : index
    %c0_9 = arith.constant 0 : index
    %10 = vector.load %arg4[%c0_8, %c0_9] : memref<1x128xf32, #tpu.memory_space<vmem>>, vector<1x128xf32>
    %11 = vector.broadcast %10 : vector<1x128xf32> to vector<2x128xf32>
    %12 = arith.addf %9, %11 : vector<2x128xf32>
    %13 = math.tanh %12 : vector<2x128xf32>
    %14 = arith.truncf %13 : vector<2x128xf32> to vector<2x128xbf16>
    %c0_10 = arith.constant 0 : index
    %c0_11 = arith.constant 0 : index
    %15 = vector.load %arg5[%c0_10, %c0_11] : memref<128x128xbf16, #tpu.memory_space<vmem>>, vector<128x128xbf16>
    %cst_12 = arith.constant dense<0.000000e+00> : vector<2x128xf32>
    %16 = tpu.matmul %14, %15, %cst_12 {dimension_numbers = #tpu.dot_dimension_numbers<[1], [0], [0], [1], [0, 0, 1, 1], [], []>} : vector<2x128xbf16>, vector<128x128xbf16>, vector<2x128xf32> -> vector<2x128xf32>
    %c0_13 = arith.constant 0 : index
    %c0_14 = arith.constant 0 : index
    %17 = vector.load %arg6[%c0_13, %c0_14] : memref<1x128xf32, #tpu.memory_space<vmem>>, vector<1x128xf32>
    %18 = vector.broadcast %17 : vector<1x128xf32> to vector<2x128xf32>
    %19 = arith.addf %16, %18 : vector<2x128xf32>
    %20 = tpu.iota {dimensions = array<i32: 1>} : vector<2x128xi32>
    %c10_i32 = arith.constant 10 : i32
    %21 = vector.broadcast %c10_i32 : i32 to vector<2x128xi32>
    %22 = arith.cmpi slt, %20, %21 : vector<2x128xi32>
    %cst_15 = arith.constant 0xFF800000 : f32
    %23 = vector.broadcast %cst_15 : f32 to vector<2x128xf32>
    %24 = arith.select %22, %19, %23 : vector<2x128xi1>, vector<2x128xf32>
    %cst_16 = arith.constant dense<0xFF800000> : vector<2xf32>
    %25 = vector.multi_reduction <maximumf>, %24, %cst_16 [1] : vector<2x128xf32> to vector<2xf32>
    %26 = vector.shape_cast %25 : vector<2xf32> to vector<2x1xf32>
    %27 = vector.broadcast %26 : vector<2x1xf32> to vector<2x128xf32>
    %28 = arith.cmpf oge, %24, %27 : vector<2x128xf32>
    %c1073741824_i32 = arith.constant 1073741824 : i32
    %29 = vector.broadcast %c1073741824_i32 : i32 to vector<2x128xi32>
    %30 = arith.select %28, %20, %29 : vector<2x128xi1>, vector<2x128xi32>
    %cst_17 = arith.constant dense<2147483647> : vector<2xi32>
    %31 = vector.multi_reduction <minsi>, %30, %cst_17 [1] : vector<2x128xi32> to vector<2xi32>
    %32 = vector.shape_cast %31 : vector<2xi32> to vector<2x1xi32>
    %c0_18 = arith.constant 0 : index
    %c0_19 = arith.constant 0 : index
    %33 = vector.load %arg7[%c0_18, %c0_19] : memref<2x1xi32, #tpu.memory_space<vmem>>, vector<2x1xi32>
    tpu.vector_store %arg7[%c0_18, %c0_19], %32 {strides = array<i32>} : memref<2x1xi32, #tpu.memory_space<vmem>>, vector<2x1xi32>,
    return
  }
}

</mosaic_0001>

<llo_original>
// kernel: lenet5_forward.3
$region0: #{lenet5_forward.3}
  #allocation0 [shape = 'u32[]', space=smem, size = 0x4, offset = 0x4, fixed_abs, tag = 'smem constant byte address 0x4 - core index']
  #allocation1 [shape = 'u32[72,128]{1,0:T(1,128)}', space=vmem, size = 0x9000, scoped, tag = 'internal scratch']
  %s0 = inlined_call_operand.vmem [shape: bf16[4,512,128], index: 0, kind: input, shape index: {}]
  %s1 = inlined_call_operand.vmem [shape: bf16[128,128], index: 1, kind: input, shape index: {}]
  %s2 = inlined_call_operand.vmem [shape: f32[1,128], index: 2, kind: input, shape index: {}]
  %s3 = inlined_call_operand.vmem [shape: f32[512,128], index: 3, kind: output, shape index: {}]
  %s4 = sld [smem:[#allocation0]]
  $region86: #{lenet5_forward.3} parent=0
    _
  %s6 = ssub.s32 1, %s4
  %s7 = scalar_select 0, %s6, %s4
  $region1: #{lenet5_forward.3} parent=0
    #allocation2 [shape = 'u8[524288]{0}', space=vmem, size = 0x80000, scoped, tag = 'input window, operand 0']
    loop: start=0, step=1, limit=4
    $region2: #{lenet5_forward.3} parent=1 // loop_pre_header
      _
    $region3: #{lenet5_forward.3} parent=1 // loop_header
      %s9 = sphi 0, %s13
      %p10 = scmp.ge.s32.totalorder %s9, 4
      %s19 = sphi 0, %s21
      %s22 = sphi 0, %s19
      %s23 = sphi 0, %s22
      %s39 = sphi 0, %s23
      %s43 = sphi 0, %s43
      %s45 = sphi 0, %s43
      %s46 = sphi 0, %s45
      %s60 = sphi 0, %s46
      %s64 = sphi 0, %s64
      %s66 = sphi 0, %s64
      %s67 = sphi 0, %s66
      %s81 = sphi 0, %s67
      %s87 = sphi 0, %s89
      %s90 = sphi 0, %s87
      %s91 = sphi 0, %s90
      %s107 = sphi 0, %s91
    $region4: #{lenet5_forward.3} parent=1 // loop_header_branch
      %12 = sbr.rel (%p10) target = $region8
    $region5: #{lenet5_forward.3} parent=1 // loop_body
      %s14 = ssub.s32 %s9, 1
      %s15 = ssub.s32 %s9, 2
      %s16 = sadd.s32 %s9, 1
      %s17 = ssub.s32 %s9, %s16
      %p18 = scmp.eq.s32.totalorder %s17, 0
      %s20 = sadd.s32 %s19, 1
      %s21 = scalar_select %p18, %s19, %s20
      %p24 = pneg %p18
      %p25 = scmp.eq.s32.totalorder %s9, 1
      %p26 = por %p24, %p25
      %p27 = scmp.ne.s32.totalorder %s19, %s22
      %p28 = scmp.eq.s32.totalorder %s9, 0
      %p29 = por %p27, %p28
      %p30 = scmp.ne.s32.totalorder %s19, %s22
      %p31 = scmp.eq.s32.totalorder %s14, 1
      %p32 = por %p30, %p31
      %p33 = scmp.ne.s32.totalorder %s22, %s23
      %p34 = scmp.eq.s32.totalorder %s14, 0
      %p35 = por %p33, %p34
      %p36 = scmp.ne.s32.totalorder %s22, %s23
      %p37 = scmp.eq.s32.totalorder %s15, 1
      %p38 = por %p36, %p37
      %p40 = scmp.ne.s32.totalorder %s23, %s39
      %p41 = scmp.eq.s32.totalorder %s15, 0
      %p42 = por %p40, %p41
      %s44 = sadd.s32 %s43, 1
      %p47 = scmp.eq.s32.totalorder %s9, 1
      %p48 = scmp.ne.s32.totalorder %s43, %s45
      %p49 = scmp.eq.s32.totalorder %s9, 0
      %p50 = por %p48, %p49
      %p51 = scmp.ne.s32.totalorder %s43, %s45
      %p52 = scmp.eq.s32.totalorder %s14, 1
      %p53 = por %p51, %p52
      %p54 = scmp.ne.s32.totalorder %s45, %s46
      %p55 = scmp.eq.s32.totalorder %s14, 0
      %p56 = por %p54, %p55
      %p57 = scmp.ne.s32.totalorder %s45, %s46
      %p58 = scmp.eq.s32.totalorder %s15, 1
      %p59 = por %p57, %p58
      %p61 = scmp.ne.s32.totalorder %s46, %s60
      %p62 = scmp.eq.s32.totalorder %s15, 0
      %p63 = por %p61, %p62
      %s65 = sadd.s32 %s64, 1
      %p68 = scmp.eq.s32.totalorder %s9, 1
      %p69 = scmp.ne.s32.totalorder %s64, %s66
      %p70 = scmp.eq.s32.totalorder %s9, 0
      %p71 = por %p69, %p70
      %p72 = scmp.ne.s32.totalorder %s64, %s66
      %p73 = scmp.eq.s32.totalorder %s14, 1
      %p74 = por %p72, %p73
      %p75 = scmp.ne.s32.totalorder %s66, %s67
      %p76 = scmp.eq.s32.totalorder %s14, 0
      %p77 = por %p75, %p76
      %p78 = scmp.ne.s32.totalorder %s66, %s67
      %p79 = scmp.eq.s32.totalorder %s15, 1
      %p80 = por %p78, %p79
      %p82 = scmp.ne.s32.totalorder %s67, %s81
      %p83 = scmp.eq.s32.totalorder %s15, 0
      %p84 = por %p82, %p83
      %s85 = ssub.s32 %s9, %s16
      %p86 = scmp.eq.s32.totalorder %s85, 0
      %s88 = sadd.s32 %s87, 1
      %s89 = scalar_select %p86, %s87, %s88
      %p92 = pneg %p86
      %p93 = scmp.eq.s32.totalorder %s9, 1
      %p94 = por %p92, %p93
      %p95 = scmp.ne.s32.totalorder %s87, %s90
      %p96 = scmp.eq.s32.totalorder %s9, 0
      %p97 = por %p95, %p96
      %p98 = scmp.ne.s32.totalorder %s87, %s90
      %p99 = scmp.eq.s32.totalorder %s14, 1
      %p100 = por %p98, %p99
      %p101 = scmp.ne.s32.totalorder %s90, %s91
      %p102 = scmp.eq.s32.totalorder %s14, 0
      %p103 = por %p101, %p102
      %p104 = scmp.ne.s32.totalorder %s90, %s91
      %p105 = scmp.eq.s32.totalorder %s15, 1
      %p106 = por %p104, %p105
      %p108 = scmp.ne.s32.totalorder %s91, %s107
      %p109 = scmp.eq.s32.totalorder %s15, 0
      %p110 = por %p108, %p109
      %p111 = scmp.le.s32.totalorder 1, %s9
      %p112 = scmp.lt.s32.totalorder %s9, 3
      %p113 = pnand %p111, %p112
      %p114 = pneg %p113
      // Predicated region
      $region9: #{lenet5_forward.3} parent=5 // pred_check
        _
      $region10: #{lenet5_forward.3} parent=5 // pred_check_branch
        %116 = sbr.rel (%p113) target = $region12
      $region11: #{lenet5_forward.3} parent=5 // pred_region
        %s117 = ssub.s32 %s9, 1
        // Predicated region
        $region13: #{lenet5_forward.3} parent=11 // pred_check
          %p118 = pneg %p56
        $region14: #{lenet5_forward.3} parent=11 // pred_check_branch
          %120 = sbr.rel (%p118) target = $region16
        $region15: #{lenet5_forward.3} parent=11 // pred_region
          _
        $region16: #{lenet5_forward.3} parent=11 // pred_fallthru
          _
        // Predicated region
        $region17: #{lenet5_forward.3} parent=11 // pred_check
          %p121 = pneg %p77
        $region18: #{lenet5_forward.3} parent=11 // pred_check_branch
          %123 = sbr.rel (%p121) target = $region20
        $region19: #{lenet5_forward.3} parent=11 // pred_region
          _
        $region20: #{lenet5_forward.3} parent=11 // pred_fallthru
          _
      $region12: #{lenet5_forward.3} parent=5 // pred_fallthru
        _
      %p124 = scmp.lt.s32.totalorder %s9, 2
      // Predicated region
      $region21: #{lenet5_forward.3} parent=5 // pred_check
        %p125 = pneg %p124
      $region22: #{lenet5_forward.3} parent=5 // pred_check_branch
        %127 = sbr.rel (%p125) target = $region24
      $region23: #{lenet5_forward.3} parent=5 // pred_region
        // Predicated region
        $region25: #{lenet5_forward.3} parent=23 // pred_check
          %p128 = pneg %p29
        $region26: #{lenet5_forward.3} parent=23 // pred_check_branch
          %130 = sbr.rel (%p128) target = $region28
        $region27: #{lenet5_forward.3} parent=23 // pred_region
          %s131 = sand.u32 %s19, 1
          %s132 = sand.u32 %s19, 1
          %s133 = smul.addr %s132, 512
          %s134 = scalar_lea.vmem [#allocation2], %s133
          %s135 = smul.u32 32, %s9
          %s136 = smul.addr %s135, 4
          %s137 = scalar_lea.vmem %s0, %s136
          // Predicated region
          $region29: #{lenet5_forward.3} parent=27 // pred_check
            _
          $region30: #{lenet5_forward.3} parent=27 // pred_check_branch
            %139 = sbr.rel (0) target = $region32
          $region31: #{lenet5_forward.3} parent=27 // pred_region
            // Predicated region
            $region33: #{lenet5_forward.3} parent=31 // pred_check
              _
            $region34: #{lenet5_forward.3} parent=31 // pred_check_branch
              %141 = sbr.rel target = $region36
            $region35: #{lenet5_forward.3} parent=31 // pred_region
              // Predicated region
              $region48: #{lenet5_forward.3} parent=35 // pred_check
                _
              $region49: #{lenet5_forward.3} parent=35 // pred_check_branch
                %411 = sbr.rel (0) target = $region51
              $region50: #{lenet5_forward.3} parent=35 // pred_region
                loop: start=0, step=1, limit=1
                $region52: #{lenet5_forward.3} parent=50 // loop_pre_header
                  _
                $region53: #{lenet5_forward.3} parent=50 // loop_header
                  %s413 = sphi 0, %s417
                  %p414 = scmp.ge.s32.totalorder %s413, 1
                  %s418 = sphi %s137, %s137
                  %s419 = sphi %s134, %s134
                $region54: #{lenet5_forward.3} parent=50 // loop_header_branch
                  %416 = sbr.rel (%p414) target = $region58
                $region55: #{lenet5_forward.3} parent=50 // loop_body
                  _
                $region56: #{lenet5_forward.3} parent=50 // loop_footer
                  %s417 = sadd.s32 1, %s413
                $region57: #{lenet5_forward.3} parent=50 // loop_footer_branch
                  %412 = sbr.rel target = $region53
                $region58: #{lenet5_forward.3} parent=50 // loop_exit
                  _
                %s421 = ssub.s32 16, 1
                loop: start=0, step=1, limit=1
                $region59: #{lenet5_forward.3} parent=50 // loop_pre_header
                  _
                $region60: #{lenet5_forward.3} parent=50 // loop_header
                  %s423 = sphi 0, %s427
                  %p424 = scmp.ge.s32.totalorder %s423, 1
                  %s428 = sphi %s137, %s137
                  %s429 = sphi %s134, %s134
                $region61: #{lenet5_forward.3} parent=50 // loop_header_branch
                  %426 = sbr.rel (%p424) target = $region65
                $region62: #{lenet5_forward.3} parent=50 // loop_body
                  %v430 = vld [vmem:[%s428] sm:%s421]
                  %431 = vst [vmem:[%s429] sm:%s421] %v430
                  %v432 = vld [vmem:[%s428 + $0x4] sm:%s421]
                  %433 = vst [vmem:[%s429 + $0x4] sm:%s421] %v432
                  %v434 = vld [vmem:[%s428 + $0x8] sm:%s421]
                  %435 = vst [vmem:[%s429 + $0x8] sm:%s421] %v434
                  %v436 = vld [vmem:[%s428 + $0xc] sm:%s421]
                  %437 = vst [vmem:[%s429 + $0xc] sm:%s421] %v436
                  %v438 = vld [vmem:[%s428 + $0x10] sm:%s421]
                  %439 = vst [vmem:[%s429 + $0x10] sm:%s421] %v438
                  %v440 = vld [vmem:[%s428 + $0x14] sm:%s421]
                  %441 = vst [vmem:[%s429 + $0x14] sm:%s421] %v440
                  %v442 = vld [vmem:[%s428 + $0x18] sm:%s421]
                  %443 = vst [vmem:[%s429 + $0x18] sm:%s421] %v442
                  %v444 = vld [vmem:[%s428 + $0x1c] sm:%s421]
                  %445 = vst [vmem:[%s429 + $0x1c] sm:%s421] %v444
                  %v446 = vld [vmem:[%s428 + $0x20] sm:%s421]
                  %447 = vst [vmem:[%s429 + $0x20] sm:%s421] %v446
                  %v448 = vld [vmem:[%s428 + $0x24] sm:%s421]
                  %449 = vst [vmem:[%s429 + $0x24] sm:%s421] %v448
                  %v450 = vld [vmem:[%s428 + $0x28] sm:%s421]
                  %451 = vst [vmem:[%s429 + $0x28] sm:%s421] %v450
                  %v452 = vld [vmem:[%s428 + $0x2c] sm:%s421]
                  %453 = vst [vmem:[%s429 + $0x2c] sm:%s421] %v452
                  %v454 = vld [vmem:[%s428 + $0x30] sm:%s421]
                  %455 = vst [vmem:[%s429 + $0x30] sm:%s421] %v454
                  %v456 = vld [vmem:[%s428 + $0x34] sm:%s421]
                  %457 = vst [vmem:[%s429 + $0x34] sm:%s421] %v456
                  %v458 = vld [vmem:[%s428 + $0x38] sm:%s421]
                  %459 = vst [vmem:[%s429 + $0x38] sm:%s421] %v458
                  %v460 = vld [vmem:[%s428 + $0x3c] sm:%s421]
                  %461 = vst [vmem:[%s429 + $0x3c] sm:%s421] %v460
                  %v462 = vld [vmem:[%s428 + $0x40] sm:%s421]
                  %463 = vst [vmem:[%s429 + $0x40] sm:%s421] %v462
                  %v464 = vld [vmem:[%s428 + $0x44] sm:%s421]
                  %465 = vst [vmem:[%s429 + $0x44] sm:%s421] %v464
                  %v466 = vld [vmem:[%s428 + $0x48] sm:%s421]
                  %467 = vst [vmem:[%s429 + $0x48] sm:%s421] %v466
                  %v468 = vld [vmem:[%s428 + $0x4c] sm:%s421]
                  %469 = vst [vmem:[%s429 + $0x4c] sm:%s421] %v468
                  %v470 = vld [vmem:[%s428 + $0x50] sm:%s421]
                  %471 = vst [vmem:[%s429 + $0x50] sm:%s421] %v470
                  %v472 = vld [vmem:[%s428 + $0x54] sm:%s421]
                  %473 = vst [vmem:[%s429 + $0x54] sm:%s421] %v472
                  %v474 = vld [vmem:[%s428 + $0x58] sm:%s421]
                  %475 = vst [vmem:[%s429 + $0x58] sm:%s421] %v474
                  %v476 = vld [vmem:[%s428 + $0x5c] sm:%s421]
                  %477 = vst [vmem:[%s429 + $0x5c] sm:%s421] %v476
                  %v478 = vld [vmem:[%s428 + $0x60] sm:%s421]
                  %479 = vst [vmem:[%s429 + $0x60] sm:%s421] %v478
                  %v480 = vld [vmem:[%s428 + $0x64] sm:%s421]
                  %481 = vst [vmem:[%s429 + $0x64] sm:%s421] %v480
                  %v482 = vld [vmem:[%s428 + $0x68] sm:%s421]
                  %483 = vst [vmem:[%s429 + $0x68] sm:%s421] %v482
                  %v484 = vld [vmem:[%s428 + $0x6c] sm:%s421]
                  %485 = vst [vmem:[%s429 + $0x6c] sm:%s421] %v484
                  %v486 = vld [vmem:[%s428 + $0x70] sm:%s421]
                  %487 = vst [vmem:[%s429 + $0x70] sm:%s421] %v486
                  %v488 = vld [vmem:[%s428 + $0x74] sm:%s421]
                  %489 = vst [vmem:[%s429 + $0x74] sm:%s421] %v488
                  %v490 = vld [vmem:[%s428 + $0x78] sm:%s421]
                  %491 = vst [vmem:[%s429 + $0x78] sm:%s421] %v490
                  %v492 = vld [vmem:[%s428 + $0x7c] sm:%s421]
                  %493 = vst [vmem:[%s429 + $0x7c] sm:%s421] %v492
                  %v494 = vld [vmem:[%s428 + $0x100] sm:%s421]
                  %495 = vst [vmem:[%s429 + $0x80] sm:%s421] %v494
                  %v496 = vld [vmem:[%s428 + $0x104] sm:%s421]
                  %497 = vst [vmem:[%s429 + $0x84] sm:%s421] %v496
                  %v498 = vld [vmem:[%s428 + $0x108] sm:%s421]
                  %499 = vst [vmem:[%s429 + $0x88] sm:%s421] %v498
                  %v500 = vld [vmem:[%s428 + $0x10c] sm:%s421]
                  %501 = vst [vmem:[%s429 + $0x8c] sm:%s421] %v500
                  %v502 = vld [vmem:[%s428 + $0x110] sm:%s421]
                  %503 = vst [vmem:[%s429 + $0x90] sm:%s421] %v502
                  %v504 = vld [vmem:[%s428 + $0x114] sm:%s421]
                  %505 = vst [vmem:[%s429 + $0x94] sm:%s421] %v504
                  %v506 = vld [vmem:[%s428 + $0x118] sm:%s421]
                  %507 = vst [vmem:[%s429 + $0x98] sm:%s421] %v506
                  %v508 = vld [vmem:[%s428 + $0x11c] sm:%s421]
                  %509 = vst [vmem:[%s429 + $0x9c] sm:%s421] %v508
                  %v510 = vld [vmem:[%s428 + $0x120] sm:%s421]
                  %511 = vst [vmem:[%s429 + $0xa0] sm:%s421] %v510
                  %v512 = vld [vmem:[%s428 + $0x124] sm:%s421]
                  %513 = vst [vmem:[%s429 + $0xa4] sm:%s421] %v512
                  %v514 = vld [vmem:[%s428 + $0x128] sm:%s421]
                  %515 = vst [vmem:[%s429 + $0xa8] sm:%s421] %v514
                  %v516 = vld [vmem:[%s428 + $0x12c] sm:%s421]
                  %517 = vst [vmem:[%s429 + $0xac] sm:%s421] %v516
                  %v518 = vld [vmem:[%s428 + $0x130] sm:%s421]
                  %519 = vst [vmem:[%s429 + $0xb0] sm:%s421] %v518
                  %v520 = vld [vmem:[%s428 + $0x134] sm:%s421]
                  %521 = vst [vmem:[%s429 + $0xb4] sm:%s421] %v520
                  %v522 = vld [vmem:[%s428 + $0x138] sm:%s421]
                  %523 = vst [vmem:[%s429 + $0xb8] sm:%s421] %v522
                  %v524 = vld [vmem:[%s428 + $0x13c] sm:%s421]
                  %525 = vst [vmem:[%s429 + $0xbc] sm:%s421] %v524
                  %v526 = vld [vmem:[%s428 + $0x140] sm:%s421]
                  %527 = vst [vmem:[%s429 + $0xc0] sm:%s421] %v526
                  %v528 = vld [vmem:[%s428 + $0x144] sm:%s421]
                  %529 = vst [vmem:[%s429 + $0xc4] sm:%s421] %v528
                  %v530 = vld [vmem:[%s428 + $0x148] sm:%s421]
                  %531 = vst [vmem:[%s429 + $0xc8] sm:%s421] %v530
                  %v532 = vld [vmem:[%s428 + $0x14c] sm:%s421]
                  %533 = vst [vmem:[%s429 + $0xcc] sm:%s421] %v532
                  %v534 = vld [vmem:[%s428 + $0x150] sm:%s421]
                  %535 = vst [vmem:[%s429 + $0xd0] sm:%s421] %v534
                  %v536 = vld [vmem:[%s428 + $0x154] sm:%s421]
                  %537 = vst [vmem:[%s429 + $0xd4] sm:%s421] %v536
                  %v538 = vld [vmem:[%s428 + $0x158] sm:%s421]
                  %539 = vst [vmem:[%s429 + $0xd8] sm:%s421] %v538
                  %v540 = vld [vmem:[%s428 + $0x15c] sm:%s421]
                  %541 = vst [vmem:[%s429 + $0xdc] sm:%s421] %v540
                  %v542 = vld [vmem:[%s428 + $0x160] sm:%s421]
                  %543 = vst [vmem:[%s429 + $0xe0] sm:%s421] %v542
                  %v544 = vld [vmem:[%s428 + $0x164] sm:%s421]
                  %545 = vst [vmem:[%s429 + $0xe4] sm:%s421] %v544
                  %v546 = vld [vmem:[%s428 + $0x168] sm:%s421]
                  %547 = vst [vmem:[%s429 + $0xe8] sm:%s421] %v546
                  %v548 = vld [vmem:[%s428 + $0x16c] sm:%s421]
                  %549 = vst [vmem:[%s429 + $0xec] sm:%s421] %v548
                  %v550 = vld [vmem:[%s428 + $0x170] sm:%s421]
                  %551 = vst [vmem:[%s429 + $0xf0] sm:%s421] %v550
                  %v552 = vld [vmem:[%s428 + $0x174] sm:%s421]
                  %553 = vst [vmem:[%s429 + $0xf4] sm:%s421] %v552
                  %v554 = vld [vmem:[%s428 + $0x178] sm:%s421]
                  %555 = vst [vmem:[%s429 + $0xf8] sm:%s421] %v554
                  %v556 = vld [vmem:[%s428 + $0x17c] sm:%s421]
                  %557 = vst [vmem:[%s429 + $0xfc] sm:%s421] %v556
                  %v558 = vld [vmem:[%s428 + $0x200] sm:%s421]
                  %559 = vst [vmem:[%s429 + $0x100] sm:%s421] %v558
                  %v560 = vld [vmem:[%s428 + $0x204] sm:%s421]
                  %561 = vst [vmem:[%s429 + $0x104] sm:%s421] %v560
                  %v562 = vld [vmem:[%s428 + $0x208] sm:%s421]
                  %563 = vst [vmem:[%s429 + $0x108] sm:%s421] %v562
                  %v564 = vld [vmem:[%s428 + $0x20c] sm:%s421]
                  %565 = vst [vmem:[%s429 + $0x10c] sm:%s421] %v564
                  %v566 = vld [vmem:[%s428 + $0x210] sm:%s421]
                  %567 = vst [vmem:[%s429 + $0x110] sm:%s421] %v566
                  %v568 = vld [vmem:[%s428 + $0x214] sm:%s421]
                  %569 = vst [vmem:[%s429 + $0x114] sm:%s421] %v568
                  %v570 = vld [vmem:[%s428 + $0x218] sm:%s421]
                  %571 = vst [vmem:[%s429 + $0x118] sm:%s421] %v570
                  %v572 = vld [vmem:[%s428 + $0x21c] sm:%s421]
                  %573 = vst [vmem:[%s429 + $0x11c] sm:%s421] %v572
                  %v574 = vld [vmem:[%s428 + $0x220] sm:%s421]
                  %575 = vst [vmem:[%s429 + $0x120] sm:%s421] %v574
                  %v576 = vld [vmem:[%s428 + $0x224] sm:%s421]
                  %577 = vst [vmem:[%s429 + $0x124] sm:%s421] %v576
                  %v578 = vld [vmem:[%s428 + $0x228] sm:%s421]
                  %579 = vst [vmem:[%s429 + $0x128] sm:%s421] %v578
                  %v580 = vld [vmem:[%s428 + $0x22c] sm:%s421]
                  %581 = vst [vmem:[%s429 + $0x12c] sm:%s421] %v580
                  %v582 = vld [vmem:[%s428 + $0x230] sm:%s421]
                  %583 = vst [vmem:[%s429 + $0x130] sm:%s421] %v582
                  %v584 = vld [vmem:[%s428 + $0x234] sm:%s421]
                  %585 = vst [vmem:[%s429 + $0x134] sm:%s421] %v584
                  %v586 = vld [vmem:[%s428 + $0x238] sm:%s421]
                  %587 = vst [vmem:[%s429 + $0x138] sm:%s421] %v586
                  %v588 = vld [vmem:[%s428 + $0x23c] sm:%s421]
                  %589 = vst [vmem:[%s429 + $0x13c] sm:%s421] %v588
                  %v590 = vld [vmem:[%s428 + $0x240] sm:%s421]
                  %591 = vst [vmem:[%s429 + $0x140] sm:%s421] %v590
                  %v592 = vld [vmem:[%s428 + $0x244] sm:%s421]
                  %593 = vst [vmem:[%s429 + $0x144] sm:%s421] %v592
                  %v594 = vld [vmem:[%s428 + $0x248] sm:%s421]
                  %595 = vst [vmem:[%s429 + $0x148] sm:%s421] %v594
                  %v596 = vld [vmem:[%s428 + $0x24c] sm:%s421]
                  %597 = vst [vmem:[%s429 + $0x14c] sm:%s421] %v596
                  %v598 = vld [vmem:[%s428 + $0x250] sm:%s421]
                  %599 = vst [vmem:[%s429 + $0x150] sm:%s421] %v598
                  %v600 = vld [vmem:[%s428 + $0x254] sm:%s421]
                  %601 = vst [vmem:[%s429 + $0x154] sm:%s421] %v600
                  %v602 = vld [vmem:[%s428 + $0x258] sm:%s421]
                  %603 = vst [vmem:[%s429 + $0x158] sm:%s421] %v602
                  %v604 = vld [vmem:[%s428 + $0x25c] sm:%s421]
                  %605 = vst [vmem:[%s429 + $0x15c] sm:%s421] %v604
                  %v606 = vld [vmem:[%s428 + $0x260] sm:%s421]
                  %607 = vst [vmem:[%s429 + $0x160] sm:%s421] %v606
                  %v608 = vld [vmem:[%s428 + $0x264] sm:%s421]
                  %609 = vst [vmem:[%s429 + $0x164] sm:%s421] %v608
                  %v610 = vld [vmem:[%s428 + $0x268] sm:%s421]
                  %611 = vst [vmem:[%s429 + $0x168] sm:%s421] %v610
                  %v612 = vld [vmem:[%s428 + $0x26c] sm:%s421]
                  %613 = vst [vmem:[%s429 + $0x16c] sm:%s421] %v612
                  %v614 = vld [vmem:[%s428 + $0x270] sm:%s421]
                  %615 = vst [vmem:[%s429 + $0x170] sm:%s421] %v614
                  %v616 = vld [vmem:[%s428 + $0x274] sm:%s421]
                  %617 = vst [vmem:[%s429 + $0x174] sm:%s421] %v616
                  %v618 = vld [vmem:[%s428 + $0x278] sm:%s421]
                  %619 = vst [vmem:[%s429 + $0x178] sm:%s421] %v618
                  %v620 = vld [vmem:[%s428 + $0x27c] sm:%s421]
                  %621 = vst [vmem:[%s429 + $0x17c] sm:%s421] %v620
                  %v622 = vld [vmem:[%s428 + $0x300] sm:%s421]
                  %623 = vst [vmem:[%s429 + $0x180] sm:%s421] %v622
                  %v624 = vld [vmem:[%s428 + $0x304] sm:%s421]
                  %625 = vst [vmem:[%s429 + $0x184] sm:%s421] %v624
                  %v626 = vld [vmem:[%s428 + $0x308] sm:%s421]
                  %627 = vst [vmem:[%s429 + $0x188] sm:%s421] %v626
                  %v628 = vld [vmem:[%s428 + $0x30c] sm:%s421]
                  %629 = vst [vmem:[%s429 + $0x18c] sm:%s421] %v628
                  %v630 = vld [vmem:[%s428 + $0x310] sm:%s421]
                  %631 = vst [vmem:[%s429 + $0x190] sm:%s421] %v630
                  %v632 = vld [vmem:[%s428 + $0x314] sm:%s421]
                  %633 = vst [vmem:[%s429 + $0x194] sm:%s421] %v632
                  %v634 = vld [vmem:[%s428 + $0x318] sm:%s421]
                  %635 = vst [vmem:[%s429 + $0x198] sm:%s421] %v634
                  %v636 = vld [vmem:[%s428 + $0x31c] sm:%s421]
                  %637 = vst [vmem:[%s429 + $0x19c] sm:%s421] %v636
                  %v638 = vld [vmem:[%s428 + $0x320] sm:%s421]
                  %639 = vst [vmem:[%s429 + $0x1a0] sm:%s421] %v638
                  %v640 = vld [vmem:[%s428 + $0x324] sm:%s421]
                  %641 = vst [vmem:[%s429 + $0x1a4] sm:%s421] %v640
                  %v642 = vld [vmem:[%s428 + $0x328] sm:%s421]
                  %643 = vst [vmem:[%s429 + $0x1a8] sm:%s421] %v642
                  %v644 = vld [vmem:[%s428 + $0x32c] sm:%s421]
                  %645 = vst [vmem:[%s429 + $0x1ac] sm:%s421] %v644
                  %v646 = vld [vmem:[%s428 + $0x330] sm:%s421]
                  %647 = vst [vmem:[%s429 + $0x1b0] sm:%s421] %v646
                  %v648 = vld [vmem:[%s428 + $0x334] sm:%s421]
                  %649 = vst [vmem:[%s429 + $0x1b4] sm:%s421] %v648
                  %v650 = vld [vmem:[%s428 + $0x338] sm:%s421]
                  %651 = vst [vmem:[%s429 + $0x1b8] sm:%s421] %v650
                  %v652 = vld [vmem:[%s428 + $0x33c] sm:%s421]
                  %653 = vst [vmem:[%s429 + $0x1bc] sm:%s421] %v652
                  %v654 = vld [vmem:[%s428 + $0x340] sm:%s421]
                  %655 = vst [vmem:[%s429 + $0x1c0] sm:%s421] %v654
                  %v656 = vld [vmem:[%s428 + $0x344] sm:%s421]
                  %657 = vst [vmem:[%s429 + $0x1c4] sm:%s421] %v656
                  %v658 = vld [vmem:[%s428 + $0x348] sm:%s421]
                  %659 = vst [vmem:[%s429 + $0x1c8] sm:%s421] %v658
                  %v660 = vld [vmem:[%s428 + $0x34c] sm:%s421]
                  %661 = vst [vmem:[%s429 + $0x1cc] sm:%s421] %v660
                  %v662 = vld [vmem:[%s428 + $0x350] sm:%s421]
                  %663 = vst [vmem:[%s429 + $0x1d0] sm:%s421] %v662
                  %v664 = vld [vmem:[%s428 + $0x354] sm:%s421]
                  %665 = vst [vmem:[%s429 + $0x1d4] sm:%s421] %v664
                  %v666 = vld [vmem:[%s428 + $0x358] sm:%s421]
                  %667 = vst [vmem:[%s429 + $0x1d8] sm:%s421] %v666
                  %v668 = vld [vmem:[%s428 + $0x35c] sm:%s421]
                  %669 = vst [vmem:[%s429 + $0x1dc] sm:%s421] %v668
                  %v670 = vld [vmem:[%s428 + $0x360] sm:%s421]
                  %671 = vst [vmem:[%s429 + $0x1e0] sm:%s421] %v670
                  %v672 = vld [vmem:[%s428 + $0x364] sm:%s421]
                  %673 = vst [vmem:[%s429 + $0x1e4] sm:%s421] %v672
                  %v674 = vld [vmem:[%s428 + $0x368] sm:%s421]
                  %675 = vst [vmem:[%s429 + $0x1e8] sm:%s421] %v674
                  %v676 = vld [vmem:[%s428 + $0x36c] sm:%s421]
                  %677 = vst [vmem:[%s429 + $0x1ec] sm:%s421] %v676
                  %v678 = vld [vmem:[%s428 + $0x370] sm:%s421]
                  %679 = vst [vmem:[%s429 + $0x1f0] sm:%s421] %v678
                  %v680 = vld [vmem:[%s428 + $0x374] sm:%s421]
                  %681 = vst [vmem:[%s429 + $0x1f4] sm:%s421] %v680
                  %v682 = vld [vmem:[%s428 + $0x378] sm:%s421]
                  %683 = vst [vmem:[%s429 + $0x1f8] sm:%s421] %v682
                  %v684 = vld [vmem:[%s428 + $0x37c] sm:%s421]
                  %685 = vst [vmem:[%s429 + $0x1fc] sm:%s421] %v684
                $region63: #{lenet5_forward.3} parent=50 // loop_footer
                  %s427 = sadd.s32 1, %s423
                $region64: #{lenet5_forward.3} parent=50 // loop_footer_branch
                  %422 = sbr.rel target = $region60
                $region65: #{lenet5_forward.3} parent=50 // loop_exit
                  _
              $region51: #{lenet5_forward.3} parent=35 // pred_fallthru
                _
            $region36: #{lenet5_forward.3} parent=31 // pred_fallthru
              _
            // Predicated region
            $region37: #{lenet5_forward.3} parent=31 // pred_check
              _
            $region38: #{lenet5_forward.3} parent=31 // pred_check_branch
              %143 = sbr.rel (0) target = $region40
            $region39: #{lenet5_forward.3} parent=31 // pred_region
              %s145 = ssub.s32 16, 1
              loop: start=0, step=1, limit=1
              $region41: #{lenet5_forward.3} parent=39 // loop_pre_header
                _
              $region42: #{lenet5_forward.3} parent=39 // loop_header
                %s147 = sphi 0, %s151
                %p148 = scmp.ge.s32.totalorder %s147, 1
                %s152 = sphi %s137, %s137
                %s153 = sphi %s134, %s134
              $region43: #{lenet5_forward.3} parent=39 // loop_header_branch
                %150 = sbr.rel (%p148) target = $region47
              $region44: #{lenet5_forward.3} parent=39 // loop_body
                %v154 = vld [vmem:[%s152] sm:%s145]
                %155 = vst [vmem:[%s153] sm:%s145] %v154
                %v156 = vld [vmem:[%s152 + $0x4] sm:%s145]
                %157 = vst [vmem:[%s153 + $0x4] sm:%s145] %v156
                %v158 = vld [vmem:[%s152 + $0x8] sm:%s145]
                %159 = vst [vmem:[%s153 + $0x8] sm:%s145] %v158
                %v160 = vld [vmem:[%s152 + $0xc] sm:%s145]
                %161 = vst [vmem:[%s153 + $0xc] sm:%s145] %v160
                %v162 = vld [vmem:[%s152 + $0x10] sm:%s145]
                %163 = vst [vmem:[%s153 + $0x10] sm:%s145] %v162
                %v164 = vld [vmem:[%s152 + $0x14] sm:%s145]
                %165 = vst [vmem:[%s153 + $0x14] sm:%s145] %v164
                %v166 = vld [vmem:[%s152 + $0x18] sm:%s145]
                %167 = vst [vmem:[%s153 + $0x18] sm:%s145] %v166
                %v168 = vld [vmem:[%s152 + $0x1c] sm:%s145]
                %169 = vst [vmem:[%s153 + $0x1c] sm:%s145] %v168
                %v170 = vld [vmem:[%s152 + $0x20] sm:%s145]
                %171 = vst [vmem:[%s153 + $0x20] sm:%s145] %v170
                %v172 = vld [vmem:[%s152 + $0x24] sm:%s145]
                %173 = vst [vmem:[%s153 + $0x24] sm:%s145] %v172
                %v174 = vld [vmem:[%s152 + $0x28] sm:%s145]
                %175 = vst [vmem:[%s153 + $0x28] sm:%s145] %v174
                %v176 = vld [vmem:[%s152 + $0x2c] sm:%s145]
                %177 = vst [vmem:[%s153 + $0x2c] sm:%s145] %v176
                %v178 = vld [vmem:[%s152 + $0x30] sm:%s145]
                %179 = vst [vmem:[%s153 + $0x30] sm:%s145] %v178
                %v180 = vld [vmem:[%s152 + $0x34] sm:%s145]
                %181 = vst [vmem:[%s153 + $0x34] sm:%s145] %v180
                %v182 = vld [vmem:[%s152 + $0x38] sm:%s145]
                %183 = vst [vmem:[%s153 + $0x38] sm:%s145] %v182
                %v184 = vld [vmem:[%s152 + $0x3c] sm:%s145]
                %185 = vst [vmem:[%s153 + $0x3c] sm:%s145] %v184
                %v186 = vld [vmem:[%s152 + $0x40] sm:%s145]
                %187 = vst [vmem:[%s153 + $0x40] sm:%s145] %v186
                %v188 = vld [vmem:[%s152 + $0x44] sm:%s145]
                %189 = vst [vmem:[%s153 + $0x44] sm:%s145] %v188
                %v190 = vld [vmem:[%s152 + $0x48] sm:%s145]
                %191 = vst [vmem:[%s153 + $0x48] sm:%s145] %v190
                %v192 = vld [vmem:[%s152 + $0x4c] sm:%s145]
                %193 = vst [vmem:[%s153 + $0x4c] sm:%s145] %v192
                %v194 = vld [vmem:[%s152 + $0x50] sm:%s145]
                %195 = vst [vmem:[%s153 + $0x50] sm:%s145] %v194
                %v196 = vld [vmem:[%s152 + $0x54] sm:%s145]
                %197 = vst [vmem:[%s153 + $0x54] sm:%s145] %v196
                %v198 = vld [vmem:[%s152 + $0x58] sm:%s145]
                %199 = vst [vmem:[%s153 + $0x58] sm:%s145] %v198
                %v200 = vld [vmem:[%s152 + $0x5c] sm:%s145]
                %201 = vst [vmem:[%s153 + $0x5c] sm:%s145] %v200
                %v202 = vld [vmem:[%s152 + $0x60] sm:%s145]
                %203 = vst [vmem:[%s153 + $0x60] sm:%s145] %v202
                %v204 = vld [vmem:[%s152 + $0x64] sm:%s145]
                %205 = vst [vmem:[%s153 + $0x64] sm:%s145] %v204
                %v206 = vld [vmem:[%s152 + $0x68] sm:%s145]
                %207 = vst [vmem:[%s153 + $0x68] sm:%s145] %v206
                %v208 = vld [vmem:[%s152 + $0x6c] sm:%s145]
                %209 = vst [vmem:[%s153 + $0x6c] sm:%s145] %v208
                %v210 = vld [vmem:[%s152 + $0x70] sm:%s145]
                %211 = vst [vmem:[%s153 + $0x70] sm:%s145] %v210
                %v212 = vld [vmem:[%s152 + $0x74] sm:%s145]
                %213 = vst [vmem:[%s153 + $0x74] sm:%s145] %v212
                %v214 = vld [vmem:[%s152 + $0x78] sm:%s145]
                %215 = vst [vmem:[%s153 + $0x78] sm:%s145] %v214
                %v216 = vld [vmem:[%s152 + $0x7c] sm:%s145]
                %217 = vst [vmem:[%s153 + $0x7c] sm:%s145] %v216
                %v218 = vld [vmem:[%s152 + $0x100] sm:%s145]
                %219 = vst [vmem:[%s153 + $0x80] sm:%s145] %v218
                %v220 = vld [vmem:[%s152 + $0x104] sm:%s145]
                %221 = vst [vmem:[%s153 + $0x84] sm:%s145] %v220
                %v222 = vld [vmem:[%s152 + $0x108] sm:%s145]
                %223 = vst [vmem:[%s153 + $0x88] sm:%s145] %v222
                %v224 = vld [vmem:[%s152 + $0x10c] sm:%s145]
                %225 = vst [vmem:[%s153 + $0x8c] sm:%s145] %v224
                %v226 = vld [vmem:[%s152 + $0x110] sm:%s145]
                %227 = vst [vmem:[%s153 + $0x90] sm:%s145] %v226
                %v228 = vld [vmem:[%s152 + $0x114] sm:%s145]
                %229 = vst [vmem:[%s153 + $0x94] sm:%s145] %v228
                %v230 = vld [vmem:[%s152 + $0x118] sm:%s145]
                %231 = vst [vmem:[%s153 + $0x98] sm:%s145] %v230
                %v232 = vld [vmem:[%s152 + $0x11c] sm:%s145]
                %233 = vst [vmem:[%s153 + $0x9c] sm:%s145] %v232
                %v234 = vld [vmem:[%s152 + $0x120] sm:%s145]
                %235 = vst [vmem:[%s153 + $0xa0] sm:%s145] %v234
                %v236 = vld [vmem:[%s152 + $0x124] sm:%s145]
                %237 = vst [vmem:[%s153 + $0xa4] sm:%s145] %v236
                %v238 = vld [vmem:[%s152 + $0x128] sm:%s145]
                %239 = vst [vmem:[%s153 + $0xa8] sm:%s145] %v238
                %v240 = vld [vmem:[%s152 + $0x12c] sm:%s145]
                %241 = vst [vmem:[%s153 + $0xac] sm:%s145] %v240
                %v242 = vld [vmem:[%s152 + $0x130] sm:%s145]
                %243 = vst [vmem:[%s153 + $0xb0] sm:%s145] %v242
                %v244 = vld [vmem:[%s152 + $0x134] sm:%s145]
                %245 = vst [vmem:[%s153 + $0xb4] sm:%s145] %v244
                %v246 = vld [vmem:[%s152 + $0x138] sm:%s145]
                %247 = vst [vmem:[%s153 + $0xb8] sm:%s145] %v246
                %v248 = vld [vmem:[%s152 + $0x13c] sm:%s145]
                %249 = vst [vmem:[%s153 + $0xbc] sm:%s145] %v248
                %v250 = vld [vmem:[%s152 + $0x140] sm:%s145]
                %251 = vst [vmem:[%s153 + $0xc0] sm:%s145] %v250
                %v252 = vld [vmem:[%s152 + $0x144] sm:%s145]
                %253 = vst [vmem:[%s153 + $0xc4] sm:%s145] %v252
                %v254 = vld [vmem:[%s152 + $0x148] sm:%s145]
                %255 = vst [vmem:[%s153 + $0xc8] sm:%s145] %v254
                %v256 = vld [vmem:[%s152 + $0x14c] sm:%s145]
                %257 = vst [vmem:[%s153 + $0xcc] sm:%s145] %v256
                %v258 = vld [vmem:[%s152 + $0x150] sm:%s145]
                %259 = vst [vmem:[%s153 + $0xd0] sm:%s145] %v258
                %v260 = vld [vmem:[%s152 + $0x154] sm:%s145]
                %261 = vst [vmem:[%s153 + $0xd4] sm:%s145] %v260
                %v262 = vld [vmem:[%s152 + $0x158] sm:%s145]
                %263 = vst [vmem:[%s153 + $0xd8] sm:%s145] %v262
                %v264 = vld [vmem:[%s152 + $0x15c] sm:%s145]
                %265 = vst [vmem:[%s153 + $0xdc] sm:%s145] %v264
                %v266 = vld [vmem:[%s152 + $0x160] sm:%s145]
                %267 = vst [vmem:[%s153 + $0xe0] sm:%s145] %v266
                %v268 = vld [vmem:[%s152 + $0x164] sm:%s145]
                %269 = vst [vmem:[%s153 + $0xe4] sm:%s145] %v268
                %v270 = vld [vmem:[%s152 + $0x168] sm:%s145]
                %271 = vst [vmem:[%s153 + $0xe8] sm:%s145] %v270
                %v272 = vld [vmem:[%s152 + $0x16c] sm:%s145]
                %273 = vst [vmem:[%s153 + $0xec] sm:%s145] %v272
                %v274 = vld [vmem:[%s152 + $0x170] sm:%s145]
                %275 = vst [vmem:[%s153 + $0xf0] sm:%s145] %v274
                %v276 = vld [vmem:[%s152 + $0x174] sm:%s145]
                %277 = vst [vmem:[%s153 + $0xf4] sm:%s145] %v276
                %v278 = vld [vmem:[%s152 + $0x178] sm:%s145]
                %279 = vst [vmem:[%s153 + $0xf8] sm:%s145] %v278
                %v280 = vld [vmem:[%s152 + $0x17c] sm:%s145]
                %281 = vst [vmem:[%s153 + $0xfc] sm:%s145] %v280
                %v282 = vld [vmem:[%s152 + $0x200] sm:%s145]
                %283 = vst [vmem:[%s153 + $0x100] sm:%s145] %v282
                %v284 = vld [vmem:[%s152 + $0x204] sm:%s145]
                %285 = vst [vmem:[%s153 + $0x104] sm:%s145] %v284
                %v286 = vld [vmem:[%s152 + $0x208] sm:%s145]
                %287 = vst [vmem:[%s153 + $0x108] sm:%s145] %v286
                %v288 = vld [vmem:[%s152 + $0x20c] sm:%s145]
                %289 = vst [vmem:[%s153 + $0x10c] sm:%s145] %v288
                %v290 = vld [vmem:[%s152 + $0x210] sm:%s145]
                %291 = vst [vmem:[%s153 + $0x110] sm:%s145] %v290
                %v292 = vld [vmem:[%s152 + $0x214] sm:%s145]
                %293 = vst [vmem:[%s153 + $0x114] sm:%s145] %v292
                %v294 = vld [vmem:[%s152 + $0x218] sm:%s145]
                %295 = vst [vmem:[%s153 + $0x118] sm:%s145] %v294
                %v296 = vld [vmem:[%s152 + $0x21c] sm:%s145]
                %297 = vst [vmem:[%s153 + $0x11c] sm:%s145] %v296
                %v298 = vld [vmem:[%s152 + $0x220] sm:%s145]
                %299 = vst [vmem:[%s153 + $0x120] sm:%s145] %v298
                %v300 = vld [vmem:[%s152 + $0x224] sm:%s145]
                %301 = vst [vmem:[%s153 + $0x124] sm:%s145] %v300
                %v302 = vld [vmem:[%s152 + $0x228] sm:%s145]
                %303 = vst [vmem:[%s153 + $0x128] sm:%s145] %v302
                %v304 = vld [vmem:[%s152 + $0x22c] sm:%s145]
                %305 = vst [vmem:[%s153 + $0x12c] sm:%s145] %v304
                %v306 = vld [vmem:[%s152 + $0x230] sm:%s145]
                %307 = vst [vmem:[%s153 + $0x130] sm:%s145] %v306
                %v308 = vld [vmem:[%s152 + $0x234] sm:%s145]
                %309 = vst [vmem:[%s153 + $0x134] sm:%s145] %v308
                %v310 = vld [vmem:[%s152 + $0x238] sm:%s145]
                %311 = vst [vmem:[%s153 + $0x138] sm:%s145] %v310
                %v312 = vld [vmem:[%s152 + $0x23c] sm:%s145]
                %313 = vst [vmem:[%s153 + $0x13c] sm:%s145] %v312
                %v314 = vld [vmem:[%s152 + $0x240] sm:%s145]
                %315 = vst [vmem:[%s153 + $0x140] sm:%s145] %v314
                %v316 = vld [vmem:[%s152 + $0x244] sm:%s145]
                %317 = vst [vmem:[%s153 + $0x144] sm:%s145] %v316
                %v318 = vld [vmem:[%s152 + $0x248] sm:%s145]
                %319 = vst [vmem:[%s153 + $0x148] sm:%s145] %v318
                %v320 = vld [vmem:[%s152 + $0x24c] sm:%s145]
                %321 = vst [vmem:[%s153 + $0x14c] sm:%s145] %v320
                %v322 = vld [vmem:[%s152 + $0x250] sm:%s145]
                %323 = vst [vmem:[%s153 + $0x150] sm:%s145] %v322
                %v324 = vld [vmem:[%s152 + $0x254] sm:%s145]
                %325 = vst [vmem:[%s153 + $0x154] sm:%s145] %v324
                %v326 = vld [vmem:[%s152 + $0x258] sm:%s145]
                %327 = vst [vmem:[%s153 + $0x158] sm:%s145] %v326
                %v328 = vld [vmem:[%s152 + $0x25c] sm:%s145]
                %329 = vst [vmem:[%s153 + $0x15c] sm:%s145] %v328
                %v330 = vld [vmem:[%s152 + $0x260] sm:%s145]
                %331 = vst [vmem:[%s153 + $0x160] sm:%s145] %v330
                %v332 = vld [vmem:[%s152 + $0x264] sm:%s145]
                %333 = vst [vmem:[%s153 + $0x164] sm:%s145] %v332
                %v334 = vld [vmem:[%s152 + $0x268] sm:%s145]
                %335 = vst [vmem:[%s153 + $0x168] sm:%s145] %v334
                %v336 = vld [vmem:[%s152 + $0x26c] sm:%s145]
                %337 = vst [vmem:[%s153 + $0x16c] sm:%s145] %v336
                %v338 = vld [vmem:[%s152 + $0x270] sm:%s145]
                %339 = vst [vmem:[%s153 + $0x170] sm:%s145] %v338
                %v340 = vld [vmem:[%s152 + $0x274] sm:%s145]
                %341 = vst [vmem:[%s153 + $0x174] sm:%s145] %v340
                %v342 = vld [vmem:[%s152 + $0x278] sm:%s145]
                %343 = vst [vmem:[%s153 + $0x178] sm:%s145] %v342
                %v344 = vld [vmem:[%s152 + $0x27c] sm:%s145]
                %345 = vst [vmem:[%s153 + $0x17c] sm:%s145] %v344
                %v346 = vld [vmem:[%s152 + $0x300] sm:%s145]
                %347 = vst [vmem:[%s153 + $0x180] sm:%s145] %v346
                %v348 = vld [vmem:[%s152 + $0x304] sm:%s145]
                %349 = vst [vmem:[%s153 + $0x184] sm:%s145] %v348
                %v350 = vld [vmem:[%s152 + $0x308] sm:%s145]
                %351 = vst [vmem:[%s153 + $0x188] sm:%s145] %v350
                %v352 = vld [vmem:[%s152 + $0x30c] sm:%s145]
                %353 = vst [vmem:[%s153 + $0x18c] sm:%s145] %v352
                %v354 = vld [vmem:[%s152 + $0x310] sm:%s145]
                %355 = vst [vmem:[%s153 + $0x190] sm:%s145] %v354
                %v356 = vld [vmem:[%s152 + $0x314] sm:%s145]
                %357 = vst [vmem:[%s153 + $0x194] sm:%s145] %v356
                %v358 = vld [vmem:[%s152 + $0x318] sm:%s145]
                %359 = vst [vmem:[%s153 + $0x198] sm:%s145] %v358
                %v360 = vld [vmem:[%s152 + $0x31c] sm:%s145]
                %361 = vst [vmem:[%s153 + $0x19c] sm:%s145] %v360
                %v362 = vld [vmem:[%s152 + $0x320] sm:%s145]
                %363 = vst [vmem:[%s153 + $0x1a0] sm:%s145] %v362
                %v364 = vld [vmem:[%s152 + $0x324] sm:%s145]
                %365 = vst [vmem:[%s153 + $0x1a4] sm:%s145] %v364
                %v366 = vld [vmem:[%s152 + $0x328] sm:%s145]
                %367 = vst [vmem:[%s153 + $0x1a8] sm:%s145] %v366
                %v368 = vld [vmem:[%s152 + $0x32c] sm:%s145]
                %369 = vst [vmem:[%s153 + $0x1ac] sm:%s145] %v368
                %v370 = vld [vmem:[%s152 + $0x330] sm:%s145]
                %371 = vst [vmem:[%s153 + $0x1b0] sm:%s145] %v370
                %v372 = vld [vmem:[%s152 + $0x334] sm:%s145]
                %373 = vst [vmem:[%s153 + $0x1b4] sm:%s145] %v372
                %v374 = vld [vmem:[%s152 + $0x338] sm:%s145]
                %375 = vst [vmem:[%s153 + $0x1b8] sm:%s145] %v374
                %v376 = vld [vmem:[%s152 + $0x33c] sm:%s145]
                %377 = vst [vmem:[%s153 + $0x1bc] sm:%s145] %v376
                %v378 = vld [vmem:[%s152 + $0x340] sm:%s145]
                %379 = vst [vmem:[%s153 + $0x1c0] sm:%s145] %v378
                %v380 = vld [vmem:[%s152 + $0x344] sm:%s145]
                %381 = vst [vmem:[%s153 + $0x1c4] sm:%s145] %v380
                %v382 = vld [vmem:[%s152 + $0x348] sm:%s145]
                %383 = vst [vmem:[%s153 + $0x1c8] sm:%s145] %v382
                %v384 = vld [vmem:[%s152 + $0x34c] sm:%s145]
                %385 = vst [vmem:[%s153 + $0x1cc] sm:%s145] %v384
                %v386 = vld [vmem:[%s152 + $0x350] sm:%s145]
                %387 = vst [vmem:[%s153 + $0x1d0] sm:%s145] %v386
                %v388 = vld [vmem:[%s152 + $0x354] sm:%s145]
                %389 = vst [vmem:[%s153 + $0x1d4] sm:%s145] %v388
                %v390 = vld [vmem:[%s152 + $0x358] sm:%s145]
                %391 = vst [vmem:[%s153 + $0x1d8] sm:%s145] %v390
                %v392 = vld [vmem:[%s152 + $0x35c] sm:%s145]
                %393 = vst [vmem:[%s153 + $0x1dc] sm:%s145] %v392
                %v394 = vld [vmem:[%s152 + $0x360] sm:%s145]
                %395 = vst [vmem:[%s153 + $0x1e0] sm:%s145] %v394
                %v396 = vld [vmem:[%s152 + $0x364] sm:%s145]
                %397 = vst [vmem:[%s153 + $0x1e4] sm:%s145] %v396
                %v398 = vld [vmem:[%s152 + $0x368] sm:%s145]
                %399 = vst [vmem:[%s153 + $0x1e8] sm:%s145] %v398
                %v400 = vld [vmem:[%s152 + $0x36c] sm:%s145]
                %401 = vst [vmem:[%s153 + $0x1ec] sm:%s145] %v400
                %v402 = vld [vmem:[%s152 + $0x370] sm:%s145]
                %403 = vst [vmem:[%s153 + $0x1f0] sm:%s145] %v402
                %v404 = vld [vmem:[%s152 + $0x374] sm:%s145]
                %405 = vst [vmem:[%s153 + $0x1f4] sm:%s145] %v404
                %v406 = vld [vmem:[%s152 + $0x378] sm:%s145]
                %407 = vst [vmem:[%s153 + $0x1f8] sm:%s145] %v406
                %v408 = vld [vmem:[%s152 + $0x37c] sm:%s145]
                %409 = vst [vmem:[%s153 + $0x1fc] sm:%s145] %v408
              $region45: #{lenet5_forward.3} parent=39 // loop_footer
                %s151 = sadd.s32 1, %s147
              $region46: #{lenet5_forward.3} parent=39 // loop_footer_branch
                %146 = sbr.rel target = $region42
              $region47: #{lenet5_forward.3} parent=39 // loop_exit
                _
            $region40: #{lenet5_forward.3} parent=31 // pred_fallthru
              _
          $region32: #{lenet5_forward.3} parent=27 // pred_fallthru
            _
          %686 = vnop
        $region28: #{lenet5_forward.3} parent=23 // pred_fallthru
          _
      $region24: #{lenet5_forward.3} parent=5 // pred_fallthru
        _
      %p687 = scmp.le.s32.totalorder 1, %s9
      %p688 = scmp.lt.s32.totalorder %s9, 3
      %p689 = pnand %p687, %p688
      %p690 = pneg %p689
      // Predicated region
      $region66: #{lenet5_forward.3} parent=5 // pred_check
        _
      $region67: #{lenet5_forward.3} parent=5 // pred_check_branch
        %692 = sbr.rel (%p689) target = $region69
      $region68: #{lenet5_forward.3} parent=5 // pred_region
        %s693 = ssub.s32 %s9, 1
        %s694 = sand.u32 %s22, 1
        %s695 = sand.u32 %s22, 1
        %s696 = smul.addr %s695, 512
        %s697 = scalar_lea.vmem [#allocation2], %s696
        // Predicated region
        $region70: #{lenet5_forward.3} parent=68 // pred_check
          %p698 = pneg %p35
        $region71: #{lenet5_forward.3} parent=68 // pred_check_branch
          %700 = sbr.rel (%p698) target = $region73
        $region72: #{lenet5_forward.3} parent=68 // pred_region
          _
        $region73: #{lenet5_forward.3} parent=68 // pred_fallthru
          _
        %s701 = sand.u32 %s22, 1
        %s702 = sand.u32 %s22, 1
        %s703 = smul.addr %s702, 512
        %s704 = scalar_lea.vmem [#allocation2], %s703
        %p705 = pneg %p35
        %p706 = pneg %p32
        %p707 = pneg %p56
        %p708 = pneg %p53
        %p709 = pneg %p77
        %p710 = pneg %p74
        %p711 = pneg %p103
        %p712 = pneg %p100
        %s713 = smul.u32 32, %s14
        %p714 = scmp.lt.s32.totalorder %s713, 63
        %s715 = scalar_select %p714, %s713, 63
        %s716 = smul.addr %s715, 8
        %s717 = scalar_lea.vmem %s3, %s716
        %s718 = smul.u32 32, %s14
        %s719 = smul.u32 32, %s14
        %p720 = scmp.lt.s32.totalorder %s719, 63
        %s721 = scalar_select %p720, %s719, 63
        %s722 = smul.addr %s721, 8
        %s723 = scalar_lea.vmem %s3, %s722
        %s724 = smul.u32 32, %s14
        %v725 = vld [vmem:[%s2] sm:$0x1]
        %v726 = vld [vmem:[%s697] sm:$0xf]
        %v727 = vld [vmem:[%s697 + $0x4] sm:$0xf]
        %v728 = vld [vmem:[%s697 + $0x8] sm:$0xf]
        %v729 = vld [vmem:[%s697 + $0xc] sm:$0xf]
        %v730 = vld [vmem:[%s697 + $0x10] sm:$0xf]
        %v731 = vld [vmem:[%s697 + $0x14] sm:$0xf]
        %v732 = vld [vmem:[%s697 + $0x18] sm:$0xf]
        %v733 = vld [vmem:[%s697 + $0x1c] sm:$0xf]
        %v734 = vld [vmem:[%s697 + $0x20] sm:$0xf]
        %v735 = vld [vmem:[%s697 + $0x24] sm:$0xf]
        %v736 = vld [vmem:[%s697 + $0x28] sm:$0xf]
        %v737 = vld [vmem:[%s697 + $0x2c] sm:$0xf]
        %v738 = vld [vmem:[%s697 + $0x30] sm:$0xf]
        %v739 = vld [vmem:[%s697 + $0x34] sm:$0xf]
        %v740 = vld [vmem:[%s697 + $0x38] sm:$0xf]
        %v741 = vld [vmem:[%s697 + $0x3c] sm:$0xf]
        %v742 = vld [vmem:[%s697 + $0x40] sm:$0xf]
        %v743 = vld [vmem:[%s697 + $0x44] sm:$0xf]
        %v744 = vld [vmem:[%s697 + $0x48] sm:$0xf]
        %v745 = vld [vmem:[%s697 + $0x4c] sm:$0xf]
        %v746 = vld [vmem:[%s697 + $0x50] sm:$0xf]
        %v747 = vld [vmem:[%s697 + $0x54] sm:$0xf]
        %v748 = vld [vmem:[%s697 + $0x58] sm:$0xf]
        %v749 = vld [vmem:[%s697 + $0x5c] sm:$0xf]
        %v750 = vld [vmem:[%s697 + $0x60] sm:$0xf]
        %v751 = vld [vmem:[%s697 + $0x64] sm:$0xf]
        %v752 = vld [vmem:[%s697 + $0x68] sm:$0xf]
        %v753 = vld [vmem:[%s697 + $0x6c] sm:$0xf]
        %v754 = vld [vmem:[%s697 + $0x70] sm:$0xf]
        %v755 = vld [vmem:[%s697 + $0x74] sm:$0xf]
        %v756 = vld [vmem:[%s697 + $0x78] sm:$0xf]
        %v757 = vld [vmem:[%s697 + $0x7c] sm:$0xf]
        %v758 = vld [vmem:[%s1] sm:$0xf]
        %v759 = vld [vmem:[%s1 + $0x4] sm:$0xf]
        %v760 = vld [vmem:[%s1 + $0x8] sm:$0xf]
        %v761 = vld [vmem:[%s1 + $0xc] sm:$0xf]
        %v762 = vld [vmem:[%s1 + $0x10] sm:$0xf]
        %v763 = vld [vmem:[%s1 + $0x14] sm:$0xf]
        %v764 = vld [vmem:[%s1 + $0x18] sm:$0xf]
        %v765 = vld [vmem:[%s1 + $0x1c] sm:$0xf]
        %v766 = vld [vmem:[%s1 + $0x20] sm:$0xf]
        %v767 = vld [vmem:[%s1 + $0x24] sm:$0xf]
        %v768 = vld [vmem:[%s1 + $0x28] sm:$0xf]
        %v769 = vld [vmem:[%s1 + $0x2c] sm:$0xf]
        %v770 = vld [vmem:[%s1 + $0x30] sm:$0xf]
        %v771 = vld [vmem:[%s1 + $0x34] sm:$0xf]
        %v772 = vld [vmem:[%s1 + $0x38] sm:$0xf]
        %v773 = vld [vmem:[%s1 + $0x3c] sm:$0xf]
        %v775 = vperm.slane %v725, 0
        %v809 = vunpack.c.l.b16 %v726
        %v810 = vunpack.c.l.b16 %v727
        %v811 = vunpack.c.l.b16 %v728
        %v812 = vunpack.c.l.b16 %v729
        %v813 = vunpack.c.l.b16 %v730
        %v814 = vunpack.c.l.b16 %v731
        %v815 = vunpack.c.l.b16 %v732
        %v816 = vunpack.c.l.b16 %v733
        %v817 = vunpack.c.l.b16 %v734
        %v818 = vunpack.c.l.b16 %v735
        %v819 = vunpack.c.l.b16 %v736
        %v820 = vunpack.c.l.b16 %v737
        %v821 = vunpack.c.l.b16 %v738
        %v822 = vunpack.c.l.b16 %v739
        %v823 = vunpack.c.l.b16 %v740
        %v824 = vunpack.c.l.b16 %v741
        %v825 = vunpack.c.l.b16 %v742
        %v826 = vunpack.c.l.b16 %v743
        %v827 = vunpack.c.l.b16 %v744
        %v828 = vunpack.c.l.b16 %v745
        %v829 = vunpack.c.l.b16 %v746
        %v830 = vunpack.c.l.b16 %v747
        %v831 = vunpack.c.l.b16 %v748
        %v832 = vunpack.c.l.b16 %v749
        %v833 = vunpack.c.l.b16 %v750
        %v834 = vunpack.c.l.b16 %v751
        %v835 = vunpack.c.l.b16 %v752
        %v836 = vunpack.c.l.b16 %v753
        %v837 = vunpack.c.l.b16 %v754
        %v838 = vunpack.c.l.b16 %v755
        %v839 = vunpack.c.l.b16 %v756
        %v840 = vunpack.c.l.b16 %v757
        %v841 = vpack.c.b16 %v810, %v809
        %v842 = vpack.c.b16 %v812, %v811
        %v843 = vpack.c.b16 %v814, %v813
        %v844 = vpack.c.b16 %v816, %v815
        %v845 = vpack.c.b16 %v818, %v817
        %v846 = vpack.c.b16 %v820, %v819
        %v847 = vpack.c.b16 %v822, %v821
        %v848 = vpack.c.b16 %v824, %v823
        %v849 = vpack.c.b16 %v826, %v825
        %v850 = vpack.c.b16 %v828, %v827
        %v851 = vpack.c.b16 %v830, %v829
        %v852 = vpack.c.b16 %v832, %v831
        %v853 = vpack.c.b16 %v834, %v833
        %v854 = vpack.c.b16 %v836, %v835
        %v855 = vpack.c.b16 %v838, %v837
        %v856 = vpack.c.b16 %v840, %v839
        %v889 = vunpack.c.l.b16 %v758
        %v890 = vunpack.c.l.b16 %v759
        %v891 = vunpack.c.l.b16 %v760
        %v892 = vunpack.c.l.b16 %v761
        %v893 = vunpack.c.l.b16 %v762
        %v894 = vunpack.c.l.b16 %v763
        %v895 = vunpack.c.l.b16 %v764
        %v896 = vunpack.c.l.b16 %v765
        %v897 = vunpack.c.l.b16 %v766
        %v898 = vunpack.c.l.b16 %v767
        %v899 = vunpack.c.l.b16 %v768
        %v900 = vunpack.c.l.b16 %v769
        %v901 = vunpack.c.l.b16 %v770
        %v902 = vunpack.c.l.b16 %v771
        %v903 = vunpack.c.l.b16 %v772
        %v904 = vunpack.c.l.b16 %v773
        %v905 = vpack.c.b16 %v890, %v889
        %v906 = vpack.c.b16 %v892, %v891
        %v907 = vpack.c.b16 %v894, %v893
        %v908 = vpack.c.b16 %v896, %v895
        %v909 = vpack.c.b16 %v898, %v897
        %v910 = vpack.c.b16 %v900, %v899
        %v911 = vpack.c.b16 %v902, %v901
        %v912 = vpack.c.b16 %v904, %v903
        %921 = vmatpush.bf16.msra.mxu0 %v912
        %922 = vmatpush.bf16.msra.mxu0 %v911
        %923 = vmatpush.bf16.msra.mxu0 %v910
        %924 = vmatpush.bf16.msra.mxu0 %v909
        %925 = vmatpush.bf16.msra.mxu0 %v908
        %926 = vmatpush.bf16.msra.mxu0 %v907
        %927 = vmatpush.bf16.msra.mxu0 %v906
        %928 = vmatpush.bf16.msra.mxu0 %v905
        %929 = vmatmul.bf16.gmra.mxu0 %v841
        %v930 = vpop.f32.mrf.mxu0
        %v931 = vadd.f32 %v775, %v930
        %v932 = vpop.f32.mrf.mxu0
        %v933 = vadd.f32 %v775, %v932
        %934 = vmatmul.bf16.gmra.mxu0 %v842
        %v935 = vpop.f32.mrf.mxu0
        %v936 = vadd.f32 %v775, %v935
        %v937 = vpop.f32.mrf.mxu0
        %v938 = vadd.f32 %v775, %v937
        %939 = vmatmul.bf16.gmra.mxu0 %v843
        %v940 = vpop.f32.mrf.mxu0
        %v941 = vadd.f32 %v775, %v940
        %v942 = vpop.f32.mrf.mxu0
        %v943 = vadd.f32 %v775, %v942
        %944 = vmatmul.bf16.gmra.mxu0 %v844
        %v945 = vpop.f32.mrf.mxu0
        %v946 = vadd.f32 %v775, %v945
        %v947 = vpop.f32.mrf.mxu0
        %v948 = vadd.f32 %v775, %v947
        %949 = vmatmul.bf16.gmra.mxu0 %v845
        %v950 = vpop.f32.mrf.mxu0
        %v951 = vadd.f32 %v775, %v950
        %v952 = vpop.f32.mrf.mxu0
        %v953 = vadd.f32 %v775, %v952
        %954 = vmatmul.bf16.gmra.mxu0 %v846
        %v955 = vpop.f32.mrf.mxu0
        %v956 = vadd.f32 %v775, %v955
        %v957 = vpop.f32.mrf.mxu0
        %v958 = vadd.f32 %v775, %v957
        %959 = vmatmul.bf16.gmra.mxu0 %v847
        %v960 = vpop.f32.mrf.mxu0
        %v961 = vadd.f32 %v775, %v960
        %v962 = vpop.f32.mrf.mxu0
        %v963 = vadd.f32 %v775, %v962
        %964 = vmatmul.bf16.gmra.mxu0 %v848
        %v965 = vpop.f32.mrf.mxu0
        %v966 = vadd.f32 %v775, %v965
        %v967 = vpop.f32.mrf.mxu0
        %v968 = vadd.f32 %v775, %v967
        %969 = vmatmul.bf16.gmra.mxu0 %v849
        %v970 = vpop.f32.mrf.mxu0
        %v971 = vadd.f32 %v775, %v970
        %v972 = vpop.f32.mrf.mxu0
        %v973 = vadd.f32 %v775, %v972
        %974 = vmatmul.bf16.gmra.mxu0 %v850
        %v975 = vpop.f32.mrf.mxu0
        %v976 = vadd.f32 %v775, %v975
        %v977 = vpop.f32.mrf.mxu0
        %v978 = vadd.f32 %v775, %v977
        %979 = vmatmul.bf16.gmra.mxu0 %v851
        %v980 = vpop.f32.mrf.mxu0
        %v981 = vadd.f32 %v775, %v980
        %v982 = vpop.f32.mrf.mxu0
        %v983 = vadd.f32 %v775, %v982
        %984 = vmatmul.bf16.gmra.mxu0 %v852
        %v985 = vpop.f32.mrf.mxu0
        %v986 = vadd.f32 %v775, %v985
        %v987 = vpop.f32.mrf.mxu0
        %v988 = vadd.f32 %v775, %v987
        %989 = vmatmul.bf16.gmra.mxu0 %v853
        %v990 = vpop.f32.mrf.mxu0
        %v991 = vadd.f32 %v775, %v990
        %v992 = vpop.f32.mrf.mxu0
        %v993 = vadd.f32 %v775, %v992
        %994 = vmatmul.bf16.gmra.mxu0 %v854
        %v995 = vpop.f32.mrf.mxu0
        %v996 = vadd.f32 %v775, %v995
        %v997 = vpop.f32.mrf.mxu0
        %v998 = vadd.f32 %v775, %v997
        %999 = vmatmul.bf16.gmra.mxu0 %v855
        %v1000 = vpop.f32.mrf.mxu0
        %v1001 = vadd.f32 %v775, %v1000
        %v1002 = vpop.f32.mrf.mxu0
        %v1003 = vadd.f32 %v775, %v1002
        %1004 = vmatmul.bf16.gmra.mxu0 %v856
        %v1005 = vpop.f32.mrf.mxu0
        %v1006 = vadd.f32 %v775, %v1005
        %v1007 = vpop.f32.mrf.mxu0
        %v1008 = vadd.f32 %v775, %v1007
        %1009 = vdwg.mxu0
        %v1010 = vtanh.pop %v931
        %v1011 = vtanh.pop %v933
        %v1012 = vtanh.pop %v936
        %v1013 = vtanh.pop %v938
        %v1014 = vtanh.pop %v941
        %v1015 = vtanh.pop %v943
        %v1016 = vtanh.pop %v946
        %v1017 = vtanh.pop %v948
        %v1018 = vtanh.pop %v951
        %v1019 = vtanh.pop %v953
        %v1020 = vtanh.pop %v956
        %v1021 = vtanh.pop %v958
        %v1022 = vtanh.pop %v961
        %v1023 = vtanh.pop %v963
        %v1024 = vtanh.pop %v966
        %v1025 = vtanh.pop %v968
        %v1026 = vtanh.pop %v971
        %v1027 = vtanh.pop %v973
        %v1028 = vtanh.pop %v976
        %v1029 = vtanh.pop %v978
        %v1030 = vtanh.pop %v981
        %v1031 = vtanh.pop %v983
        %v1032 = vtanh.pop %v986
        %v1033 = vtanh.pop %v988
        %v1034 = vtanh.pop %v991
        %v1035 = vtanh.pop %v993
        %v1036 = vtanh.pop %v996
        %v1037 = vtanh.pop %v998
        %v1038 = vtanh.pop %v1001
        %v1039 = vtanh.pop %v1003
        %v1040 = vtanh.pop %v1006
        %v1041 = vtanh.pop %v1008
        %v1042 = vadd.f32 %v1010, 0.0
        %v1043 = vadd.f32 %v1011, 0.0
        %v1044 = vadd.f32 %v1012, 0.0
        %v1045 = vadd.f32 %v1013, 0.0
        %v1046 = vadd.f32 %v1014, 0.0
        %v1047 = vadd.f32 %v1015, 0.0
        %v1048 = vadd.f32 %v1016, 0.0
        %v1049 = vadd.f32 %v1017, 0.0
        %v1050 = vadd.f32 %v1018, 0.0
        %v1051 = vadd.f32 %v1019, 0.0
        %v1052 = vadd.f32 %v1020, 0.0
        %v1053 = vadd.f32 %v1021, 0.0
        %v1054 = vadd.f32 %v1022, 0.0
        %v1055 = vadd.f32 %v1023, 0.0
        %v1056 = vadd.f32 %v1024, 0.0
        %v1057 = vadd.f32 %v1025, 0.0
        %v1058 = vadd.f32 %v1026, 0.0
        %v1059 = vadd.f32 %v1027, 0.0
        %v1060 = vadd.f32 %v1028, 0.0
        %v1061 = vadd.f32 %v1029, 0.0
        %v1062 = vadd.f32 %v1030, 0.0
        %v1063 = vadd.f32 %v1031, 0.0
        %v1064 = vadd.f32 %v1032, 0.0
        %v1065 = vadd.f32 %v1033, 0.0
        %v1066 = vadd.f32 %v1034, 0.0
        %v1067 = vadd.f32 %v1035, 0.0
        %v1068 = vadd.f32 %v1036, 0.0
        %v1069 = vadd.f32 %v1037, 0.0
        %v1070 = vadd.f32 %v1038, 0.0
        %v1071 = vadd.f32 %v1039, 0.0
        %v1072 = vadd.f32 %v1040, 0.0
        %v1073 = vadd.f32 %v1041, 0.0
        %s1074 = scalar_lea.vmem %s697, 128 [#allocation2]
        %v1075 = vld [vmem:[%s1074] sm:$0xf]
        %v1076 = vld [vmem:[%s1074 + $0x4] sm:$0xf]
        %v1077 = vld [vmem:[%s1074 + $0x8] sm:$0xf]
        %v1078 = vld [vmem:[%s1074 + $0xc] sm:$0xf]
        %v1079 = vld [vmem:[%s1074 + $0x10] sm:$0xf]
        %v1080 = vld [vmem:[%s1074 + $0x14] sm:$0xf]
        %v1081 = vld [vmem:[%s1074 + $0x18] sm:$0xf]
        %v1082 = vld [vmem:[%s1074 + $0x1c] sm:$0xf]
        %v1083 = vld [vmem:[%s1074 + $0x20] sm:$0xf]
        %v1084 = vld [vmem:[%s1074 + $0x24] sm:$0xf]
        %v1085 = vld [vmem:[%s1074 + $0x28] sm:$0xf]
        %v1086 = vld [vmem:[%s1074 + $0x2c] sm:$0xf]
        %v1087 = vld [vmem:[%s1074 + $0x30] sm:$0xf]
        %v1088 = vld [vmem:[%s1074 + $0x34] sm:$0xf]
        %v1089 = vld [vmem:[%s1074 + $0x38] sm:$0xf]
        %v1090 = vld [vmem:[%s1074 + $0x3c] sm:$0xf]
        %v1091 = vld [vmem:[%s1074 + $0x40] sm:$0xf]
        %v1092 = vld [vmem:[%s1074 + $0x44] sm:$0xf]
        %v1093 = vld [vmem:[%s1074 + $0x48] sm:$0xf]
        %v1094 = vld [vmem:[%s1074 + $0x4c] sm:$0xf]
        %v1095 = vld [vmem:[%s1074 + $0x50] sm:$0xf]
        %v1096 = vld [vmem:[%s1074 + $0x54] sm:$0xf]
        %v1097 = vld [vmem:[%s1074 + $0x58] sm:$0xf]
        %v1098 = vld [vmem:[%s1074 + $0x5c] sm:$0xf]
        %v1099 = vld [vmem:[%s1074 + $0x60] sm:$0xf]
        %v1100 = vld [vmem:[%s1074 + $0x64] sm:$0xf]
        %v1101 = vld [vmem:[%s1074 + $0x68] sm:$0xf]
        %v1102 = vld [vmem:[%s1074 + $0x6c] sm:$0xf]
        %v1103 = vld [vmem:[%s1074 + $0x70] sm:$0xf]
        %v1104 = vld [vmem:[%s1074 + $0x74] sm:$0xf]
        %v1105 = vld [vmem:[%s1074 + $0x78] sm:$0xf]
        %v1106 = vld [vmem:[%s1074 + $0x7c] sm:$0xf]
        %v1139 = vunpack.c.l.b16 %v1075
        %v1140 = vunpack.c.l.b16 %v1076
        %v1141 = vunpack.c.l.b16 %v1077
        %v1142 = vunpack.c.l.b16 %v1078
        %v1143 = vunpack.c.l.b16 %v1079
        %v1144 = vunpack.c.l.b16 %v1080
        %v1145 = vunpack.c.l.b16 %v1081
        %v1146 = vunpack.c.l.b16 %v1082
        %v1147 = vunpack.c.l.b16 %v1083
        %v1148 = vunpack.c.l.b16 %v1084
        %v1149 = vunpack.c.l.b16 %v1085
        %v1150 = vunpack.c.l.b16 %v1086
        %v1151 = vunpack.c.l.b16 %v1087
        %v1152 = vunpack.c.l.b16 %v1088
        %v1153 = vunpack.c.l.b16 %v1089
        %v1154 = vunpack.c.l.b16 %v1090
        %v1155 = vunpack.c.l.b16 %v1091
        %v1156 = vunpack.c.l.b16 %v1092
        %v1157 = vunpack.c.l.b16 %v1093
        %v1158 = vunpack.c.l.b16 %v1094
        %v1159 = vunpack.c.l.b16 %v1095
        %v1160 = vunpack.c.l.b16 %v1096
        %v1161 = vunpack.c.l.b16 %v1097
        %v1162 = vunpack.c.l.b16 %v1098
        %v1163 = vunpack.c.l.b16 %v1099
        %v1164 = vunpack.c.l.b16 %v1100
        %v1165 = vunpack.c.l.b16 %v1101
        %v1166 = vunpack.c.l.b16 %v1102
        %v1167 = vunpack.c.l.b16 %v1103
        %v1168 = vunpack.c.l.b16 %v1104
        %v1169 = vunpack.c.l.b16 %v1105
        %v1170 = vunpack.c.l.b16 %v1106
        %v1171 = vpack.c.b16 %v1140, %v1139
        %v1172 = vpack.c.b16 %v1142, %v1141
        %v1173 = vpack.c.b16 %v1144, %v1143
        %v1174 = vpack.c.b16 %v1146, %v1145
        %v1175 = vpack.c.b16 %v1148, %v1147
        %v1176 = vpack.c.b16 %v1150, %v1149
        %v1177 = vpack.c.b16 %v1152, %v1151
        %v1178 = vpack.c.b16 %v1154, %v1153
        %v1179 = vpack.c.b16 %v1156, %v1155
        %v1180 = vpack.c.b16 %v1158, %v1157
        %v1181 = vpack.c.b16 %v1160, %v1159
        %v1182 = vpack.c.b16 %v1162, %v1161
        %v1183 = vpack.c.b16 %v1164, %v1163
        %v1184 = vpack.c.b16 %v1166, %v1165
        %v1185 = vpack.c.b16 %v1168, %v1167
        %v1186 = vpack.c.b16 %v1170, %v1169
        %1203 = vmatpush.bf16.msra.mxu0 %v912
        %1204 = vmatpush.bf16.msra.mxu0 %v911
        %1205 = vmatpush.bf16.msra.mxu0 %v910
        %1206 = vmatpush.bf16.msra.mxu0 %v909
        %1207 = vmatpush.bf16.msra.mxu0 %v908
        %1208 = vmatpush.bf16.msra.mxu0 %v907
        %1209 = vmatpush.bf16.msra.mxu0 %v906
        %1210 = vmatpush.bf16.msra.mxu0 %v905
        %1211 = vmatmul.bf16.gmra.mxu0 %v1171
        %v1212 = vpop.f32.mrf.mxu0
        %v1213 = vadd.f32 %v775, %v1212
        %v1214 = vpop.f32.mrf.mxu0
        %v1215 = vadd.f32 %v775, %v1214
        %1216 = vmatmul.bf16.gmra.mxu0 %v1172
        %v1217 = vpop.f32.mrf.mxu0
        %v1218 = vadd.f32 %v775, %v1217
        %v1219 = vpop.f32.mrf.mxu0
        %v1220 = vadd.f32 %v775, %v1219
        %1221 = vmatmul.bf16.gmra.mxu0 %v1173
        %v1222 = vpop.f32.mrf.mxu0
        %v1223 = vadd.f32 %v775, %v1222
        %v1224 = vpop.f32.mrf.mxu0
        %v1225 = vadd.f32 %v775, %v1224
        %1226 = vmatmul.bf16.gmra.mxu0 %v1174
        %v1227 = vpop.f32.mrf.mxu0
        %v1228 = vadd.f32 %v775, %v1227
        %v1229 = vpop.f32.mrf.mxu0
        %v1230 = vadd.f32 %v775, %v1229
        %1231 = vmatmul.bf16.gmra.mxu0 %v1175
        %v1232 = vpop.f32.mrf.mxu0
        %v1233 = vadd.f32 %v775, %v1232
        %v1234 = vpop.f32.mrf.mxu0
        %v1235 = vadd.f32 %v775, %v1234
        %1236 = vmatmul.bf16.gmra.mxu0 %v1176
        %v1237 = vpop.f32.mrf.mxu0
        %v1238 = vadd.f32 %v775, %v1237
        %v1239 = vpop.f32.mrf.mxu0
        %v1240 = vadd.f32 %v775, %v1239
        %1241 = vmatmul.bf16.gmra.mxu0 %v1177
        %v1242 = vpop.f32.mrf.mxu0
        %v1243 = vadd.f32 %v775, %v1242
        %v1244 = vpop.f32.mrf.mxu0
        %v1245 = vadd.f32 %v775, %v1244
        %1246 = vmatmul.bf16.gmra.mxu0 %v1178
        %v1247 = vpop.f32.mrf.mxu0
        %v1248 = vadd.f32 %v775, %v1247
        %v1249 = vpop.f32.mrf.mxu0
        %v1250 = vadd.f32 %v775, %v1249
        %1251 = vmatmul.bf16.gmra.mxu0 %v1179
        %v1252 = vpop.f32.mrf.mxu0
        %v1253 = vadd.f32 %v775, %v1252
        %v1254 = vpop.f32.mrf.mxu0
        %v1255 = vadd.f32 %v775, %v1254
        %1256 = vmatmul.bf16.gmra.mxu0 %v1180
        %v1257 = vpop.f32.mrf.mxu0
        %v1258 = vadd.f32 %v775, %v1257
        %v1259 = vpop.f32.mrf.mxu0
        %v1260 = vadd.f32 %v775, %v1259
        %1261 = vmatmul.bf16.gmra.mxu0 %v1181
        %v1262 = vpop.f32.mrf.mxu0
        %v1263 = vadd.f32 %v775, %v1262
        %v1264 = vpop.f32.mrf.mxu0
        %v1265 = vadd.f32 %v775, %v1264
        %1266 = vmatmul.bf16.gmra.mxu0 %v1182
        %v1267 = vpop.f32.mrf.mxu0
        %v1268 = vadd.f32 %v775, %v1267
        %v1269 = vpop.f32.mrf.mxu0
        %v1270 = vadd.f32 %v775, %v1269
        %1271 = vmatmul.bf16.gmra.mxu0 %v1183
        %v1272 = vpop.f32.mrf.mxu0
        %v1273 = vadd.f32 %v775, %v1272
        %v1274 = vpop.f32.mrf.mxu0
        %v1275 = vadd.f32 %v775, %v1274
        %1276 = vmatmul.bf16.gmra.mxu0 %v1184
        %v1277 = vpop.f32.mrf.mxu0
        %v1278 = vadd.f32 %v775, %v1277
        %v1279 = vpop.f32.mrf.mxu0
        %v1280 = vadd.f32 %v775, %v1279
        %1281 = vmatmul.bf16.gmra.mxu0 %v1185
        %v1282 = vpop.f32.mrf.mxu0
        %v1283 = vadd.f32 %v775, %v1282
        %v1284 = vpop.f32.mrf.mxu0
        %v1285 = vadd.f32 %v775, %v1284
        %1286 = vmatmul.bf16.gmra.mxu0 %v1186
        %v1287 = vpop.f32.mrf.mxu0
        %v1288 = vadd.f32 %v775, %v1287
        %v1289 = vpop.f32.mrf.mxu0
        %v1290 = vadd.f32 %v775, %v1289
        %1291 = vdwg.mxu0
        %v1292 = vtanh.pop %v1213
        %v1293 = vtanh.pop %v1215
        %v1294 = vtanh.pop %v1218
        %v1295 = vtanh.pop %v1220
        %v1296 = vtanh.pop %v1223
        %v1297 = vtanh.pop %v1225
        %v1298 = vtanh.pop %v1228
        %v1299 = vtanh.pop %v1230
        %v1300 = vtanh.pop %v1233
        %v1301 = vtanh.pop %v1235
        %v1302 = vtanh.pop %v1238
        %v1303 = vtanh.pop %v1240
        %v1304 = vtanh.pop %v1243
        %v1305 = vtanh.pop %v1245
        %v1306 = vtanh.pop %v1248
        %v1307 = vtanh.pop %v1250
        %v1308 = vtanh.pop %v1253
        %v1309 = vtanh.pop %v1255
        %v1310 = vtanh.pop %v1258
        %v1311 = vtanh.pop %v1260
        %v1312 = vtanh.pop %v1263
        %v1313 = vtanh.pop %v1265
        %v1314 = vtanh.pop %v1268
        %v1315 = vtanh.pop %v1270
        %v1316 = vtanh.pop %v1273
        %v1317 = vtanh.pop %v1275
        %v1318 = vtanh.pop %v1278
        %v1319 = vtanh.pop %v1280
        %v1320 = vtanh.pop %v1283
        %v1321 = vtanh.pop %v1285
        %v1322 = vtanh.pop %v1288
        %v1323 = vtanh.pop %v1290
        %v1324 = vadd.f32 %v1042, %v1292
        %v1325 = vadd.f32 %v1043, %v1293
        %v1326 = vadd.f32 %v1044, %v1294
        %v1327 = vadd.f32 %v1045, %v1295
        %v1328 = vadd.f32 %v1046, %v1296
        %v1329 = vadd.f32 %v1047, %v1297
        %v1330 = vadd.f32 %v1048, %v1298
        %v1331 = vadd.f32 %v1049, %v1299
        %v1332 = vadd.f32 %v1050, %v1300
        %v1333 = vadd.f32 %v1051, %v1301
        %v1334 = vadd.f32 %v1052, %v1302
        %v1335 = vadd.f32 %v1053, %v1303
        %v1336 = vadd.f32 %v1054, %v1304
        %v1337 = vadd.f32 %v1055, %v1305
        %v1338 = vadd.f32 %v1056, %v1306
        %v1339 = vadd.f32 %v1057, %v1307
        %v1340 = vadd.f32 %v1058, %v1308
        %v1341 = vadd.f32 %v1059, %v1309
        %v1342 = vadd.f32 %v1060, %v1310
        %v1343 = vadd.f32 %v1061, %v1311
        %v1344 = vadd.f32 %v1062, %v1312
        %v1345 = vadd.f32 %v1063, %v1313
        %v1346 = vadd.f32 %v1064, %v1314
        %v1347 = vadd.f32 %v1065, %v1315
        %v1348 = vadd.f32 %v1066, %v1316
        %v1349 = vadd.f32 %v1067, %v1317
        %v1350 = vadd.f32 %v1068, %v1318
        %v1351 = vadd.f32 %v1069, %v1319
        %v1352 = vadd.f32 %v1070, %v1320
        %v1353 = vadd.f32 %v1071, %v1321
        %v1354 = vadd.f32 %v1072, %v1322
        %v1355 = vadd.f32 %v1073, %v1323
        %s1356 = scalar_lea.vmem %s697, 256 [#allocation2]
        %v1357 = vld [vmem:[%s1356] sm:$0xf]
        %v1358 = vld [vmem:[%s1356 + $0x4] sm:$0xf]
        %v1359 = vld [vmem:[%s1356 + $0x8] sm:$0xf]
        %v1360 = vld [vmem:[%s1356 + $0xc] sm:$0xf]
        %v1361 = vld [vmem:[%s1356 + $0x10] sm:$0xf]
        %v1362 = vld [vmem:[%s1356 + $0x14] sm:$0xf]
        %v1363 = vld [vmem:[%s1356 + $0x18] sm:$0xf]
        %v1364 = vld [vmem:[%s1356 + $0x1c] sm:$0xf]
        %v1365 = vld [vmem:[%s1356 + $0x20] sm:$0xf]
        %v1366 = vld [vmem:[%s1356 + $0x24] sm:$0xf]
        %v1367 = vld [vmem:[%s1356 + $0x28] sm:$0xf]
        %v1368 = vld [vmem:[%s1356 + $0x2c] sm:$0xf]
        %v1369 = vld [vmem:[%s1356 + $0x30] sm:$0xf]
        %v1370 = vld [vmem:[%s1356 + $0x34] sm:$0xf]
        %v1371 = vld [vmem:[%s1356 + $0x38] sm:$0xf]
        %v1372 = vld [vmem:[%s1356 + $0x3c] sm:$0xf]
        %v1373 = vld [vmem:[%s1356 + $0x40] sm:$0xf]
        %v1374 = vld [vmem:[%s1356 + $0x44] sm:$0xf]
        %v1375 = vld [vmem:[%s1356 + $0x48] sm:$0xf]
        %v1376 = vld [vmem:[%s1356 + $0x4c] sm:$0xf]
        %v1377 = vld [vmem:[%s1356 + $0x50] sm:$0xf]
        %v1378 = vld [vmem:[%s1356 + $0x54] sm:$0xf]
        %v1379 = vld [vmem:[%s1356 + $0x58] sm:$0xf]
        %v1380 = vld [vmem:[%s1356 + $0x5c] sm:$0xf]
        %v1381 = vld [vmem:[%s1356 + $0x60] sm:$0xf]
        %v1382 = vld [vmem:[%s1356 + $0x64] sm:$0xf]
        %v1383 = vld [vmem:[%s1356 + $0x68] sm:$0xf]
        %v1384 = vld [vmem:[%s1356 + $0x6c] sm:$0xf]
        %v1385 = vld [vmem:[%s1356 + $0x70] sm:$0xf]
        %v1386 = vld [vmem:[%s1356 + $0x74] sm:$0xf]
        %v1387 = vld [vmem:[%s1356 + $0x78] sm:$0xf]
        %v1388 = vld [vmem:[%s1356 + $0x7c] sm:$0xf]
        %v1421 = vunpack.c.l.b16 %v1357
        %v1422 = vunpack.c.l.b16 %v1358
        %v1423 = vunpack.c.l.b16 %v1359
        %v1424 = vunpack.c.l.b16 %v1360
        %v1425 = vunpack.c.l.b16 %v1361
        %v1426 = vunpack.c.l.b16 %v1362
        %v1427 = vunpack.c.l.b16 %v1363
        %v1428 = vunpack.c.l.b16 %v1364
        %v1429 = vunpack.c.l.b16 %v1365
        %v1430 = vunpack.c.l.b16 %v1366
        %v1431 = vunpack.c.l.b16 %v1367
        %v1432 = vunpack.c.l.b16 %v1368
        %v1433 = vunpack.c.l.b16 %v1369
        %v1434 = vunpack.c.l.b16 %v1370
        %v1435 = vunpack.c.l.b16 %v1371
        %v1436 = vunpack.c.l.b16 %v1372
        %v1437 = vunpack.c.l.b16 %v1373
        %v1438 = vunpack.c.l.b16 %v1374
        %v1439 = vunpack.c.l.b16 %v1375
        %v1440 = vunpack.c.l.b16 %v1376
        %v1441 = vunpack.c.l.b16 %v1377
        %v1442 = vunpack.c.l.b16 %v1378
        %v1443 = vunpack.c.l.b16 %v1379
        %v1444 = vunpack.c.l.b16 %v1380
        %v1445 = vunpack.c.l.b16 %v1381
        %v1446 = vunpack.c.l.b16 %v1382
        %v1447 = vunpack.c.l.b16 %v1383
        %v1448 = vunpack.c.l.b16 %v1384
        %v1449 = vunpack.c.l.b16 %v1385
        %v1450 = vunpack.c.l.b16 %v1386
        %v1451 = vunpack.c.l.b16 %v1387
        %v1452 = vunpack.c.l.b16 %v1388
        %v1453 = vpack.c.b16 %v1422, %v1421
        %v1454 = vpack.c.b16 %v1424, %v1423
        %v1455 = vpack.c.b16 %v1426, %v1425
        %v1456 = vpack.c.b16 %v1428, %v1427
        %v1457 = vpack.c.b16 %v1430, %v1429
        %v1458 = vpack.c.b16 %v1432, %v1431
        %v1459 = vpack.c.b16 %v1434, %v1433
        %v1460 = vpack.c.b16 %v1436, %v1435
        %v1461 = vpack.c.b16 %v1438, %v1437
        %v1462 = vpack.c.b16 %v1440, %v1439
        %v1463 = vpack.c.b16 %v1442, %v1441
        %v1464 = vpack.c.b16 %v1444, %v1443
        %v1465 = vpack.c.b16 %v1446, %v1445
        %v1466 = vpack.c.b16 %v1448, %v1447
        %v1467 = vpack.c.b16 %v1450, %v1449
        %v1468 = vpack.c.b16 %v1452, %v1451
        %1485 = vmatpush.bf16.msra.mxu0 %v912
        %1486 = vmatpush.bf16.msra.mxu0 %v911
        %1487 = vmatpush.bf16.msra.mxu0 %v910
        %1488 = vmatpush.bf16.msra.mxu0 %v909
        %1489 = vmatpush.bf16.msra.mxu0 %v908
        %1490 = vmatpush.bf16.msra.mxu0 %v907
        %1491 = vmatpush.bf16.msra.mxu0 %v906
        %1492 = vmatpush.bf16.msra.mxu0 %v905
        %1493 = vmatmul.bf16.gmra.mxu0 %v1453
        %v1494 = vpop.f32.mrf.mxu0
        %v1495 = vadd.f32 %v775, %v1494
        %v1496 = vpop.f32.mrf.mxu0
        %v1497 = vadd.f32 %v775, %v1496
        %1498 = vmatmul.bf16.gmra.mxu0 %v1454
        %v1499 = vpop.f32.mrf.mxu0
        %v1500 = vadd.f32 %v775, %v1499
        %v1501 = vpop.f32.mrf.mxu0
        %v1502 = vadd.f32 %v775, %v1501
        %1503 = vmatmul.bf16.gmra.mxu0 %v1455
        %v1504 = vpop.f32.mrf.mxu0
        %v1505 = vadd.f32 %v775, %v1504
        %v1506 = vpop.f32.mrf.mxu0
        %v1507 = vadd.f32 %v775, %v1506
        %1508 = vmatmul.bf16.gmra.mxu0 %v1456
        %v1509 = vpop.f32.mrf.mxu0
        %v1510 = vadd.f32 %v775, %v1509
        %v1511 = vpop.f32.mrf.mxu0
        %v1512 = vadd.f32 %v775, %v1511
        %1513 = vmatmul.bf16.gmra.mxu0 %v1457
        %v1514 = vpop.f32.mrf.mxu0
        %v1515 = vadd.f32 %v775, %v1514
        %v1516 = vpop.f32.mrf.mxu0
        %v1517 = vadd.f32 %v775, %v1516
        %1518 = vmatmul.bf16.gmra.mxu0 %v1458
        %v1519 = vpop.f32.mrf.mxu0
        %v1520 = vadd.f32 %v775, %v1519
        %v1521 = vpop.f32.mrf.mxu0
        %v1522 = vadd.f32 %v775, %v1521
        %1523 = vmatmul.bf16.gmra.mxu0 %v1459
        %v1524 = vpop.f32.mrf.mxu0
        %v1525 = vadd.f32 %v775, %v1524
        %v1526 = vpop.f32.mrf.mxu0
        %v1527 = vadd.f32 %v775, %v1526
        %1528 = vmatmul.bf16.gmra.mxu0 %v1460
        %v1529 = vpop.f32.mrf.mxu0
        %v1530 = vadd.f32 %v775, %v1529
        %v1531 = vpop.f32.mrf.mxu0
        %v1532 = vadd.f32 %v775, %v1531
        %1533 = vmatmul.bf16.gmra.mxu0 %v1461
        %v1534 = vpop.f32.mrf.mxu0
        %v1535 = vadd.f32 %v775, %v1534
        %v1536 = vpop.f32.mrf.mxu0
        %v1537 = vadd.f32 %v775, %v1536
        %1538 = vmatmul.bf16.gmra.mxu0 %v1462
        %v1539 = vpop.f32.mrf.mxu0
        %v1540 = vadd.f32 %v775, %v1539
        %v1541 = vpop.f32.mrf.mxu0
        %v1542 = vadd.f32 %v775, %v1541
        %1543 = vmatmul.bf16.gmra.mxu0 %v1463
        %v1544 = vpop.f32.mrf.mxu0
        %v1545 = vadd.f32 %v775, %v1544
        %v1546 = vpop.f32.mrf.mxu0
        %v1547 = vadd.f32 %v775, %v1546
        %1548 = vmatmul.bf16.gmra.mxu0 %v1464
        %v1549 = vpop.f32.mrf.mxu0
        %v1550 = vadd.f32 %v775, %v1549
        %v1551 = vpop.f32.mrf.mxu0
        %v1552 = vadd.f32 %v775, %v1551
        %1553 = vmatmul.bf16.gmra.mxu0 %v1465
        %v1554 = vpop.f32.mrf.mxu0
        %v1555 = vadd.f32 %v775, %v1554
        %v1556 = vpop.f32.mrf.mxu0
        %v1557 = vadd.f32 %v775, %v1556
        %1558 = vmatmul.bf16.gmra.mxu0 %v1466
        %v1559 = vpop.f32.mrf.mxu0
        %v1560 = vadd.f32 %v775, %v1559
        %v1561 = vpop.f32.mrf.mxu0
        %v1562 = vadd.f32 %v775, %v1561
        %1563 = vmatmul.bf16.gmra.mxu0 %v1467
        %v1564 = vpop.f32.mrf.mxu0
        %v1565 = vadd.f32 %v775, %v1564
        %v1566 = vpop.f32.mrf.mxu0
        %v1567 = vadd.f32 %v775, %v1566
        %1568 = vmatmul.bf16.gmra.mxu0 %v1468
        %v1569 = vpop.f32.mrf.mxu0
        %v1570 = vadd.f32 %v775, %v1569
        %v1571 = vpop.f32.mrf.mxu0
        %v1572 = vadd.f32 %v775, %v1571
        %1573 = vdwg.mxu0
        %v1574 = vtanh.pop %v1495
        %v1575 = vtanh.pop %v1497
        %v1576 = vtanh.pop %v1500
        %v1577 = vtanh.pop %v1502
        %v1578 = vtanh.pop %v1505
        %v1579 = vtanh.pop %v1507
        %v1580 = vtanh.pop %v1510
        %v1581 = vtanh.pop %v1512
        %v1582 = vtanh.pop %v1515
        %v1583 = vtanh.pop %v1517
        %v1584 = vtanh.pop %v1520
        %v1585 = vtanh.pop %v1522
        %v1586 = vtanh.pop %v1525
        %v1587 = vtanh.pop %v1527
        %v1588 = vtanh.pop %v1530
        %v1589 = vtanh.pop %v1532
        %v1590 = vtanh.pop %v1535
        %v1591 = vtanh.pop %v1537
        %v1592 = vtanh.pop %v1540
        %v1593 = vtanh.pop %v1542
        %v1594 = vtanh.pop %v1545
        %v1595 = vtanh.pop %v1547
        %v1596 = vtanh.pop %v1550
        %v1597 = vtanh.pop %v1552
        %v1598 = vtanh.pop %v1555
        %v1599 = vtanh.pop %v1557
        %v1600 = vtanh.pop %v1560
        %v1601 = vtanh.pop %v1562
        %v1602 = vtanh.pop %v1565
        %v1603 = vtanh.pop %v1567
        %v1604 = vtanh.pop %v1570
        %v1605 = vtanh.pop %v1572
        %v1606 = vadd.f32 %v1324, %v1574
        %v1607 = vadd.f32 %v1325, %v1575
        %v1608 = vadd.f32 %v1326, %v1576
        %v1609 = vadd.f32 %v1327, %v1577
        %v1610 = vadd.f32 %v1328, %v1578
        %v1611 = vadd.f32 %v1329, %v1579
        %v1612 = vadd.f32 %v1330, %v1580
        %v1613 = vadd.f32 %v1331, %v1581
        %v1614 = vadd.f32 %v1332, %v1582
        %v1615 = vadd.f32 %v1333, %v1583
        %v1616 = vadd.f32 %v1334, %v1584
        %v1617 = vadd.f32 %v1335, %v1585
        %v1618 = vadd.f32 %v1336, %v1586
        %v1619 = vadd.f32 %v1337, %v1587
        %v1620 = vadd.f32 %v1338, %v1588
        %v1621 = vadd.f32 %v1339, %v1589
        %v1622 = vadd.f32 %v1340, %v1590
        %v1623 = vadd.f32 %v1341, %v1591
        %v1624 = vadd.f32 %v1342, %v1592
        %v1625 = vadd.f32 %v1343, %v1593
        %v1626 = vadd.f32 %v1344, %v1594
        %v1627 = vadd.f32 %v1345, %v1595
        %v1628 = vadd.f32 %v1346, %v1596
        %v1629 = vadd.f32 %v1347, %v1597
        %v1630 = vadd.f32 %v1348, %v1598
        %v1631 = vadd.f32 %v1349, %v1599
        %v1632 = vadd.f32 %v1350, %v1600
        %v1633 = vadd.f32 %v1351, %v1601
        %v1634 = vadd.f32 %v1352, %v1602
        %v1635 = vadd.f32 %v1353, %v1603
        %v1636 = vadd.f32 %v1354, %v1604
        %v1637 = vadd.f32 %v1355, %v1605
        %s1638 = scalar_lea.vmem %s697, 384 [#allocation2]
        %v1639 = vld [vmem:[%s1638] sm:$0xf]
        %v1640 = vld [vmem:[%s1638 + $0x4] sm:$0xf]
        %v1641 = vld [vmem:[%s1638 + $0x8] sm:$0xf]
        %v1642 = vld [vmem:[%s1638 + $0xc] sm:$0xf]
        %v1643 = vld [vmem:[%s1638 + $0x10] sm:$0xf]
        %v1644 = vld [vmem:[%s1638 + $0x14] sm:$0xf]
        %v1645 = vld [vmem:[%s1638 + $0x18] sm:$0xf]
        %v1646 = vld [vmem:[%s1638 + $0x1c] sm:$0xf]
        %v1647 = vld [vmem:[%s1638 + $0x20] sm:$0xf]
        %v1648 = vld [vmem:[%s1638 + $0x24] sm:$0xf]
        %v1649 = vld [vmem:[%s1638 + $0x28] sm:$0xf]
        %v1650 = vld [vmem:[%s1638 + $0x2c] sm:$0xf]
        %v1651 = vld [vmem:[%s1638 + $0x30] sm:$0xf]
        %v1652 = vld [vmem:[%s1638 + $0x34] sm:$0xf]
        %v1653 = vld [vmem:[%s1638 + $0x38] sm:$0xf]
        %v1654 = vld [vmem:[%s1638 + $0x3c] sm:$0xf]
        %v1655 = vld [vmem:[%s1638 + $0x40] sm:$0xf]
        %v1656 = vld [vmem:[%s1638 + $0x44] sm:$0xf]
        %v1657 = vld [vmem:[%s1638 + $0x48] sm:$0xf]
        %v1658 = vld [vmem:[%s1638 + $0x4c] sm:$0xf]
        %v1659 = vld [vmem:[%s1638 + $0x50] sm:$0xf]
        %v1660 = vld [vmem:[%s1638 + $0x54] sm:$0xf]
        %v1661 = vld [vmem:[%s1638 + $0x58] sm:$0xf]
        %v1662 = vld [vmem:[%s1638 + $0x5c] sm:$0xf]
        %v1663 = vld [vmem:[%s1638 + $0x60] sm:$0xf]
        %v1664 = vld [vmem:[%s1638 + $0x64] sm:$0xf]
        %v1665 = vld [vmem:[%s1638 + $0x68] sm:$0xf]
        %v1666 = vld [vmem:[%s1638 + $0x6c] sm:$0xf]
        %v1667 = vld [vmem:[%s1638 + $0x70] sm:$0xf]
        %v1668 = vld [vmem:[%s1638 + $0x74] sm:$0xf]
        %v1669 = vld [vmem:[%s1638 + $0x78] sm:$0xf]
        %v1670 = vld [vmem:[%s1638 + $0x7c] sm:$0xf]
        %v1703 = vunpack.c.l.b16 %v1639
        %v1704 = vunpack.c.l.b16 %v1640
        %v1705 = vunpack.c.l.b16 %v1641
        %v1706 = vunpack.c.l.b16 %v1642
        %v1707 = vunpack.c.l.b16 %v1643
        %v1708 = vunpack.c.l.b16 %v1644
        %v1709 = vunpack.c.l.b16 %v1645
        %v1710 = vunpack.c.l.b16 %v1646
        %v1711 = vunpack.c.l.b16 %v1647
        %v1712 = vunpack.c.l.b16 %v1648
        %v1713 = vunpack.c.l.b16 %v1649
        %v1714 = vunpack.c.l.b16 %v1650
        %v1715 = vunpack.c.l.b16 %v1651
        %v1716 = vunpack.c.l.b16 %v1652
        %v1717 = vunpack.c.l.b16 %v1653
        %v1718 = vunpack.c.l.b16 %v1654
        %v1719 = vunpack.c.l.b16 %v1655
        %v1720 = vunpack.c.l.b16 %v1656
        %v1721 = vunpack.c.l.b16 %v1657
        %v1722 = vunpack.c.l.b16 %v1658
        %v1723 = vunpack.c.l.b16 %v1659
        %v1724 = vunpack.c.l.b16 %v1660
        %v1725 = vunpack.c.l.b16 %v1661
        %v1726 = vunpack.c.l.b16 %v1662
        %v1727 = vunpack.c.l.b16 %v1663
        %v1728 = vunpack.c.l.b16 %v1664
        %v1729 = vunpack.c.l.b16 %v1665
        %v1730 = vunpack.c.l.b16 %v1666
        %v1731 = vunpack.c.l.b16 %v1667
        %v1732 = vunpack.c.l.b16 %v1668
        %v1733 = vunpack.c.l.b16 %v1669
        %v1734 = vunpack.c.l.b16 %v1670
        %v1735 = vpack.c.b16 %v1704, %v1703
        %v1736 = vpack.c.b16 %v1706, %v1705
        %v1737 = vpack.c.b16 %v1708, %v1707
        %v1738 = vpack.c.b16 %v1710, %v1709
        %v1739 = vpack.c.b16 %v1712, %v1711
        %v1740 = vpack.c.b16 %v1714, %v1713
        %v1741 = vpack.c.b16 %v1716, %v1715
        %v1742 = vpack.c.b16 %v1718, %v1717
        %v1743 = vpack.c.b16 %v1720, %v1719
        %v1744 = vpack.c.b16 %v1722, %v1721
        %v1745 = vpack.c.b16 %v1724, %v1723
        %v1746 = vpack.c.b16 %v1726, %v1725
        %v1747 = vpack.c.b16 %v1728, %v1727
        %v1748 = vpack.c.b16 %v1730, %v1729
        %v1749 = vpack.c.b16 %v1732, %v1731
        %v1750 = vpack.c.b16 %v1734, %v1733
        %1767 = vmatpush.bf16.msra.mxu0 %v912
        %1768 = vmatpush.bf16.msra.mxu0 %v911
        %1769 = vmatpush.bf16.msra.mxu0 %v910
        %1770 = vmatpush.bf16.msra.mxu0 %v909
        %1771 = vmatpush.bf16.msra.mxu0 %v908
        %1772 = vmatpush.bf16.msra.mxu0 %v907
        %1773 = vmatpush.bf16.msra.mxu0 %v906
        %1774 = vmatpush.bf16.msra.mxu0 %v905
        %1775 = vmatmul.bf16.gmra.mxu0 %v1735
        %v1776 = vpop.f32.mrf.mxu0
        %v1777 = vadd.f32 %v775, %v1776
        %v1778 = vpop.f32.mrf.mxu0
        %v1779 = vadd.f32 %v775, %v1778
        %1780 = vmatmul.bf16.gmra.mxu0 %v1736
        %v1781 = vpop.f32.mrf.mxu0
        %v1782 = vadd.f32 %v775, %v1781
        %v1783 = vpop.f32.mrf.mxu0
        %v1784 = vadd.f32 %v775, %v1783
        %1785 = vmatmul.bf16.gmra.mxu0 %v1737
        %v1786 = vpop.f32.mrf.mxu0
        %v1787 = vadd.f32 %v775, %v1786
        %v1788 = vpop.f32.mrf.mxu0
        %v1789 = vadd.f32 %v775, %v1788
        %1790 = vmatmul.bf16.gmra.mxu0 %v1738
        %v1791 = vpop.f32.mrf.mxu0
        %v1792 = vadd.f32 %v775, %v1791
        %v1793 = vpop.f32.mrf.mxu0
        %v1794 = vadd.f32 %v775, %v1793
        %1795 = vmatmul.bf16.gmra.mxu0 %v1739
        %v1796 = vpop.f32.mrf.mxu0
        %v1797 = vadd.f32 %v775, %v1796
        %v1798 = vpop.f32.mrf.mxu0
        %v1799 = vadd.f32 %v775, %v1798
        %1800 = vmatmul.bf16.gmra.mxu0 %v1740
        %v1801 = vpop.f32.mrf.mxu0
        %v1802 = vadd.f32 %v775, %v1801
        %v1803 = vpop.f32.mrf.mxu0
        %v1804 = vadd.f32 %v775, %v1803
        %1805 = vmatmul.bf16.gmra.mxu0 %v1741
        %v1806 = vpop.f32.mrf.mxu0
        %v1807 = vadd.f32 %v775, %v1806
        %v1808 = vpop.f32.mrf.mxu0
        %v1809 = vadd.f32 %v775, %v1808
        %1810 = vmatmul.bf16.gmra.mxu0 %v1742
        %v1811 = vpop.f32.mrf.mxu0
        %v1812 = vadd.f32 %v775, %v1811
        %v1813 = vpop.f32.mrf.mxu0
        %v1814 = vadd.f32 %v775, %v1813
        %1815 = vmatmul.bf16.gmra.mxu0 %v1743
        %v1816 = vpop.f32.mrf.mxu0
        %v1817 = vadd.f32 %v775, %v1816
        %v1818 = vpop.f32.mrf.mxu0
        %v1819 = vadd.f32 %v775, %v1818
        %1820 = vmatmul.bf16.gmra.mxu0 %v1744
        %v1821 = vpop.f32.mrf.mxu0
        %v1822 = vadd.f32 %v775, %v1821
        %v1823 = vpop.f32.mrf.mxu0
        %v1824 = vadd.f32 %v775, %v1823
        %1825 = vmatmul.bf16.gmra.mxu0 %v1745
        %v1826 = vpop.f32.mrf.mxu0
        %v1827 = vadd.f32 %v775, %v1826
        %v1828 = vpop.f32.mrf.mxu0
        %v1829 = vadd.f32 %v775, %v1828
        %1830 = vmatmul.bf16.gmra.mxu0 %v1746
        %v1831 = vpop.f32.mrf.mxu0
        %v1832 = vadd.f32 %v775, %v1831
        %v1833 = vpop.f32.mrf.mxu0
        %v1834 = vadd.f32 %v775, %v1833
        %1835 = vmatmul.bf16.gmra.mxu0 %v1747
        %v1836 = vpop.f32.mrf.mxu0
        %v1837 = vadd.f32 %v775, %v1836
        %v1838 = vpop.f32.mrf.mxu0
        %v1839 = vadd.f32 %v775, %v1838
        %1840 = vmatmul.bf16.gmra.mxu0 %v1748
        %v1841 = vpop.f32.mrf.mxu0
        %v1842 = vadd.f32 %v775, %v1841
        %v1843 = vpop.f32.mrf.mxu0
        %v1844 = vadd.f32 %v775, %v1843
        %1845 = vmatmul.bf16.gmra.mxu0 %v1749
        %v1846 = vpop.f32.mrf.mxu0
        %v1847 = vadd.f32 %v775, %v1846
        %v1848 = vpop.f32.mrf.mxu0
        %v1849 = vadd.f32 %v775, %v1848
        %1850 = vmatmul.bf16.gmra.mxu0 %v1750
        %v1851 = vpop.f32.mrf.mxu0
        %v1852 = vadd.f32 %v775, %v1851
        %v1853 = vpop.f32.mrf.mxu0
        %v1854 = vadd.f32 %v775, %v1853
        %1855 = vdwg.mxu0
        %v1856 = vtanh.pop %v1777
        %v1857 = vtanh.pop %v1779
        %v1858 = vtanh.pop %v1782
        %v1859 = vtanh.pop %v1784
        %v1860 = vtanh.pop %v1787
        %v1861 = vtanh.pop %v1789
        %v1862 = vtanh.pop %v1792
        %v1863 = vtanh.pop %v1794
        %v1864 = vtanh.pop %v1797
        %v1865 = vtanh.pop %v1799
        %v1866 = vtanh.pop %v1802
        %v1867 = vtanh.pop %v1804
        %v1868 = vtanh.pop %v1807
        %v1869 = vtanh.pop %v1809
        %v1870 = vtanh.pop %v1812
        %v1871 = vtanh.pop %v1814
        %v1872 = vtanh.pop %v1817
        %v1873 = vtanh.pop %v1819
        %v1874 = vtanh.pop %v1822
        %v1875 = vtanh.pop %v1824
        %v1876 = vtanh.pop %v1827
        %v1877 = vtanh.pop %v1829
        %v1878 = vtanh.pop %v1832
        %v1879 = vtanh.pop %v1834
        %v1880 = vtanh.pop %v1837
        %v1881 = vtanh.pop %v1839
        %v1882 = vtanh.pop %v1842
        %v1883 = vtanh.pop %v1844
        %v1884 = vtanh.pop %v1847
        %v1885 = vtanh.pop %v1849
        %v1886 = vtanh.pop %v1852
        %v1887 = vtanh.pop %v1854
        %v1888 = vadd.f32 %v1606, %v1856
        %v1889 = vadd.f32 %v1607, %v1857
        %v1890 = vadd.f32 %v1608, %v1858
        %v1891 = vadd.f32 %v1609, %v1859
        %v1892 = vadd.f32 %v1610, %v1860
        %v1893 = vadd.f32 %v1611, %v1861
        %v1894 = vadd.f32 %v1612, %v1862
        %v1895 = vadd.f32 %v1613, %v1863
        %v1896 = vadd.f32 %v1614, %v1864
        %v1897 = vadd.f32 %v1615, %v1865
        %v1898 = vadd.f32 %v1616, %v1866
        %v1899 = vadd.f32 %v1617, %v1867
        %v1900 = vadd.f32 %v1618, %v1868
        %v1901 = vadd.f32 %v1619, %v1869
        %v1902 = vadd.f32 %v1620, %v1870
        %v1903 = vadd.f32 %v1621, %v1871
        %v1904 = vadd.f32 %v1622, %v1872
        %v1905 = vadd.f32 %v1623, %v1873
        %v1906 = vadd.f32 %v1624, %v1874
        %v1907 = vadd.f32 %v1625, %v1875
        %v1908 = vadd.f32 %v1626, %v1876
        %v1909 = vadd.f32 %v1627, %v1877
        %v1910 = vadd.f32 %v1628, %v1878
        %v1911 = vadd.f32 %v1629, %v1879
        %v1912 = vadd.f32 %v1630, %v1880
        %v1913 = vadd.f32 %v1631, %v1881
        %v1914 = vadd.f32 %v1632, %v1882
        %v1915 = vadd.f32 %v1633, %v1883
        %v1916 = vadd.f32 %v1634, %v1884
        %v1917 = vadd.f32 %v1635, %v1885
        %v1918 = vadd.f32 %v1636, %v1886
        %v1919 = vadd.f32 %v1637, %v1887
        %v1920 = vmul.f32 %v1888, 0.25
        %v1921 = vmul.f32 %v1889, 0.25
        %v1922 = vmul.f32 %v1890, 0.25
        %v1923 = vmul.f32 %v1891, 0.25
        %v1924 = vmul.f32 %v1892, 0.25
        %v1925 = vmul.f32 %v1893, 0.25
        %v1926 = vmul.f32 %v1894, 0.25
        %v1927 = vmul.f32 %v1895, 0.25
        %v1928 = vmul.f32 %v1896, 0.25
        %v1929 = vmul.f32 %v1897, 0.25
        %v1930 = vmul.f32 %v1898, 0.25
        %v1931 = vmul.f32 %v1899, 0.25
        %v1932 = vmul.f32 %v1900, 0.25
        %v1933 = vmul.f32 %v1901, 0.25
        %v1934 = vmul.f32 %v1902, 0.25
        %v1935 = vmul.f32 %v1903, 0.25
        %v1936 = vmul.f32 %v1904, 0.25
        %v1937 = vmul.f32 %v1905, 0.25
        %v1938 = vmul.f32 %v1906, 0.25
        %v1939 = vmul.f32 %v1907, 0.25
        %v1940 = vmul.f32 %v1908, 0.25
        %v1941 = vmul.f32 %v1909, 0.25
        %v1942 = vmul.f32 %v1910, 0.25
        %v1943 = vmul.f32 %v1911, 0.25
        %v1944 = vmul.f32 %v1912, 0.25
        %v1945 = vmul.f32 %v1913, 0.25
        %v1946 = vmul.f32 %v1914, 0.25
        %v1947 = vmul.f32 %v1915, 0.25
        %v1948 = vmul.f32 %v1916, 0.25
        %v1949 = vmul.f32 %v1917, 0.25
        %v1950 = vmul.f32 %v1918, 0.25
        %v1951 = vmul.f32 %v1919, 0.25
        %1952 = vst [vmem:[%s723] sm:$0xff] %v1920
        %1953 = vst [vmem:[%s723 + $0x8] sm:$0xff] %v1921
        %1954 = vst [vmem:[%s723 + $0x10] sm:$0xff] %v1922
        %1955 = vst [vmem:[%s723 + $0x18] sm:$0xff] %v1923
        %1956 = vst [vmem:[%s723 + $0x20] sm:$0xff] %v1924
        %1957 = vst [vmem:[%s723 + $0x28] sm:$0xff] %v1925
        %1958 = vst [vmem:[%s723 + $0x30] sm:$0xff] %v1926
        %1959 = vst [vmem:[%s723 + $0x38] sm:$0xff] %v1927
        %1960 = vst [vmem:[%s723 + $0x40] sm:$0xff] %v1928
        %1961 = vst [vmem:[%s723 + $0x48] sm:$0xff] %v1929
        %1962 = vst [vmem:[%s723 + $0x50] sm:$0xff] %v1930
        %1963 = vst [vmem:[%s723 + $0x58] sm:$0xff] %v1931
        %1964 = vst [vmem:[%s723 + $0x60] sm:$0xff] %v1932
        %1965 = vst [vmem:[%s723 + $0x68] sm:$0xff] %v1933
        %1966 = vst [vmem:[%s723 + $0x70] sm:$0xff] %v1934
        %1967 = vst [vmem:[%s723 + $0x78] sm:$0xff] %v1935
        %1968 = vst [vmem:[%s723 + $0x80] sm:$0xff] %v1936
        %1969 = vst [vmem:[%s723 + $0x88] sm:$0xff] %v1937
        %1970 = vst [vmem:[%s723 + $0x90] sm:$0xff] %v1938
        %1971 = vst [vmem:[%s723 + $0x98] sm:$0xff] %v1939
        %1972 = vst [vmem:[%s723 + $0xa0] sm:$0xff] %v1940
        %1973 = vst [vmem:[%s723 + $0xa8] sm:$0xff] %v1941
        %1974 = vst [vmem:[%s723 + $0xb0] sm:$0xff] %v1942
        %1975 = vst [vmem:[%s723 + $0xb8] sm:$0xff] %v1943
        %1976 = vst [vmem:[%s723 + $0xc0] sm:$0xff] %v1944
        %1977 = vst [vmem:[%s723 + $0xc8] sm:$0xff] %v1945
        %1978 = vst [vmem:[%s723 + $0xd0] sm:$0xff] %v1946
        %1979 = vst [vmem:[%s723 + $0xd8] sm:$0xff] %v1947
        %1980 = vst [vmem:[%s723 + $0xe0] sm:$0xff] %v1948
        %1981 = vst [vmem:[%s723 + $0xe8] sm:$0xff] %v1949
        %1982 = vst [vmem:[%s723 + $0xf0] sm:$0xff] %v1950
        %1983 = vst [vmem:[%s723 + $0xf8] sm:$0xff] %v1951
        %s1984 = smul.u32 32, %s14
        %p1985 = scmp.lt.s32.totalorder %s1984, 63
        %s1986 = scalar_select %p1985, %s1984, 63
        %s1987 = smul.addr %s1986, 8
        %s1988 = scalar_lea.vmem %s3, %s1987
        // Predicated region
        $region74: #{lenet5_forward.3} parent=68 // pred_check
          %p1989 = pneg %p100
        $region75: #{lenet5_forward.3} parent=68 // pred_check_branch
          %1991 = sbr.rel (%p1989) target = $region77
        $region76: #{lenet5_forward.3} parent=68 // pred_region
          %s1992 = smul.u32 32, %s14
        $region77: #{lenet5_forward.3} parent=68 // pred_fallthru
          _
      $region69: #{lenet5_forward.3} parent=5 // pred_fallthru
        _
      %p1993 = scmp.le.s32.totalorder 2, %s9
      // Predicated region
      $region78: #{lenet5_forward.3} parent=5 // pred_check
        %p1994 = pneg %p1993
      $region79: #{lenet5_forward.3} parent=5 // pred_check_branch
        %1996 = sbr.rel (%p1994) target = $region81
      $region80: #{lenet5_forward.3} parent=5 // pred_region
        %s1997 = ssub.s32 %s9, 2
        // Predicated region
        $region82: #{lenet5_forward.3} parent=80 // pred_check
          %p1998 = pneg %p106
        $region83: #{lenet5_forward.3} parent=80 // pred_check_branch
          %2000 = sbr.rel (%p1998) target = $region85
        $region84: #{lenet5_forward.3} parent=80 // pred_region
          %s2001 = smul.u32 32, %s15
          %p2002 = scmp.lt.s32.totalorder %s2001, 63
          %s2003 = scalar_select %p2002, %s2001, 63
          %s2004 = smul.addr %s2003, 8
          %s2005 = scalar_lea.vmem %s3, %s2004
        $region85: #{lenet5_forward.3} parent=80 // pred_fallthru
          _
      $region81: #{lenet5_forward.3} parent=5 // pred_fallthru
        _
    $region6: #{lenet5_forward.3} parent=1 // loop_footer
      %s13 = sadd.s32 1, %s9
    $region7: #{lenet5_forward.3} parent=1 // loop_footer_branch
      %8 = sbr.rel target = $region3
    $region8: #{lenet5_forward.3} parent=1 // loop_exit
      _

// kernel: lenet5_forward.4
$region0: #{lenet5_forward.4}
  #allocation0 [shape = 'u32[]', space=smem, size = 0x4, offset = 0x4, fixed_abs, tag = 'smem constant byte address 0x4 - core index']
  #allocation1 [shape = 'u32[72,128]{1,0:T(1,128)}', space=vmem, size = 0x9000, scoped, tag = 'internal scratch']
  %s0 = inlined_call_operand.vmem [shape: bf16[4,56,256], index: 0, kind: input, shape index: {}]
  %s1 = inlined_call_operand.vmem [shape: bf16[256,128], index: 1, kind: input, shape index: {}]
  %s2 = inlined_call_operand.vmem [shape: f32[1,128], index: 2, kind: input, shape index: {}]
  %s3 = inlined_call_operand.vmem [shape: f32[56,128], index: 3, kind: output, shape index: {}]
  %s4 = sld [smem:[#allocation0]]
  $region22: #{lenet5_forward.4} parent=0
    _
  %s6 = ssub.s32 1, %s4
  %s7 = scalar_select 0, %s6, %s4
  // Predicated region
  $region2: #{lenet5_forward.4} parent=0 // pred_check
    _
  $region3: #{lenet5_forward.4} parent=0 // pred_check_branch
    %9 = sbr.rel (0) target = $region5
  $region4: #{lenet5_forward.4} parent=0 // pred_region
    _
  $region5: #{lenet5_forward.4} parent=0 // pred_fallthru
    _
  // Predicated region
  $region6: #{lenet5_forward.4} parent=0 // pred_check
    _
  $region7: #{lenet5_forward.4} parent=0 // pred_check_branch
    %11 = sbr.rel (0) target = $region9
  $region8: #{lenet5_forward.4} parent=0 // pred_region
    _
  $region9: #{lenet5_forward.4} parent=0 // pred_fallthru
    _
  // Predicated region
  $region10: #{lenet5_forward.4} parent=0 // pred_check
    _
  $region11: #{lenet5_forward.4} parent=0 // pred_check_branch
    %13 = sbr.rel (0) target = $region13
  $region12: #{lenet5_forward.4} parent=0 // pred_region
    _
  $region13: #{lenet5_forward.4} parent=0 // pred_fallthru
    _
  %v14 = vld [vmem:[%s2] sm:$0x1]
  %v15 = vld [vmem:[%s0] sm:$0xff]
  %v16 = vld [vmem:[%s0 + $0x8] sm:$0xff]
  %v17 = vld [vmem:[%s0 + $0x10] sm:$0xff]
  %v18 = vld [vmem:[%s0 + $0x18] sm:$0xff]
  %v19 = vld [vmem:[%s0 + $0x20] sm:$0xff]
  %v20 = vld [vmem:[%s0 + $0x28] sm:$0xff]
  %v21 = vld [vmem:[%s0 + $0x30] sm:$0xff]
  %v22 = vld [vmem:[%s1] sm:$0xf]
  %v23 = vld [vmem:[%s1 + $0x4] sm:$0xf]
  %v24 = vld [vmem:[%s1 + $0x8] sm:$0xf]
  %v25 = vld [vmem:[%s1 + $0xc] sm:$0xf]
  %v26 = vld [vmem:[%s1 + $0x10] sm:$0xf]
  %v27 = vld [vmem:[%s1 + $0x14] sm:$0xf]
  %v28 = vld [vmem:[%s1 + $0x18] sm:$0xf]
  %v29 = vld [vmem:[%s1 + $0x1c] sm:$0xf]
  %v30 = vld [vmem:[%s1 + $0x20] sm:$0xf]
  %v31 = vld [vmem:[%s1 + $0x24] sm:$0xf]
  %v32 = vld [vmem:[%s1 + $0x28] sm:$0xf]
  %v33 = vld [vmem:[%s1 + $0x2c] sm:$0xf]
  %v34 = vld [vmem:[%s1 + $0x30] sm:$0xf]
  %v35 = vld [vmem:[%s1 + $0x34] sm:$0xf]
  %v36 = vld [vmem:[%s1 + $0x38] sm:$0xf]
  %v37 = vld [vmem:[%s1 + $0x3c] sm:$0xf]
  %v38 = vld [vmem:[%s1 + $0x40] sm:$0xf]
  %v39 = vld [vmem:[%s1 + $0x44] sm:$0xf]
  %v40 = vld [vmem:[%s1 + $0x48] sm:$0xf]
  %v41 = vld [vmem:[%s1 + $0x4c] sm:$0xf]
  %v42 = vld [vmem:[%s1 + $0x50] sm:$0xf]
  %v43 = vld [vmem:[%s1 + $0x54] sm:$0xf]
  %v44 = vld [vmem:[%s1 + $0x58] sm:$0xf]
  %v45 = vld [vmem:[%s1 + $0x5c] sm:$0xf]
  %v46 = vld [vmem:[%s1 + $0x60] sm:$0xf]
  %v47 = vld [vmem:[%s1 + $0x64] sm:$0xf]
  %v48 = vld [vmem:[%s1 + $0x68] sm:$0xf]
  %v49 = vld [vmem:[%s1 + $0x6c] sm:$0xf]
  %v50 = vld [vmem:[%s1 + $0x70] sm:$0xf]
  %v51 = vld [vmem:[%s1 + $0x74] sm:$0xf]
  %v52 = vld [vmem:[%s1 + $0x78] sm:$0xf]
  %v53 = vld [vmem:[%s1 + $0x7c] sm:$0xf]
  %v55 = vperm.slane %v14, 0
  %v64 = vunpack.c.l.b16 %v15
  %v65 = vunpack.c.h.b16 %v15
  %v66 = vunpack.c.l.b16 %v16
  %v67 = vunpack.c.h.b16 %v16
  %v68 = vunpack.c.l.b16 %v17
  %v69 = vunpack.c.h.b16 %v17
  %v70 = vunpack.c.l.b16 %v18
  %v71 = vunpack.c.h.b16 %v18
  %v72 = vunpack.c.l.b16 %v19
  %v73 = vunpack.c.h.b16 %v19
  %v74 = vunpack.c.l.b16 %v20
  %v75 = vunpack.c.h.b16 %v20
  %v76 = vunpack.c.l.b16 %v21
  %v77 = vunpack.c.h.b16 %v21
  %v78 = vpack.c.b16 %v66, %v64
  %v79 = vpack.c.b16 %v67, %v65
  %v80 = vpack.c.b16 %v70, %v68
  %v81 = vpack.c.b16 %v71, %v69
  %v82 = vpack.c.b16 %v74, %v72
  %v83 = vpack.c.b16 %v75, %v73
  %v84 = vpack.c.b16 %v76, %v76
  %v85 = vpack.c.b16 %v77, %v77
  %v126 = vunpack.c.l.b16 %v22
  %v127 = vunpack.c.l.b16 %v23
  %v128 = vunpack.c.l.b16 %v24
  %v129 = vunpack.c.l.b16 %v25
  %v130 = vunpack.c.l.b16 %v26
  %v131 = vunpack.c.l.b16 %v27
  %v132 = vunpack.c.l.b16 %v28
  %v133 = vunpack.c.l.b16 %v29
  %v134 = vunpack.c.l.b16 %v30
  %v135 = vunpack.c.l.b16 %v31
  %v136 = vunpack.c.l.b16 %v32
  %v137 = vunpack.c.l.b16 %v33
  %v138 = vunpack.c.l.b16 %v34
  %v139 = vunpack.c.l.b16 %v35
  %v140 = vunpack.c.l.b16 %v36
  %v141 = vunpack.c.l.b16 %v37
  %v142 = vunpack.c.l.b16 %v38
  %v143 = vunpack.c.l.b16 %v39
  %v144 = vunpack.c.l.b16 %v40
  %v145 = vunpack.c.l.b16 %v41
  %v146 = vunpack.c.l.b16 %v42
  %v147 = vunpack.c.l.b16 %v43
  %v148 = vunpack.c.l.b16 %v44
  %v149 = vunpack.c.l.b16 %v45
  %v150 = vunpack.c.l.b16 %v46
  %v151 = vunpack.c.l.b16 %v47
  %v152 = vunpack.c.l.b16 %v48
  %v153 = vunpack.c.l.b16 %v49
  %v154 = vunpack.c.l.b16 %v50
  %v155 = vunpack.c.l.b16 %v51
  %v156 = vunpack.c.l.b16 %v52
  %v157 = vunpack.c.l.b16 %v53
  %v158 = vpack.c.b16 %v127, %v126
  %v159 = vpack.c.b16 %v129, %v128
  %v160 = vpack.c.b16 %v131, %v130
  %v161 = vpack.c.b16 %v133, %v132
  %v162 = vpack.c.b16 %v135, %v134
  %v163 = vpack.c.b16 %v137, %v136
  %v164 = vpack.c.b16 %v139, %v138
  %v165 = vpack.c.b16 %v141, %v140
  %v166 = vpack.c.b16 %v143, %v142
  %v167 = vpack.c.b16 %v145, %v144
  %v168 = vpack.c.b16 %v147, %v146
  %v169 = vpack.c.b16 %v149, %v148
  %v170 = vpack.c.b16 %v151, %v150
  %v171 = vpack.c.b16 %v153, %v152
  %v172 = vpack.c.b16 %v155, %v154
  %v173 = vpack.c.b16 %v157, %v156
  %190 = vmatpush.bf16.msra.mxu0 %v165
  %191 = vmatpush.bf16.msra.mxu0 %v164
  %192 = vmatpush.bf16.msra.mxu0 %v163
  %193 = vmatpush.bf16.msra.mxu0 %v162
  %194 = vmatpush.bf16.msra.mxu0 %v161
  %195 = vmatpush.bf16.msra.mxu0 %v160
  %196 = vmatpush.bf16.msra.mxu0 %v159
  %197 = vmatpush.bf16.msra.mxu0 %v158
  %198 = vmatmul.bf16.gmra.mxu0 %v78
  %v199 = vpop.f32.mrf.mxu0
  %v200 = vadd.f32 %v55, %v199
  %v201 = vpop.f32.mrf.mxu0
  %v202 = vadd.f32 %v55, %v201
  %203 = vmatmul.bf16.gmra.mxu0 %v80
  %v204 = vpop.f32.mrf.mxu0
  %v205 = vadd.f32 %v55, %v204
  %v206 = vpop.f32.mrf.mxu0
  %v207 = vadd.f32 %v55, %v206
  %208 = vmatmul.bf16.gmra.mxu0 %v82
  %v209 = vpop.f32.mrf.mxu0
  %v210 = vadd.f32 %v55, %v209
  %v211 = vpop.f32.mrf.mxu0
  %v212 = vadd.f32 %v55, %v211
  %213 = vmatmul.bf16.gmra.mxu0 %v84
  %v214 = vpop.f32.mrf.mxu0
  %v215 = vadd.f32 %v55, %v214
  %v216 = vpop.f32.mrf.mxu0
  %217 = vdwg.mxu0
  %218 = vmatpush.bf16.msra.mxu0 %v173
  %219 = vmatpush.bf16.msra.mxu0 %v172
  %220 = vmatpush.bf16.msra.mxu0 %v171
  %221 = vmatpush.bf16.msra.mxu0 %v170
  %222 = vmatpush.bf16.msra.mxu0 %v169
  %223 = vmatpush.bf16.msra.mxu0 %v168
  %224 = vmatpush.bf16.msra.mxu0 %v167
  %225 = vmatpush.bf16.msra.mxu0 %v166
  %226 = vmatmul.bf16.gmra.mxu0 %v79
  %v227 = vpop.f32.mrf.mxu0
  %v228 = vadd.f32 %v200, %v227
  %v229 = vpop.f32.mrf.mxu0
  %v230 = vadd.f32 %v202, %v229
  %231 = vmatmul.bf16.gmra.mxu0 %v81
  %v232 = vpop.f32.mrf.mxu0
  %v233 = vadd.f32 %v205, %v232
  %v234 = vpop.f32.mrf.mxu0
  %v235 = vadd.f32 %v207, %v234
  %236 = vmatmul.bf16.gmra.mxu0 %v83
  %v237 = vpop.f32.mrf.mxu0
  %v238 = vadd.f32 %v210, %v237
  %v239 = vpop.f32.mrf.mxu0
  %v240 = vadd.f32 %v212, %v239
  %241 = vmatmul.bf16.gmra.mxu0 %v85
  %v242 = vpop.f32.mrf.mxu0
  %v243 = vadd.f32 %v215, %v242
  %v244 = vpop.f32.mrf.mxu0
  %245 = vdwg.mxu0
  %v246 = vtanh.pop %v228
  %v247 = vtanh.pop %v230
  %v248 = vtanh.pop %v233
  %v249 = vtanh.pop %v235
  %v250 = vtanh.pop %v238
  %v251 = vtanh.pop %v240
  %v252 = vtanh.pop %v243
  %v253 = vadd.f32 %v246, 0.0
  %v254 = vadd.f32 %v247, 0.0
  %v255 = vadd.f32 %v248, 0.0
  %v256 = vadd.f32 %v249, 0.0
  %v257 = vadd.f32 %v250, 0.0
  %v258 = vadd.f32 %v251, 0.0
  %v259 = vadd.f32 %v252, 0.0
  %s260 = scalar_lea.vmem %s0, 56
  %v261 = vld [vmem:[%s260] sm:$0xff]
  %v262 = vld [vmem:[%s260 + $0x8] sm:$0xff]
  %v263 = vld [vmem:[%s260 + $0x10] sm:$0xff]
  %v264 = vld [vmem:[%s260 + $0x18] sm:$0xff]
  %v265 = vld [vmem:[%s260 + $0x20] sm:$0xff]
  %v266 = vld [vmem:[%s260 + $0x28] sm:$0xff]
  %v267 = vld [vmem:[%s260 + $0x30] sm:$0xff]
  %v275 = vunpack.c.l.b16 %v261
  %v276 = vunpack.c.h.b16 %v261
  %v277 = vunpack.c.l.b16 %v262
  %v278 = vunpack.c.h.b16 %v262
  %v279 = vunpack.c.l.b16 %v263
  %v280 = vunpack.c.h.b16 %v263
  %v281 = vunpack.c.l.b16 %v264
  %v282 = vunpack.c.h.b16 %v264
  %v283 = vunpack.c.l.b16 %v265
  %v284 = vunpack.c.h.b16 %v265
  %v285 = vunpack.c.l.b16 %v266
  %v286 = vunpack.c.h.b16 %v266
  %v287 = vunpack.c.l.b16 %v267
  %v288 = vunpack.c.h.b16 %v267
  %v289 = vpack.c.b16 %v277, %v275
  %v290 = vpack.c.b16 %v278, %v276
  %v291 = vpack.c.b16 %v281, %v279
  %v292 = vpack.c.b16 %v282, %v280
  %v293 = vpack.c.b16 %v285, %v283
  %v294 = vpack.c.b16 %v286, %v284
  %v295 = vpack.c.b16 %v287, %v287
  %v296 = vpack.c.b16 %v288, %v288
  %305 = vmatpush.bf16.msra.mxu0 %v165
  %306 = vmatpush.bf16.msra.mxu0 %v164
  %307 = vmatpush.bf16.msra.mxu0 %v163
  %308 = vmatpush.bf16.msra.mxu0 %v162
  %309 = vmatpush.bf16.msra.mxu0 %v161
  %310 = vmatpush.bf16.msra.mxu0 %v160
  %311 = vmatpush.bf16.msra.mxu0 %v159
  %312 = vmatpush.bf16.msra.mxu0 %v158
  %313 = vmatmul.bf16.gmra.mxu0 %v289
  %v314 = vpop.f32.mrf.mxu0
  %v315 = vadd.f32 %v55, %v314
  %v316 = vpop.f32.mrf.mxu0
  %v317 = vadd.f32 %v55, %v316
  %318 = vmatmul.bf16.gmra.mxu0 %v291
  %v319 = vpop.f32.mrf.mxu0
  %v320 = vadd.f32 %v55, %v319
  %v321 = vpop.f32.mrf.mxu0
  %v322 = vadd.f32 %v55, %v321
  %323 = vmatmul.bf16.gmra.mxu0 %v293
  %v324 = vpop.f32.mrf.mxu0
  %v325 = vadd.f32 %v55, %v324
  %v326 = vpop.f32.mrf.mxu0
  %v327 = vadd.f32 %v55, %v326
  %328 = vmatmul.bf16.gmra.mxu0 %v295
  %v329 = vpop.f32.mrf.mxu0
  %v330 = vadd.f32 %v55, %v329
  %v331 = vpop.f32.mrf.mxu0
  %332 = vdwg.mxu0
  %333 = vmatpush.bf16.msra.mxu0 %v173
  %334 = vmatpush.bf16.msra.mxu0 %v172
  %335 = vmatpush.bf16.msra.mxu0 %v171
  %336 = vmatpush.bf16.msra.mxu0 %v170
  %337 = vmatpush.bf16.msra.mxu0 %v169
  %338 = vmatpush.bf16.msra.mxu0 %v168
  %339 = vmatpush.bf16.msra.mxu0 %v167
  %340 = vmatpush.bf16.msra.mxu0 %v166
  %341 = vmatmul.bf16.gmra.mxu0 %v290
  %v342 = vpop.f32.mrf.mxu0
  %v343 = vadd.f32 %v315, %v342
  %v344 = vpop.f32.mrf.mxu0
  %v345 = vadd.f32 %v317, %v344
  %346 = vmatmul.bf16.gmra.mxu0 %v292
  %v347 = vpop.f32.mrf.mxu0
  %v348 = vadd.f32 %v320, %v347
  %v349 = vpop.f32.mrf.mxu0
  %v350 = vadd.f32 %v322, %v349
  %351 = vmatmul.bf16.gmra.mxu0 %v294
  %v352 = vpop.f32.mrf.mxu0
  %v353 = vadd.f32 %v325, %v352
  %v354 = vpop.f32.mrf.mxu0
  %v355 = vadd.f32 %v327, %v354
  %356 = vmatmul.bf16.gmra.mxu0 %v296
  %v357 = vpop.f32.mrf.mxu0
  %v358 = vadd.f32 %v330, %v357
  %v359 = vpop.f32.mrf.mxu0
  %360 = vdwg.mxu0
  %v361 = vtanh.pop %v343
  %v362 = vtanh.pop %v345
  %v363 = vtanh.pop %v348
  %v364 = vtanh.pop %v350
  %v365 = vtanh.pop %v353
  %v366 = vtanh.pop %v355
  %v367 = vtanh.pop %v358
  %v368 = vadd.f32 %v253, %v361
  %v369 = vadd.f32 %v254, %v362
  %v370 = vadd.f32 %v255, %v363
  %v371 = vadd.f32 %v256, %v364
  %v372 = vadd.f32 %v257, %v365
  %v373 = vadd.f32 %v258, %v366
  %v374 = vadd.f32 %v259, %v367
  %s375 = scalar_lea.vmem %s0, 112
  %v376 = vld [vmem:[%s375] sm:$0xff]
  %v377 = vld [vmem:[%s375 + $0x8] sm:$0xff]
  %v378 = vld [vmem:[%s375 + $0x10] sm:$0xff]
  %v379 = vld [vmem:[%s375 + $0x18] sm:$0xff]
  %v380 = vld [vmem:[%s375 + $0x20] sm:$0xff]
  %v381 = vld [vmem:[%s375 + $0x28] sm:$0xff]
  %v382 = vld [vmem:[%s375 + $0x30] sm:$0xff]
  %v390 = vunpack.c.l.b16 %v376
  %v391 = vunpack.c.h.b16 %v376
  %v392 = vunpack.c.l.b16 %v377
  %v393 = vunpack.c.h.b16 %v377
  %v394 = vunpack.c.l.b16 %v378
  %v395 = vunpack.c.h.b16 %v378
  %v396 = vunpack.c.l.b16 %v379
  %v397 = vunpack.c.h.b16 %v379
  %v398 = vunpack.c.l.b16 %v380
  %v399 = vunpack.c.h.b16 %v380
  %v400 = vunpack.c.l.b16 %v381
  %v401 = vunpack.c.h.b16 %v381
  %v402 = vunpack.c.l.b16 %v382
  %v403 = vunpack.c.h.b16 %v382
  %v404 = vpack.c.b16 %v392, %v390
  %v405 = vpack.c.b16 %v393, %v391
  %v406 = vpack.c.b16 %v396, %v394
  %v407 = vpack.c.b16 %v397, %v395
  %v408 = vpack.c.b16 %v400, %v398
  %v409 = vpack.c.b16 %v401, %v399
  %v410 = vpack.c.b16 %v402, %v402
  %v411 = vpack.c.b16 %v403, %v403
  %420 = vmatpush.bf16.msra.mxu0 %v165
  %421 = vmatpush.bf16.msra.mxu0 %v164
  %422 = vmatpush.bf16.msra.mxu0 %v163
  %423 = vmatpush.bf16.msra.mxu0 %v162
  %424 = vmatpush.bf16.msra.mxu0 %v161
  %425 = vmatpush.bf16.msra.mxu0 %v160
  %426 = vmatpush.bf16.msra.mxu0 %v159
  %427 = vmatpush.bf16.msra.mxu0 %v158
  %428 = vmatmul.bf16.gmra.mxu0 %v404
  %v429 = vpop.f32.mrf.mxu0
  %v430 = vadd.f32 %v55, %v429
  %v431 = vpop.f32.mrf.mxu0
  %v432 = vadd.f32 %v55, %v431
  %433 = vmatmul.bf16.gmra.mxu0 %v406
  %v434 = vpop.f32.mrf.mxu0
  %v435 = vadd.f32 %v55, %v434
  %v436 = vpop.f32.mrf.mxu0
  %v437 = vadd.f32 %v55, %v436
  %438 = vmatmul.bf16.gmra.mxu0 %v408
  %v439 = vpop.f32.mrf.mxu0
  %v440 = vadd.f32 %v55, %v439
  %v441 = vpop.f32.mrf.mxu0
  %v442 = vadd.f32 %v55, %v441
  %443 = vmatmul.bf16.gmra.mxu0 %v410
  %v444 = vpop.f32.mrf.mxu0
  %v445 = vadd.f32 %v55, %v444
  %v446 = vpop.f32.mrf.mxu0
  %447 = vdwg.mxu0
  %448 = vmatpush.bf16.msra.mxu0 %v173
  %449 = vmatpush.bf16.msra.mxu0 %v172
  %450 = vmatpush.bf16.msra.mxu0 %v171
  %451 = vmatpush.bf16.msra.mxu0 %v170
  %452 = vmatpush.bf16.msra.mxu0 %v169
  %453 = vmatpush.bf16.msra.mxu0 %v168
  %454 = vmatpush.bf16.msra.mxu0 %v167
  %455 = vmatpush.bf16.msra.mxu0 %v166
  %456 = vmatmul.bf16.gmra.mxu0 %v405
  %v457 = vpop.f32.mrf.mxu0
  %v458 = vadd.f32 %v430, %v457
  %v459 = vpop.f32.mrf.mxu0
  %v460 = vadd.f32 %v432, %v459
  %461 = vmatmul.bf16.gmra.mxu0 %v407
  %v462 = vpop.f32.mrf.mxu0
  %v463 = vadd.f32 %v435, %v462
  %v464 = vpop.f32.mrf.mxu0
  %v465 = vadd.f32 %v437, %v464
  %466 = vmatmul.bf16.gmra.mxu0 %v409
  %v467 = vpop.f32.mrf.mxu0
  %v468 = vadd.f32 %v440, %v467
  %v469 = vpop.f32.mrf.mxu0
  %v470 = vadd.f32 %v442, %v469
  %471 = vmatmul.bf16.gmra.mxu0 %v411
  %v472 = vpop.f32.mrf.mxu0
  %v473 = vadd.f32 %v445, %v472
  %v474 = vpop.f32.mrf.mxu0
  %475 = vdwg.mxu0
  %v476 = vtanh.pop %v458
  %v477 = vtanh.pop %v460
  %v478 = vtanh.pop %v463
  %v479 = vtanh.pop %v465
  %v480 = vtanh.pop %v468
  %v481 = vtanh.pop %v470
  %v482 = vtanh.pop %v473
  %v483 = vadd.f32 %v368, %v476
  %v484 = vadd.f32 %v369, %v477
  %v485 = vadd.f32 %v370, %v478
  %v486 = vadd.f32 %v371, %v479
  %v487 = vadd.f32 %v372, %v480
  %v488 = vadd.f32 %v373, %v481
  %v489 = vadd.f32 %v374, %v482
  %s490 = scalar_lea.vmem %s0, 168
  %v491 = vld [vmem:[%s490] sm:$0xff]
  %v492 = vld [vmem:[%s490 + $0x8] sm:$0xff]
  %v493 = vld [vmem:[%s490 + $0x10] sm:$0xff]
  %v494 = vld [vmem:[%s490 + $0x18] sm:$0xff]
  %v495 = vld [vmem:[%s490 + $0x20] sm:$0xff]
  %v496 = vld [vmem:[%s490 + $0x28] sm:$0xff]
  %v497 = vld [vmem:[%s490 + $0x30] sm:$0xff]
  %v505 = vunpack.c.l.b16 %v491
  %v506 = vunpack.c.h.b16 %v491
  %v507 = vunpack.c.l.b16 %v492
  %v508 = vunpack.c.h.b16 %v492
  %v509 = vunpack.c.l.b16 %v493
  %v510 = vunpack.c.h.b16 %v493
  %v511 = vunpack.c.l.b16 %v494
  %v512 = vunpack.c.h.b16 %v494
  %v513 = vunpack.c.l.b16 %v495
  %v514 = vunpack.c.h.b16 %v495
  %v515 = vunpack.c.l.b16 %v496
  %v516 = vunpack.c.h.b16 %v496
  %v517 = vunpack.c.l.b16 %v497
  %v518 = vunpack.c.h.b16 %v497
  %v519 = vpack.c.b16 %v507, %v505
  %v520 = vpack.c.b16 %v508, %v506
  %v521 = vpack.c.b16 %v511, %v509
  %v522 = vpack.c.b16 %v512, %v510
  %v523 = vpack.c.b16 %v515, %v513
  %v524 = vpack.c.b16 %v516, %v514
  %v525 = vpack.c.b16 %v517, %v517
  %v526 = vpack.c.b16 %v518, %v518
  %535 = vmatpush.bf16.msra.mxu0 %v165
  %536 = vmatpush.bf16.msra.mxu0 %v164
  %537 = vmatpush.bf16.msra.mxu0 %v163
  %538 = vmatpush.bf16.msra.mxu0 %v162
  %539 = vmatpush.bf16.msra.mxu0 %v161
  %540 = vmatpush.bf16.msra.mxu0 %v160
  %541 = vmatpush.bf16.msra.mxu0 %v159
  %542 = vmatpush.bf16.msra.mxu0 %v158
  %543 = vmatmul.bf16.gmra.mxu0 %v519
  %v544 = vpop.f32.mrf.mxu0
  %v545 = vadd.f32 %v55, %v544
  %v546 = vpop.f32.mrf.mxu0
  %v547 = vadd.f32 %v55, %v546
  %548 = vmatmul.bf16.gmra.mxu0 %v521
  %v549 = vpop.f32.mrf.mxu0
  %v550 = vadd.f32 %v55, %v549
  %v551 = vpop.f32.mrf.mxu0
  %v552 = vadd.f32 %v55, %v551
  %553 = vmatmul.bf16.gmra.mxu0 %v523
  %v554 = vpop.f32.mrf.mxu0
  %v555 = vadd.f32 %v55, %v554
  %v556 = vpop.f32.mrf.mxu0
  %v557 = vadd.f32 %v55, %v556
  %558 = vmatmul.bf16.gmra.mxu0 %v525
  %v559 = vpop.f32.mrf.mxu0
  %v560 = vadd.f32 %v55, %v559
  %v561 = vpop.f32.mrf.mxu0
  %562 = vdwg.mxu0
  %563 = vmatpush.bf16.msra.mxu0 %v173
  %564 = vmatpush.bf16.msra.mxu0 %v172
  %565 = vmatpush.bf16.msra.mxu0 %v171
  %566 = vmatpush.bf16.msra.mxu0 %v170
  %567 = vmatpush.bf16.msra.mxu0 %v169
  %568 = vmatpush.bf16.msra.mxu0 %v168
  %569 = vmatpush.bf16.msra.mxu0 %v167
  %570 = vmatpush.bf16.msra.mxu0 %v166
  %571 = vmatmul.bf16.gmra.mxu0 %v520
  %v572 = vpop.f32.mrf.mxu0
  %v573 = vadd.f32 %v545, %v572
  %v574 = vpop.f32.mrf.mxu0
  %v575 = vadd.f32 %v547, %v574
  %576 = vmatmul.bf16.gmra.mxu0 %v522
  %v577 = vpop.f32.mrf.mxu0
  %v578 = vadd.f32 %v550, %v577
  %v579 = vpop.f32.mrf.mxu0
  %v580 = vadd.f32 %v552, %v579
  %581 = vmatmul.bf16.gmra.mxu0 %v524
  %v582 = vpop.f32.mrf.mxu0
  %v583 = vadd.f32 %v555, %v582
  %v584 = vpop.f32.mrf.mxu0
  %v585 = vadd.f32 %v557, %v584
  %586 = vmatmul.bf16.gmra.mxu0 %v526
  %v587 = vpop.f32.mrf.mxu0
  %v588 = vadd.f32 %v560, %v587
  %v589 = vpop.f32.mrf.mxu0
  %590 = vdwg.mxu0
  %v591 = vtanh.pop %v573
  %v592 = vtanh.pop %v575
  %v593 = vtanh.pop %v578
  %v594 = vtanh.pop %v580
  %v595 = vtanh.pop %v583
  %v596 = vtanh.pop %v585
  %v597 = vtanh.pop %v588
  %v598 = vadd.f32 %v483, %v591
  %v599 = vadd.f32 %v484, %v592
  %v600 = vadd.f32 %v485, %v593
  %v601 = vadd.f32 %v486, %v594
  %v602 = vadd.f32 %v487, %v595
  %v603 = vadd.f32 %v488, %v596
  %v604 = vadd.f32 %v489, %v597
  %v605 = vmul.f32 %v598, 0.25
  %v606 = vmul.f32 %v599, 0.25
  %v607 = vmul.f32 %v600, 0.25
  %v608 = vmul.f32 %v601, 0.25
  %v609 = vmul.f32 %v602, 0.25
  %v610 = vmul.f32 %v603, 0.25
  %v611 = vmul.f32 %v604, 0.25
  %612 = vst [vmem:[%s3] sm:$0xff] %v605
  %613 = vst [vmem:[%s3 + $0x8] sm:$0xff] %v606
  %614 = vst [vmem:[%s3 + $0x10] sm:$0xff] %v607
  %615 = vst [vmem:[%s3 + $0x18] sm:$0xff] %v608
  %616 = vst [vmem:[%s3 + $0x20] sm:$0xff] %v609
  %617 = vst [vmem:[%s3 + $0x28] sm:$0xff] %v610
  %618 = vst [vmem:[%s3 + $0x30] sm:$0xff] %v611
  // Predicated region
  $region14: #{lenet5_forward.4} parent=0 // pred_check
    _
  $region15: #{lenet5_forward.4} parent=0 // pred_check_branch
    %620 = sbr.rel (0) target = $region17
  $region16: #{lenet5_forward.4} parent=0 // pred_region
    _
  $region17: #{lenet5_forward.4} parent=0 // pred_fallthru
    _
  // Predicated region
  $region18: #{lenet5_forward.4} parent=0 // pred_check
    _
  $region19: #{lenet5_forward.4} parent=0 // pred_check_branch
    %622 = sbr.rel (0) target = $region21
  $region20: #{lenet5_forward.4} parent=0 // pred_region
    _
  $region21: #{lenet5_forward.4} parent=0 // pred_fallthru
    _

// kernel: lenet5_forward.5
$region0: #{lenet5_forward.5}
  #allocation0 [shape = 'u32[]', space=smem, size = 0x4, offset = 0x4, fixed_abs, tag = 'smem constant byte address 0x4 - core index']
  #allocation1 [shape = 'u32[72,128]{1,0:T(1,128)}', space=vmem, size = 0x9000, scoped, tag = 'internal scratch']
  %s0 = inlined_call_operand.vmem [shape: bf16[2,512], index: 0, kind: input, shape index: {}]
  %s1 = inlined_call_operand.vmem [shape: bf16[512,128], index: 1, kind: input, shape index: {}]
  %s2 = inlined_call_operand.vmem [shape: f32[1,128], index: 2, kind: input, shape index: {}]
  %s3 = inlined_call_operand.vmem [shape: bf16[128,128], index: 3, kind: input, shape index: {}]
  %s4 = inlined_call_operand.vmem [shape: f32[1,128], index: 4, kind: input, shape index: {}]
  %s5 = inlined_call_operand.vmem [shape: bf16[128,128], index: 5, kind: input, shape index: {}]
  %s6 = inlined_call_operand.vmem [shape: f32[1,128], index: 6, kind: input, shape index: {}]
  %s7 = inlined_call_operand.vmem [shape: s32[2,1], index: 7, kind: output, shape index: {}]
  %s8 = sld [smem:[#allocation0]]
  $region38: #{lenet5_forward.5} parent=0
    _
  %s10 = ssub.s32 1, %s8
  %s11 = scalar_select 0, %s10, %s8
  // Predicated region
  $region2: #{lenet5_forward.5} parent=0 // pred_check
    _
  $region3: #{lenet5_forward.5} parent=0 // pred_check_branch
    %13 = sbr.rel (0) target = $region5
  $region4: #{lenet5_forward.5} parent=0 // pred_region
    _
  $region5: #{lenet5_forward.5} parent=0 // pred_fallthru
    _
  // Predicated region
  $region6: #{lenet5_forward.5} parent=0 // pred_check
    _
  $region7: #{lenet5_forward.5} parent=0 // pred_check_branch
    %15 = sbr.rel (0) target = $region9
  $region8: #{lenet5_forward.5} parent=0 // pred_region
    _
  $region9: #{lenet5_forward.5} parent=0 // pred_fallthru
    _
  // Predicated region
  $region10: #{lenet5_forward.5} parent=0 // pred_check
    _
  $region11: #{lenet5_forward.5} parent=0 // pred_check_branch
    %17 = sbr.rel (0) target = $region13
  $region12: #{lenet5_forward.5} parent=0 // pred_region
    _
  $region13: #{lenet5_forward.5} parent=0 // pred_fallthru
    _
  // Predicated region
  $region14: #{lenet5_forward.5} parent=0 // pred_check
    _
  $region15: #{lenet5_forward.5} parent=0 // pred_check_branch
    %19 = sbr.rel (0) target = $region17
  $region16: #{lenet5_forward.5} parent=0 // pred_region
    _
  $region17: #{lenet5_forward.5} parent=0 // pred_fallthru
    _
  // Predicated region
  $region18: #{lenet5_forward.5} parent=0 // pred_check
    _
  $region19: #{lenet5_forward.5} parent=0 // pred_check_branch
    %21 = sbr.rel (0) target = $region21
  $region20: #{lenet5_forward.5} parent=0 // pred_region
    _
  $region21: #{lenet5_forward.5} parent=0 // pred_fallthru
    _
  // Predicated region
  $region22: #{lenet5_forward.5} parent=0 // pred_check
    _
  $region23: #{lenet5_forward.5} parent=0 // pred_check_branch
    %23 = sbr.rel (0) target = $region25
  $region24: #{lenet5_forward.5} parent=0 // pred_region
    _
  $region25: #{lenet5_forward.5} parent=0 // pred_fallthru
    _
  // Predicated region
  $region26: #{lenet5_forward.5} parent=0 // pred_check
    _
  $region27: #{lenet5_forward.5} parent=0 // pred_check_branch
    %25 = sbr.rel (0) target = $region29
  $region28: #{lenet5_forward.5} parent=0 // pred_region
    _
  $region29: #{lenet5_forward.5} parent=0 // pred_fallthru
    _
  %v26 = vld [vmem:[%s0] sm:$0xf]
  %v27 = vld [vmem:[%s1] sm:$0xf]
  %v28 = vld [vmem:[%s1 + $0x4] sm:$0xf]
  %v29 = vld [vmem:[%s1 + $0x8] sm:$0xf]
  %v30 = vld [vmem:[%s1 + $0xc] sm:$0xf]
  %v31 = vld [vmem:[%s1 + $0x10] sm:$0xf]
  %v32 = vld [vmem:[%s1 + $0x14] sm:$0xf]
  %v33 = vld [vmem:[%s1 + $0x18] sm:$0xf]
  %v34 = vld [vmem:[%s1 + $0x1c] sm:$0xf]
  %v35 = vld [vmem:[%s1 + $0x20] sm:$0xf]
  %v36 = vld [vmem:[%s1 + $0x24] sm:$0xf]
  %v37 = vld [vmem:[%s1 + $0x28] sm:$0xf]
  %v38 = vld [vmem:[%s1 + $0x2c] sm:$0xf]
  %v39 = vld [vmem:[%s1 + $0x30] sm:$0xf]
  %v40 = vld [vmem:[%s1 + $0x34] sm:$0xf]
  %v41 = vld [vmem:[%s1 + $0x38] sm:$0xf]
  %v42 = vld [vmem:[%s1 + $0x3c] sm:$0xf]
  %v43 = vld [vmem:[%s1 + $0x40] sm:$0xf]
  %v44 = vld [vmem:[%s1 + $0x44] sm:$0xf]
  %v45 = vld [vmem:[%s1 + $0x48] sm:$0xf]
  %v46 = vld [vmem:[%s1 + $0x4c] sm:$0xf]
  %v47 = vld [vmem:[%s1 + $0x50] sm:$0xf]
  %v48 = vld [vmem:[%s1 + $0x54] sm:$0xf]
  %v49 = vld [vmem:[%s1 + $0x58] sm:$0xf]
  %v50 = vld [vmem:[%s1 + $0x5c] sm:$0xf]
  %v51 = vld [vmem:[%s1 + $0x60] sm:$0xf]
  %v52 = vld [vmem:[%s1 + $0x64] sm:$0xf]
  %v53 = vld [vmem:[%s1 + $0x68] sm:$0xf]
  %v54 = vld [vmem:[%s1 + $0x6c] sm:$0xf]
  %v55 = vld [vmem:[%s1 + $0x70] sm:$0xf]
  %v56 = vld [vmem:[%s1 + $0x74] sm:$0xf]
  %v57 = vld [vmem:[%s1 + $0x78] sm:$0xf]
  %v58 = vld [vmem:[%s1 + $0x7c] sm:$0xf]
  %v59 = vld [vmem:[%s1 + $0x80] sm:$0xf]
  %v60 = vld [vmem:[%s1 + $0x84] sm:$0xf]
  %v61 = vld [vmem:[%s1 + $0x88] sm:$0xf]
  %v62 = vld [vmem:[%s1 + $0x8c] sm:$0xf]
  %v63 = vld [vmem:[%s1 + $0x90] sm:$0xf]
  %v64 = vld [vmem:[%s1 + $0x94] sm:$0xf]
  %v65 = vld [vmem:[%s1 + $0x98] sm:$0xf]
  %v66 = vld [vmem:[%s1 + $0x9c] sm:$0xf]
  %v67 = vld [vmem:[%s1 + $0xa0] sm:$0xf]
  %v68 = vld [vmem:[%s1 + $0xa4] sm:$0xf]
  %v69 = vld [vmem:[%s1 + $0xa8] sm:$0xf]
  %v70 = vld [vmem:[%s1 + $0xac] sm:$0xf]
  %v71 = vld [vmem:[%s1 + $0xb0] sm:$0xf]
  %v72 = vld [vmem:[%s1 + $0xb4] sm:$0xf]
  %v73 = vld [vmem:[%s1 + $0xb8] sm:$0xf]
  %v74 = vld [vmem:[%s1 + $0xbc] sm:$0xf]
  %v75 = vld [vmem:[%s1 + $0xc0] sm:$0xf]
  %v76 = vld [vmem:[%s1 + $0xc4] sm:$0xf]
  %v77 = vld [vmem:[%s1 + $0xc8] sm:$0xf]
  %v78 = vld [vmem:[%s1 + $0xcc] sm:$0xf]
  %v79 = vld [vmem:[%s1 + $0xd0] sm:$0xf]
  %v80 = vld [vmem:[%s1 + $0xd4] sm:$0xf]
  %v81 = vld [vmem:[%s1 + $0xd8] sm:$0xf]
  %v82 = vld [vmem:[%s1 + $0xdc] sm:$0xf]
  %v83 = vld [vmem:[%s1 + $0xe0] sm:$0xf]
  %v84 = vld [vmem:[%s1 + $0xe4] sm:$0xf]
  %v85 = vld [vmem:[%s1 + $0xe8] sm:$0xf]
  %v86 = vld [vmem:[%s1 + $0xec] sm:$0xf]
  %v87 = vld [vmem:[%s1 + $0xf0] sm:$0xf]
  %v88 = vld [vmem:[%s1 + $0xf4] sm:$0xf]
  %v89 = vld [vmem:[%s1 + $0xf8] sm:$0xf]
  %v90 = vld [vmem:[%s1 + $0xfc] sm:$0xf]
  %v91 = vld [vmem:[%s2] sm:$0x1]
  %v93 = vperm.slane %v91, 0
  %96 = vst [vmem:[#allocation1] ss:$9 sm:$0xff] %v26
  %v97 = vld [vmem:[#allocation1] sm:$0xff]
  %v98 = vld [vmem:[#allocation1 + $0x9] sm:$0xff]
  %v99 = vld [vmem:[#allocation1 + $0x12] sm:$0xff]
  %v100 = vld [vmem:[#allocation1 + $0x1b] sm:$0xff]
  %v169 = vunpack.c.l.b16 %v27
  %v170 = vunpack.c.l.b16 %v28
  %v171 = vunpack.c.l.b16 %v29
  %v172 = vunpack.c.l.b16 %v30
  %v173 = vunpack.c.l.b16 %v31
  %v174 = vunpack.c.l.b16 %v32
  %v175 = vunpack.c.l.b16 %v33
  %v176 = vunpack.c.l.b16 %v34
  %v177 = vunpack.c.l.b16 %v35
  %v178 = vunpack.c.l.b16 %v36
  %v179 = vunpack.c.l.b16 %v37
  %v180 = vunpack.c.l.b16 %v38
  %v181 = vunpack.c.l.b16 %v39
  %v182 = vunpack.c.l.b16 %v40
  %v183 = vunpack.c.l.b16 %v41
  %v184 = vunpack.c.l.b16 %v42
  %v185 = vunpack.c.l.b16 %v43
  %v186 = vunpack.c.l.b16 %v44
  %v187 = vunpack.c.l.b16 %v45
  %v188 = vunpack.c.l.b16 %v46
  %v189 = vunpack.c.l.b16 %v47
  %v190 = vunpack.c.l.b16 %v48
  %v191 = vunpack.c.l.b16 %v49
  %v192 = vunpack.c.l.b16 %v50
  %v193 = vunpack.c.l.b16 %v51
  %v194 = vunpack.c.l.b16 %v52
  %v195 = vunpack.c.l.b16 %v53
  %v196 = vunpack.c.l.b16 %v54
  %v197 = vunpack.c.l.b16 %v55
  %v198 = vunpack.c.l.b16 %v56
  %v199 = vunpack.c.l.b16 %v57
  %v200 = vunpack.c.l.b16 %v58
  %v201 = vunpack.c.l.b16 %v59
  %v202 = vunpack.c.l.b16 %v60
  %v203 = vunpack.c.l.b16 %v61
  %v204 = vunpack.c.l.b16 %v62
  %v205 = vunpack.c.l.b16 %v63
  %v206 = vunpack.c.l.b16 %v64
  %v207 = vunpack.c.l.b16 %v65
  %v208 = vunpack.c.l.b16 %v66
  %v209 = vunpack.c.l.b16 %v67
  %v210 = vunpack.c.l.b16 %v68
  %v211 = vunpack.c.l.b16 %v69
  %v212 = vunpack.c.l.b16 %v70
  %v213 = vunpack.c.l.b16 %v71
  %v214 = vunpack.c.l.b16 %v72
  %v215 = vunpack.c.l.b16 %v73
  %v216 = vunpack.c.l.b16 %v74
  %v217 = vunpack.c.l.b16 %v75
  %v218 = vunpack.c.l.b16 %v76
  %v219 = vunpack.c.l.b16 %v77
  %v220 = vunpack.c.l.b16 %v78
  %v221 = vunpack.c.l.b16 %v79
  %v222 = vunpack.c.l.b16 %v80
  %v223 = vunpack.c.l.b16 %v81
  %v224 = vunpack.c.l.b16 %v82
  %v225 = vunpack.c.l.b16 %v83
  %v226 = vunpack.c.l.b16 %v84
  %v227 = vunpack.c.l.b16 %v85
  %v228 = vunpack.c.l.b16 %v86
  %v229 = vunpack.c.l.b16 %v87
  %v230 = vunpack.c.l.b16 %v88
  %v231 = vunpack.c.l.b16 %v89
  %v232 = vunpack.c.l.b16 %v90
  %v233 = vpack.c.b16 %v170, %v169
  %v234 = vpack.c.b16 %v172, %v171
  %v235 = vpack.c.b16 %v174, %v173
  %v236 = vpack.c.b16 %v176, %v175
  %v237 = vpack.c.b16 %v178, %v177
  %v238 = vpack.c.b16 %v180, %v179
  %v239 = vpack.c.b16 %v182, %v181
  %v240 = vpack.c.b16 %v184, %v183
  %v241 = vpack.c.b16 %v186, %v185
  %v242 = vpack.c.b16 %v188, %v187
  %v243 = vpack.c.b16 %v190, %v189
  %v244 = vpack.c.b16 %v192, %v191
  %v245 = vpack.c.b16 %v194, %v193
  %v246 = vpack.c.b16 %v196, %v195
  %v247 = vpack.c.b16 %v198, %v197
  %v248 = vpack.c.b16 %v200, %v199
  %v249 = vpack.c.b16 %v202, %v201
  %v250 = vpack.c.b16 %v204, %v203
  %v251 = vpack.c.b16 %v206, %v205
  %v252 = vpack.c.b16 %v208, %v207
  %v253 = vpack.c.b16 %v210, %v209
  %v254 = vpack.c.b16 %v212, %v211
  %v255 = vpack.c.b16 %v214, %v213
  %v256 = vpack.c.b16 %v216, %v215
  %v257 = vpack.c.b16 %v218, %v217
  %v258 = vpack.c.b16 %v220, %v219
  %v259 = vpack.c.b16 %v222, %v221
  %v260 = vpack.c.b16 %v224, %v223
  %v261 = vpack.c.b16 %v226, %v225
  %v262 = vpack.c.b16 %v228, %v227
  %v263 = vpack.c.b16 %v230, %v229
  %v264 = vpack.c.b16 %v232, %v231
  %297 = vmatpush.bf16.msra.mxu0 %v240
  %298 = vmatpush.bf16.msra.mxu0 %v239
  %299 = vmatpush.bf16.msra.mxu0 %v238
  %300 = vmatpush.bf16.msra.mxu0 %v237
  %301 = vmatpush.bf16.msra.mxu0 %v236
  %302 = vmatpush.bf16.msra.mxu0 %v235
  %303 = vmatpush.bf16.msra.mxu0 %v234
  %304 = vmatpush.bf16.msra.mxu0 %v233
  %305 = vmatmul.bf16.gmra.mxu0 %v97
  %v306 = vpop.f32.mrf.mxu0
  %v307 = vadd.f32 %v93, %v306
  %v308 = vpop.f32.mrf.mxu0
  %309 = vdwg.mxu0
  %310 = vmatpush.bf16.msra.mxu0 %v248
  %311 = vmatpush.bf16.msra.mxu0 %v247
  %312 = vmatpush.bf16.msra.mxu0 %v246
  %313 = vmatpush.bf16.msra.mxu0 %v245
  %314 = vmatpush.bf16.msra.mxu0 %v244
  %315 = vmatpush.bf16.msra.mxu0 %v243
  %316 = vmatpush.bf16.msra.mxu0 %v242
  %317 = vmatpush.bf16.msra.mxu0 %v241
  %318 = vmatmul.bf16.gmra.mxu0 %v98
  %v319 = vpop.f32.mrf.mxu0
  %v320 = vadd.f32 %v307, %v319
  %v321 = vpop.f32.mrf.mxu0
  %322 = vdwg.mxu0
  %323 = vmatpush.bf16.msra.mxu0 %v256
  %324 = vmatpush.bf16.msra.mxu0 %v255
  %325 = vmatpush.bf16.msra.mxu0 %v254
  %326 = vmatpush.bf16.msra.mxu0 %v253
  %327 = vmatpush.bf16.msra.mxu0 %v252
  %328 = vmatpush.bf16.msra.mxu0 %v251
  %329 = vmatpush.bf16.msra.mxu0 %v250
  %330 = vmatpush.bf16.msra.mxu0 %v249
  %331 = vmatmul.bf16.gmra.mxu0 %v99
  %v332 = vpop.f32.mrf.mxu0
  %v333 = vadd.f32 %v320, %v332
  %v334 = vpop.f32.mrf.mxu0
  %335 = vdwg.mxu0
  %336 = vmatpush.bf16.msra.mxu0 %v264
  %337 = vmatpush.bf16.msra.mxu0 %v263
  %338 = vmatpush.bf16.msra.mxu0 %v262
  %339 = vmatpush.bf16.msra.mxu0 %v261
  %340 = vmatpush.bf16.msra.mxu0 %v260
  %341 = vmatpush.bf16.msra.mxu0 %v259
  %342 = vmatpush.bf16.msra.mxu0 %v258
  %343 = vmatpush.bf16.msra.mxu0 %v257
  %344 = vmatmul.bf16.gmra.mxu0 %v100
  %v345 = vpop.f32.mrf.mxu0
  %v346 = vadd.f32 %v333, %v345
  %v347 = vpop.f32.mrf.mxu0
  %348 = vdwg.mxu0
  %v349 = vtanh.pop %v346
  %v350 = vpack.c.bf16 %v349, %v349
  %v351 = vld [vmem:[%s3] sm:$0xf]
  %v352 = vld [vmem:[%s3 + $0x4] sm:$0xf]
  %v353 = vld [vmem:[%s3 + $0x8] sm:$0xf]
  %v354 = vld [vmem:[%s3 + $0xc] sm:$0xf]
  %v355 = vld [vmem:[%s3 + $0x10] sm:$0xf]
  %v356 = vld [vmem:[%s3 + $0x14] sm:$0xf]
  %v357 = vld [vmem:[%s3 + $0x18] sm:$0xf]
  %v358 = vld [vmem:[%s3 + $0x1c] sm:$0xf]
  %v359 = vld [vmem:[%s3 + $0x20] sm:$0xf]
  %v360 = vld [vmem:[%s3 + $0x24] sm:$0xf]
  %v361 = vld [vmem:[%s3 + $0x28] sm:$0xf]
  %v362 = vld [vmem:[%s3 + $0x2c] sm:$0xf]
  %v363 = vld [vmem:[%s3 + $0x30] sm:$0xf]
  %v364 = vld [vmem:[%s3 + $0x34] sm:$0xf]
  %v365 = vld [vmem:[%s3 + $0x38] sm:$0xf]
  %v366 = vld [vmem:[%s3 + $0x3c] sm:$0xf]
  %v367 = vld [vmem:[%s4] sm:$0x1]
  %v369 = vperm.slane %v367, 0
  %v387 = vunpack.c.l.b16 %v351
  %v388 = vunpack.c.l.b16 %v352
  %v389 = vunpack.c.l.b16 %v353
  %v390 = vunpack.c.l.b16 %v354
  %v391 = vunpack.c.l.b16 %v355
  %v392 = vunpack.c.l.b16 %v356
  %v393 = vunpack.c.l.b16 %v357
  %v394 = vunpack.c.l.b16 %v358
  %v395 = vunpack.c.l.b16 %v359
  %v396 = vunpack.c.l.b16 %v360
  %v397 = vunpack.c.l.b16 %v361
  %v398 = vunpack.c.l.b16 %v362
  %v399 = vunpack.c.l.b16 %v363
  %v400 = vunpack.c.l.b16 %v364
  %v401 = vunpack.c.l.b16 %v365
  %v402 = vunpack.c.l.b16 %v366
  %v403 = vpack.c.b16 %v388, %v387
  %v404 = vpack.c.b16 %v390, %v389
  %v405 = vpack.c.b16 %v392, %v391
  %v406 = vpack.c.b16 %v394, %v393
  %v407 = vpack.c.b16 %v396, %v395
  %v408 = vpack.c.b16 %v398, %v397
  %v409 = vpack.c.b16 %v400, %v399
  %v410 = vpack.c.b16 %v402, %v401
  %419 = vmatpush.bf16.msra.mxu0 %v410
  %420 = vmatpush.bf16.msra.mxu0 %v409
  %421 = vmatpush.bf16.msra.mxu0 %v408
  %422 = vmatpush.bf16.msra.mxu0 %v407
  %423 = vmatpush.bf16.msra.mxu0 %v406
  %424 = vmatpush.bf16.msra.mxu0 %v405
  %425 = vmatpush.bf16.msra.mxu0 %v404
  %426 = vmatpush.bf16.msra.mxu0 %v403
  %427 = vmatmul.bf16.gmra.mxu0 %v350
  %v428 = vpop.f32.mrf.mxu0
  %v429 = vadd.f32 %v369, %v428
  %v430 = vpop.f32.mrf.mxu0
  %431 = vdwg.mxu0
  %v432 = vtanh.pop %v429
  %v433 = vpack.c.bf16 %v432, %v432
  %v434 = vld [vmem:[%s5] sm:$0xf]
  %v435 = vld [vmem:[%s5 + $0x4] sm:$0xf]
  %v436 = vld [vmem:[%s5 + $0x8] sm:$0xf]
  %v437 = vld [vmem:[%s5 + $0xc] sm:$0xf]
  %v438 = vld [vmem:[%s5 + $0x10] sm:$0xf]
  %v439 = vld [vmem:[%s5 + $0x14] sm:$0xf]
  %v440 = vld [vmem:[%s5 + $0x18] sm:$0xf]
  %v441 = vld [vmem:[%s5 + $0x1c] sm:$0xf]
  %v442 = vld [vmem:[%s5 + $0x20] sm:$0xf]
  %v443 = vld [vmem:[%s5 + $0x24] sm:$0xf]
  %v444 = vld [vmem:[%s5 + $0x28] sm:$0xf]
  %v445 = vld [vmem:[%s5 + $0x2c] sm:$0xf]
  %v446 = vld [vmem:[%s5 + $0x30] sm:$0xf]
  %v447 = vld [vmem:[%s5 + $0x34] sm:$0xf]
  %v448 = vld [vmem:[%s5 + $0x38] sm:$0xf]
  %v449 = vld [vmem:[%s5 + $0x3c] sm:$0xf]
  %v450 = vld [vmem:[%s6] sm:$0x1]
  %v452 = vperm.slane %v450, 0
  %v470 = vunpack.c.l.b16 %v434
  %v471 = vunpack.c.l.b16 %v435
  %v472 = vunpack.c.l.b16 %v436
  %v473 = vunpack.c.l.b16 %v437
  %v474 = vunpack.c.l.b16 %v438
  %v475 = vunpack.c.l.b16 %v439
  %v476 = vunpack.c.l.b16 %v440
  %v477 = vunpack.c.l.b16 %v441
  %v478 = vunpack.c.l.b16 %v442
  %v479 = vunpack.c.l.b16 %v443
  %v480 = vunpack.c.l.b16 %v444
  %v481 = vunpack.c.l.b16 %v445
  %v482 = vunpack.c.l.b16 %v446
  %v483 = vunpack.c.l.b16 %v447
  %v484 = vunpack.c.l.b16 %v448
  %v485 = vunpack.c.l.b16 %v449
  %v486 = vpack.c.b16 %v471, %v470
  %v487 = vpack.c.b16 %v473, %v472
  %v488 = vpack.c.b16 %v475, %v474
  %v489 = vpack.c.b16 %v477, %v476
  %v490 = vpack.c.b16 %v479, %v478
  %v491 = vpack.c.b16 %v481, %v480
  %v492 = vpack.c.b16 %v483, %v482
  %v493 = vpack.c.b16 %v485, %v484
  %502 = vmatpush.bf16.msra.mxu0 %v493
  %503 = vmatpush.bf16.msra.mxu0 %v492
  %504 = vmatpush.bf16.msra.mxu0 %v491
  %505 = vmatpush.bf16.msra.mxu0 %v490
  %506 = vmatpush.bf16.msra.mxu0 %v489
  %507 = vmatpush.bf16.msra.mxu0 %v488
  %508 = vmatpush.bf16.msra.mxu0 %v487
  %509 = vmatpush.bf16.msra.mxu0 %v486
  %510 = vmatmul.bf16.gmra.mxu0 %v433
  %v511 = vpop.f32.mrf.mxu0
  %v512 = vadd.f32 %v452, %v511
  %v513 = vpop.f32.mrf.mxu0
  %514 = vdwg.mxu0
  %v515 = vlaneseq
  %v516 = vand.u32 %v515, 127
  %vm517 = vcmp.lt.s32.totalorder %v516, 10
  %v518 = vsel %vm517, %v512, -inf
  %vm519 = vcmask 1041408
  %v520 = vsel %vm519, %v518, -inf
  %521 = vmax.xlane.f32.xlu0 %v520
  %v522 = vpop.xlane.xlu0 %521
  %vm523 = vcmp.ge.f32.partialorder %v518, %v522
  %v524 = vsel %vm523, %v516, 1073741824
  %v525 = vsel %vm519, %v524, 2147483647
  %v526 = vand.u32 %v525, 65535
  %v527 = vshra.s32 %v525, 16
  %v528 = vcvt.s32.f32 %v526
  %v529 = vcvt.s32.f32 %v527
  %530 = vmin.xlane.f32.xlu0 %v529
  %v531 = vpop.xlane.xlu0 %530
  %vm532 = vcmp.eq.f32.partialorder %v529, %v531
  %v533 = vsel %vm532, %v528, inf
  %534 = vmin.xlane.f32.xlu0 %v533
  %v535 = vpop.xlane.xlu0 %534
  %v536 = vcvt.f32.s32 %v535
  %v537 = vcvt.f32.s32 %v531
  %v538 = vshll.u32 %v537, 16
  %v539 = vadd.s32 %v538, %v536
  %vm540 = vcmask 1024
  %541 = vst.msk [vmem:[%s7] sm:$0x3] %vm540, %v539
  // Predicated region
  $region30: #{lenet5_forward.5} parent=0 // pred_check
    _
  $region31: #{lenet5_forward.5} parent=0 // pred_check_branch
    %543 = sbr.rel (0) target = $region33
  $region32: #{lenet5_forward.5} parent=0 // pred_region
    _
  $region33: #{lenet5_forward.5} parent=0 // pred_fallthru
    _
  // Predicated region
  $region34: #{lenet5_forward.5} parent=0 // pred_check
    _
  $region35: #{lenet5_forward.5} parent=0 // pred_check_branch
    %545 = sbr.rel (0) target = $region37
  $region36: #{lenet5_forward.5} parent=0 // pred_region
    _
  $region37: #{lenet5_forward.5} parent=0 // pred_fallthru
    _

</llo_original>
